<compile_context>
chip_gen: v6e
topology: v6e:2x2x1
jax: 0.10.0
libtpu: 0.0.40
codegen_flags: <defaults>
</compile_context>

<pallas_src>
import functools

import jax
import jax.numpy as jnp
from jax import lax
from jax.experimental import pallas as pl
from jax.experimental.pallas import tpu as pltpu

MXU_DTYPE = jnp.bfloat16   # MXU operand dtype + intermediate activation dtype
_WIDE_CIN = 128            # Cin threshold: fat K=3*Cin vs 9 accumulating K=Cin matmuls


# --------------------------------------------------------------------------
# VMEM budgeting helpers (feedback: size vmem_limit_bytes to the real,
# lane/sublane-padded per-step footprint)
# --------------------------------------------------------------------------
def _phys_bytes(shape, dtype):
    """Physical (lane/sublane padded) VMEM footprint of one buffer."""
    s = list(shape)
    if len(s) >= 1:
        s[-1] = -(-s[-1] // 128) * 128        # lane dim padded to 128
    if len(s) >= 2:
        s[-2] = -(-s[-2] // 16) * 16          # sublane dim (conservative for bf16 packing)
    n = 1
    for d in s:
        n *= int(d)
    return n * jnp.dtype(dtype).itemsize


def _vmem_limit_bytes(buffers):
    """buffers: iterable of (shape, dtype, copies).  Scoped-VMEM limit sized to
    the actual per-step buffers (double-buffered blocks + scratches + weights),
    with 2x margin, clamped to stay under v7x's 64 MiB physical VMEM."""
    est = sum(_phys_bytes(s, d) * c for (s, d, c) in buffers)
    return int(min(max(2 * est, 16 * 1024 * 1024), 56 * 1024 * 1024))


# --------------------------------------------------------------------------
# In-kernel helpers
# --------------------------------------------------------------------------
def _zero_border(pad_ref):
    """Zero only the 1-pixel border of a (H+2, W+2, C) padded VMEM scratch.

    Executed every grid step on purpose: with the batch axis marked "parallel"
    a second TensorCore (v7x megacore) starts at a non-zero program_id and would
    never see a program_id(0)==0 init.  Cost: 4 masked stores per scratch/step.
    """
    Hp, Wp, C = pad_ref.shape
    z_row = jnp.zeros((1, Wp, C), pad_ref.dtype)
    z_col = jnp.zeros((Hp, 1, C), pad_ref.dtype)
    pad_ref[0:1, :, :] = z_row
    pad_ref[Hp - 1:Hp, :, :] = z_row
    pad_ref[:, 0:1, :] = z_col
    pad_ref[:, Wp - 1:Wp, :] = z_col


def _conv3x3_from_padded(pad_ref, w_ref, H, W, Cin, Cout, acc=None):
    """3x3 conv (stride 1) over a zero-padded (H+2, W+2, Cin) bf16 scratch.

    w_ref is (9*Cin, Cout), HWIO flattened with row index (kh*3 + kw)*Cin + cin.
    Accumulates in f32; `acc` lets two input tensors (fused channel concat)
    share one accumulator.
    """
    if acc is None:
        acc = jnp.zeros((H * W, Cout), jnp.float32)
    if Cin >= _WIDE_CIN:
        # Wide layers: 9 accumulating K=Cin matmuls on shifted views.
        # No (H, W, 3*Cin) concat temp / lane repacking needed once K is MXU-sized.
        for kh in range(3):
            for kw in range(3):
                wk = w_ref[(kh * 3 + kw) * Cin:(kh * 3 + kw + 1) * Cin, :]
                acc = acc + jnp.dot(
                    pad_ref[kh:kh + H, kw:kw + W, :].reshape(H * W, Cin), wk,
                    preferred_element_type=jnp.float32)
    else:
        # Narrow layers: fat K = 3*Cin per kernel row (better MXU utilisation).
        for kh in range(3):
            slab = jnp.concatenate(
                [pad_ref[kh:kh + H, kw:kw + W, :] for kw in range(3)], axis=-1)
            wk = w_ref[kh * 3 * Cin:(kh + 1) * 3 * Cin, :]
            acc = acc + jnp.dot(slab.reshape(H * W, 3 * Cin), wk,
                                preferred_element_type=jnp.float32)
    return acc


def _maxpool2x2(y_hwc, H, W, C):
    """2x2 stride-2 max-pool, fully in-register, returning (H//2, W//2, C)."""
    # Row pairs: leading-dim split (known-cheap), then elementwise max.
    z = y_hwc.reshape(H // 2, 2, W, C)
    rmax = jnp.maximum(z[:, 0], z[:, 1])                      # (H//2, W, C)
    # Column pairs: split the sublane dim, max the two static slices.
    r2 = rmax.reshape(H // 2, W // 2, 2, C)
    return jnp.maximum(r2[:, :, 0, :], r2[:, :, 1, :])        # (H//2, W//2, C)


# --------------------------------------------------------------------------
# Kernels
# --------------------------------------------------------------------------
def _conv3x3_kernel(x_ref, w_ref, b_ref, out_ref, xpad_ref, *, relu):
    """Single 3x3 conv (pad 1) + bias, optional ReLU.  One batch element."""
    H, W, Cout = out_ref.shape[1], out_ref.shape[2], out_ref.shape[3]
    Cin = x_ref.shape[3]

    _zero_border(xpad_ref)
    xpad_ref[1:H + 1, 1:W + 1, :] = x_ref[0]
    acc = _conv3x3_from_padded(xpad_ref, w_ref, H, W, Cin, Cout) + b_ref[...]
    if relu:
        acc = jnp.maximum(acc, 0.0)
    out_ref[0] = acc.reshape(H, W, Cout).astype(out_ref.dtype)


def _block_kernel(x_ref, w1_ref, w2_ref, skip_ref, *rest, with_pool):
    """Block = conv3x3 -> ReLU -> conv3x3 -> ReLU (no bias), optional 2x2 maxpool."""
    if with_pool:
        pool_ref, xpad_ref, ypad_ref = rest
    else:
        pool_ref = None
        xpad_ref, ypad_ref = rest

    H, W, Cout = skip_ref.shape[1], skip_ref.shape[2], skip_ref.shape[3]
    Cin = x_ref.shape[3]

    # conv1: unpadded input block copied into the zero-bordered bf16 scratch.
    _zero_border(xpad_ref)
    xpad_ref[1:H + 1, 1:W + 1, :] = x_ref[0]
    y1 = jnp.maximum(_conv3x3_from_padded(xpad_ref, w1_ref, H, W, Cin, Cout), 0.0)

    # conv2: ReLU'd intermediate goes straight into the second padded scratch.
    _zero_border(ypad_ref)
    ypad_ref[1:H + 1, 1:W + 1, :] = y1.reshape(H, W, Cout).astype(ypad_ref.dtype)
    y2 = jnp.maximum(_conv3x3_from_padded(ypad_ref, w2_ref, H, W, Cout, Cout), 0.0)

    y2_hwc = y2.reshape(H, W, Cout)
    skip_ref[0] = y2_hwc.astype(skip_ref.dtype)

    if with_pool:
        # In-register 2x2 max-pool and ONE dense store (no per-column masked
        # stores, no re-read of the output block).
        pool_ref[0] = _maxpool2x2(y2_hwc, H, W, Cout).astype(pool_ref.dtype)


def _block_cat_kernel(x_ref, s_ref, w1a_ref, w1b_ref, w2_ref, out_ref,
                      xpad_ref, spad_ref, ypad_ref):
    """UpBlock conv path with the channel-concat fused in: conv1 over the
    concatenated [up, skip] channels is computed as two partial convolutions
    (w1 split along K) accumulating into one f32 accumulator."""
    H, W, Cout = out_ref.shape[1], out_ref.shape[2], out_ref.shape[3]
    Cup = x_ref.shape[3]
    Cskip = s_ref.shape[3]

    _zero_border(xpad_ref)
    xpad_ref[1:H + 1, 1:W + 1, :] = x_ref[0]
    _zero_border(spad_ref)
    spad_ref[1:H + 1, 1:W + 1, :] = s_ref[0]

    acc = _conv3x3_from_padded(xpad_ref, w1a_ref, H, W, Cup, Cout)
    acc = _conv3x3_from_padded(spad_ref, w1b_ref, H, W, Cskip, Cout, acc=acc)
    y1 = jnp.maximum(acc, 0.0)

    _zero_border(ypad_ref)
    ypad_ref[1:H + 1, 1:W + 1, :] = y1.reshape(H, W, Cout).astype(ypad_ref.dtype)
    y2 = jnp.maximum(_conv3x3_from_padded(ypad_ref, w2_ref, H, W, Cout, Cout), 0.0)
    out_ref[0] = y2.reshape(H, W, Cout).astype(out_ref.dtype)


def _pointwise_kernel(x_ref, w_ref, b_ref, out_ref):
    """Per-pixel matmul + bias: 1x1 output conv and the 2x2/stride-2
    transposed conv (whose 4 taps are packed into the N dim)."""
    H, W, Cin = x_ref.shape[1], x_ref.shape[2], x_ref.shape[3]
    Cout = out_ref.shape[3]
    acc = jnp.dot(x_ref[0].reshape(H * W, Cin), w_ref[...],
                  preferred_element_type=jnp.float32) + b_ref[...]
    out_ref[0] = acc.reshape(H, W, Cout).astype(out_ref.dtype)


# --------------------------------------------------------------------------
# Wrappers (NHWC activations, PyTorch-layout weights)
# --------------------------------------------------------------------------
def _w3x3_to_hwio_flat(w_oihw):
    Cout, Cin = w_oihw.shape[0], w_oihw.shape[1]
    return jnp.transpose(w_oihw, (2, 3, 1, 0)).reshape(9 * Cin, Cout).astype(MXU_DTYPE)


def conv3x3(x_nhwc, w_oihw, bias, *, relu=False, out_dtype=MXU_DTYPE):
    N, H, W, Cin = x_nhwc.shape
    Cout = w_oihw.shape[0]
    w = _w3x3_to_hwio_flat(w_oihw)
    b = (jnp.zeros((1, Cout), jnp.float32) if bias is None
         else bias.reshape(1, Cout).astype(jnp.float32))
    vmem = _vmem_limit_bytes([
        ((1, H, W, Cin), MXU_DTYPE, 2),
        ((9 * Cin, Cout), MXU_DTYPE, 2),
        ((1, Cout), jnp.float32, 2),
        ((1, H, W, Cout), out_dtype, 2),
        ((H + 2, W + 2, Cin), MXU_DTYPE, 1),
    ])
    return pl.pallas_call(
        functools.partial(_conv3x3_kernel, relu=relu),
        out_shape=jax.ShapeDtypeStruct((N, H, W, Cout), out_dtype),
        grid_spec=pltpu.PrefetchScalarGridSpec(
            num_scalar_prefetch=0,
            grid=(N,),
            in_specs=[
                pl.BlockSpec((1, H, W, Cin), lambda n: (n, 0, 0, 0)),
                pl.BlockSpec((9 * Cin, Cout), lambda n: (0, 0)),
                pl.BlockSpec((1, Cout), lambda n: (0, 0)),
            ],
            out_specs=pl.BlockSpec((1, H, W, Cout), lambda n: (n, 0, 0, 0)),
            scratch_shapes=[pltpu.VMEM((H + 2, W + 2, Cin), MXU_DTYPE)],
        ),
        compiler_params=pltpu.CompilerParams(
            dimension_semantics=("parallel",), vmem_limit_bytes=vmem),
    )(x_nhwc.astype(MXU_DTYPE), w, b)


def double_conv(x_nhwc, w1_oihw, w2_oihw, *, with_pool=False):
    """Block (and DownBlock when with_pool=True).  Returns skip or (skip, pooled)."""
    N, H, W, Cin = x_nhwc.shape
    Cout = w1_oihw.shape[0]
    if with_pool:
        assert H % 2 == 0 and W % 2 == 0, (H, W)
    w1 = _w3x3_to_hwio_flat(w1_oihw)
    w2 = _w3x3_to_hwio_flat(w2_oihw)

    if with_pool:
        out_shape = (jax.ShapeDtypeStruct((N, H, W, Cout), MXU_DTYPE),
                     jax.ShapeDtypeStruct((N, H // 2, W // 2, Cout), MXU_DTYPE))
        out_specs = (pl.BlockSpec((1, H, W, Cout), lambda n: (n, 0, 0, 0)),
                     pl.BlockSpec((1, H // 2, W // 2, Cout), lambda n: (n, 0, 0, 0)))
        out_bufs = [((1, H, W, Cout), MXU_DTYPE, 2),
                    ((1, H // 2, W // 2, Cout), MXU_DTYPE, 2)]
    else:
        out_shape = jax.ShapeDtypeStruct((N, H, W, Cout), MXU_DTYPE)
        out_specs = pl.BlockSpec((1, H, W, Cout), lambda n: (n, 0, 0, 0))
        out_bufs = [((1, H, W, Cout), MXU_DTYPE, 2)]

    vmem = _vmem_limit_bytes([
        ((1, H, W, Cin), MXU_DTYPE, 2),
        ((9 * Cin, Cout), MXU_DTYPE, 2),
        ((9 * Cout, Cout), MXU_DTYPE, 2),
        ((H + 2, W + 2, Cin), MXU_DTYPE, 1),
        ((H + 2, W + 2, Cout), MXU_DTYPE, 1),
    ] + out_bufs)

    outs = pl.pallas_call(
        functools.partial(_block_kernel, with_pool=with_pool),
        out_shape=out_shape,
        grid_spec=pltpu.PrefetchScalarGridSpec(
            num_scalar_prefetch=0,
            grid=(N,),
            in_specs=[
                pl.BlockSpec((1, H, W, Cin), lambda n: (n, 0, 0, 0)),
                pl.BlockSpec((9 * Cin, Cout), lambda n: (0, 0)),
                pl.BlockSpec((9 * Cout, Cout), lambda n: (0, 0)),
            ],
            out_specs=out_specs,
            scratch_shapes=[pltpu.VMEM((H + 2, W + 2, Cin), MXU_DTYPE),
                            pltpu.VMEM((H + 2, W + 2, Cout), MXU_DTYPE)],
        ),
        compiler_params=pltpu.CompilerParams(
            dimension_semantics=("parallel",), vmem_limit_bytes=vmem),
    )(x_nhwc.astype(MXU_DTYPE), w1, w2)

    if with_pool:
        skip, pooled = outs
        return skip, pooled
    return outs


def double_conv_cat(x_nhwc, skip_nhwc, w1_oihw, w2_oihw):
    """UpBlock's Block with the torch.cat([up, skip], dim=1) fused into the
    kernel: two inputs, w1 split along its input-channel (K) dim."""
    N, H, W, Cup = x_nhwc.shape
    Cskip = skip_nhwc.shape[3]
    Cout = w1_oihw.shape[0]
    assert w1_oihw.shape[1] == Cup + Cskip, (w1_oihw.shape, Cup, Cskip)

    w1a = _w3x3_to_hwio_flat(w1_oihw[:, :Cup])     # acts on the upsampled half
    w1b = _w3x3_to_hwio_flat(w1_oihw[:, Cup:])     # acts on the skip half
    w2 = _w3x3_to_hwio_flat(w2_oihw)

    vmem = _vmem_limit_bytes([
        ((1, H, W, Cup), MXU_DTYPE, 2),
        ((1, H, W, Cskip), MXU_DTYPE, 2),
        ((9 * Cup, Cout), MXU_DTYPE, 2),
        ((9 * Cskip, Cout), MXU_DTYPE, 2),
        ((9 * Cout, Cout), MXU_DTYPE, 2),
        ((1, H, W, Cout), MXU_DTYPE, 2),
        ((H + 2, W + 2, Cup), MXU_DTYPE, 1),
        ((H + 2, W + 2, Cskip), MXU_DTYPE, 1),
        ((H + 2, W + 2, Cout), MXU_DTYPE, 1),
    ])

    return pl.pallas_call(
        _block_cat_kernel,
        out_shape=jax.ShapeDtypeStruct((N, H, W, Cout), MXU_DTYPE),
        grid_spec=pltpu.PrefetchScalarGridSpec(
            num_scalar_prefetch=0,
            grid=(N,),
            in_specs=[
                pl.BlockSpec((1, H, W, Cup), lambda n: (n, 0, 0, 0)),
                pl.BlockSpec((1, H, W, Cskip), lambda n: (n, 0, 0, 0)),
                pl.BlockSpec((9 * Cup, Cout), lambda n: (0, 0)),
                pl.BlockSpec((9 * Cskip, Cout), lambda n: (0, 0)),
                pl.BlockSpec((9 * Cout, Cout), lambda n: (0, 0)),
            ],
            out_specs=pl.BlockSpec((1, H, W, Cout), lambda n: (n, 0, 0, 0)),
            scratch_shapes=[pltpu.VMEM((H + 2, W + 2, Cup), MXU_DTYPE),
                            pltpu.VMEM((H + 2, W + 2, Cskip), MXU_DTYPE),
                            pltpu.VMEM((H + 2, W + 2, Cout), MXU_DTYPE)],
        ),
        compiler_params=pltpu.CompilerParams(
            dimension_semantics=("parallel",), vmem_limit_bytes=vmem),
    )(x_nhwc.astype(MXU_DTYPE), skip_nhwc.astype(MXU_DTYPE), w1a, w1b, w2)


def pointwise_conv(x_nhwc, w_in_out, bias, *, out_dtype=MXU_DTYPE):
    """1x1 conv: per-pixel (Cin,) @ (Cin, Cout) + bias."""
    N, H, W, Cin = x_nhwc.shape
    Cout = w_in_out.shape[1]
    vmem = _vmem_limit_bytes([
        ((1, H, W, Cin), MXU_DTYPE, 2),
        ((Cin, Cout), MXU_DTYPE, 2),
        ((1, Cout), jnp.float32, 2),
        ((1, H, W, Cout), out_dtype, 2),
    ])
    return pl.pallas_call(
        _pointwise_kernel,
        out_shape=jax.ShapeDtypeStruct((N, H, W, Cout), out_dtype),
        grid_spec=pltpu.PrefetchScalarGridSpec(
            num_scalar_prefetch=0,
            grid=(N,),
            in_specs=[
                pl.BlockSpec((1, H, W, Cin), lambda n: (n, 0, 0, 0)),
                pl.BlockSpec((Cin, Cout), lambda n: (0, 0)),
                pl.BlockSpec((1, Cout), lambda n: (0, 0)),
            ],
            out_specs=pl.BlockSpec((1, H, W, Cout), lambda n: (n, 0, 0, 0)),
            scratch_shapes=[],
        ),
        compiler_params=pltpu.CompilerParams(
            dimension_semantics=("parallel",), vmem_limit_bytes=vmem),
    )(x_nhwc.astype(MXU_DTYPE), w_in_out.astype(MXU_DTYPE),
      bias.reshape(1, Cout).astype(jnp.float32))


def conv_transpose2x2(x_nhwc, w_iohw, bias):
    """ConvTranspose2d(kernel=2, stride=2): one fat matmul (all 4 taps packed
    into the output channel dim, bf16 output), then a pixel interleave."""
    N, H, W, Cin = x_nhwc.shape
    Cout = w_iohw.shape[1]
    # (Cin, Cout, 2, 2) -> (Cin, a, b, Cout) -> (Cin, 4*Cout), blocks ordered (a, b).
    w_cat = jnp.transpose(w_iohw, (0, 2, 3, 1)).reshape(Cin, 4 * Cout)
    b_cat = jnp.tile(bias.reshape(1, Cout), (1, 4)).reshape(4 * Cout)
    out4 = pointwise_conv(x_nhwc, w_cat, b_cat, out_dtype=MXU_DTYPE)  # (N,H,W,4*Cout) bf16
    # TODO(synk): fuse this 2x upsample pixel interleave into the downstream
    # fused-cat block kernel; for now it is plain-JAX layout glue on bf16 data.
    out = out4.reshape(N, H, W, 2, 2, Cout)
    out = jnp.transpose(out, (0, 1, 3, 2, 4, 5)).reshape(N, 2 * H, 2 * W, Cout)
    return out


def unet_forward(x_nchw, p):
    """UNET.forward with Pallas kernels.  Input/output are NCHW like PyTorch."""
    x = jnp.transpose(x_nchw, (0, 2, 3, 1)).astype(jnp.float32)   # NHWC

    x = conv3x3(x, p["input_w"], p["input_b"], relu=False)        # input_layer

    skips = []
    for (w1, w2) in p["downs"]:                                   # DownBlocks
        skip, pooled = double_conv(x, w1, w2, with_pool=True)
        skips.append(skip)
        x = pooled

    x = double_conv(x, p["bneck"][0], p["bneck"][1])              # bottleneck

    for (wt, bt, w1, w2) in p["ups"]:                             # UpBlocks
        s = skips.pop()
        x = conv_transpose2x2(x, wt, bt)
        x = double_conv_cat(x, s, w1, w2)                         # fused cat([up, skip])

    w_out = jnp.transpose(p["out_w"][:, :, 0, 0], (1, 0))         # (features, out_ch)
    x = pointwise_conv(x, w_out, p["out_b"], out_dtype=jnp.float32)  # output_layer
    return jnp.transpose(x, (0, 3, 1, 2))


# --------------------------------------------------------------------------
# Pure-JAX reference (mirrors the PyTorch module, NCHW)
# --------------------------------------------------------------------------
def _ref_conv3x3(x, w, b=None):
    y = lax.conv_general_dilated(x, w, (1, 1), ((1, 1), (1, 1)),
                                 dimension_numbers=("NCHW", "OIHW", "NCHW"))
    return y if b is None else y + b.reshape(1, -1, 1, 1)


def _ref_block(x, w1, w2):
    y = jnp.maximum(_ref_conv3x3(x, w1), 0.0)
    return jnp.maximum(_ref_conv3x3(y, w2), 0.0)


def _ref_pool(x):
    return lax.reduce_window(x, -jnp.inf, lax.max, (1, 1, 2, 2), (1, 1, 2, 2), "VALID")


def _ref_convT(x, w, b):
    # ConvTranspose2d(k=2, s=2): out[n, o, 2h+a, 2w+b] = sum_i x[n,i,h,w] w[i,o,a,b] + b[o]
    y = jnp.einsum("nihw,ioab->nohwab", x, w)
    N, Co, H, W = y.shape[0], y.shape[1], y.shape[2], y.shape[3]
    y = jnp.transpose(y, (0, 1, 2, 4, 3, 5)).reshape(N, Co, 2 * H, 2 * W)
    return y + b.reshape(1, -1, 1, 1)


def _ref_unet(x, p):
    y = _ref_conv3x3(x, p["input_w"], p["input_b"])
    skips = []
    for (w1, w2) in p["downs"]:
        s = _ref_block(y, w1, w2)
        skips.append(s)
        y = _ref_pool(s)
    y = _ref_block(y, p["bneck"][0], p["bneck"][1])
    for (wt, bt, w1, w2) in p["ups"]:
        s = skips.pop()
        y = _ref_convT(y, wt, bt)
        y = jnp.concatenate([y, s], axis=1)
        y = _ref_block(y, w1, w2)
    y = lax.conv_general_dilated(y, p["out_w"], (1, 1), ((0, 0), (0, 0)),
                                 dimension_numbers=("NCHW", "OIHW", "NCHW"))
    return y + p["out_b"].reshape(1, -1, 1, 1)


# --------------------------------------------------------------------------
# Parameter construction + test
# --------------------------------------------------------------------------
def make_params(key, in_channels=1, out_channels=1, features=8, depth=2):
    keys = iter(jax.random.split(key, 64))

    def nrm(shape, scale):
        return jax.random.normal(next(keys), shape, jnp.float32) * scale

    p = {}
    p["input_w"] = nrm((in_channels, in_channels, 3, 3), (2.0 / (9 * in_channels)) ** 0.5)
    p["input_b"] = nrm((in_channels,), 0.1)

    downs = []
    cin, cout = in_channels, features
    for _ in range(depth):
        downs.append((nrm((cout, cin, 3, 3), (2.0 / (9 * cin)) ** 0.5),
                      nrm((cout, cout, 3, 3), (2.0 / (9 * cout)) ** 0.5)))
        cin, cout = cout, cout * 2
    p["downs"] = downs

    p["bneck"] = (nrm((cout, cin, 3, 3), (2.0 / (9 * cin)) ** 0.5),
                  nrm((cout, cout, 3, 3), (2.0 / (9 * cout)) ** 0.5))

    ups = []
    cin = cout
    for _ in range(depth):
        cout = cin // 2
        ups.append((nrm((cin, cout, 2, 2), (1.0 / cin) ** 0.5),     # ConvTranspose w
                    nrm((cout,), 0.1),                              # ConvTranspose b
                    nrm((cout, cin, 3, 3), (2.0 / (9 * cin)) ** 0.5),
                    nrm((cout, cout, 3, 3), (2.0 / (9 * cout)) ** 0.5)))
        cin = cout
    p["ups"] = ups

    p["out_w"] = nrm((out_channels, features, 1, 1), (1.0 / features) ** 0.5)
    p["out_b"] = nrm((out_channels,), 0.1)
    return p


if __name__ == "__main__":
    key = jax.random.PRNGKey(0)
    kx, kp = jax.random.split(key)

    N, CIN, H, W = 2, 1, 16, 16
    x = jax.random.normal(kx, (N, CIN, H, W), jnp.float32)
    params = make_params(kp, in_channels=CIN, out_channels=1, features=8, depth=2)

    out = jax.block_until_ready(unet_forward(x, params))
    ref = _ref_unet(x, params)

    assert out.shape == (N, 1, H, W), out.shape
    rel = jnp.linalg.norm(out - ref) / jnp.linalg.norm(ref)
    max_abs = jnp.max(jnp.abs(out - ref))
    # bf16 MXU operands / bf16 intermediates (f32 accumulation) vs f32 reference.
    assert float(rel) < 5e-2 and float(max_abs) < 2.5e-1, (float(rel), float(max_abs))

    print("KERNEL_OK")
</pallas_src>

<mosaic_0001>
module attributes {stable_mosaic.version = 11 : i64} {
  func.func @_conv3x3_kernel(%arg0: i32, %arg1: memref<1x16x16x1xbf16, #tpu.memory_space<vmem>>, %arg2: memref<9x1xbf16, #tpu.memory_space<vmem>>, %arg3: memref<1x1xf32, #tpu.memory_space<vmem>>, %arg4: memref<1x16x16x1xbf16, #tpu.memory_space<vmem>>, %arg5: memref<18x18x1xbf16, #tpu.memory_space<vmem>>) attributes {dimension_semantics = [#tpu.dimension_semantics<parallel>], iteration_bounds = array<i64: 2>, scalar_prefetch = 0 : i64, scratch_operands = 1 : i64, tpu.core_type = #tpu.core_type<tc>, window_params = [{transform_indices = @transform_0, window_bounds = array<i64: 1, 16, 16, 1>}, {pipeline_mode = #tpu.pipeline_mode<synchronous>, transform_indices = @transform_1, window_bounds = array<i64: 9, 1>}, {pipeline_mode = #tpu.pipeline_mode<synchronous>, transform_indices = @transform_2, window_bounds = array<i64: 1, 1>}, {transform_indices = @transform_3, window_bounds = array<i64: 1, 16, 16, 1>}]} {
    %cst = arith.constant 0.000000e+00 : bf16
    %0 = vector.broadcast %cst : bf16 to vector<1x18x1xbf16>
    %cst_0 = arith.constant 0.000000e+00 : bf16
    %1 = vector.broadcast %cst_0 : bf16 to vector<18x1x1xbf16>
    %c0 = arith.constant 0 : index
    %c0_1 = arith.constant 0 : index
    %c0_2 = arith.constant 0 : index
    %2 = vector.load %arg5[%c0, %c0_1, %c0_2] : memref<18x18x1xbf16, #tpu.memory_space<vmem>>, vector<1x18x1xbf16>
    tpu.vector_store %arg5[%c0, %c0_1, %c0_2], %0 {strides = array<i32>} : memref<18x18x1xbf16, #tpu.memory_space<vmem>>, vector<1x18x1xbf16>,
    %c17 = arith.constant 17 : index
    %c0_3 = arith.constant 0 : index
    %c0_4 = arith.constant 0 : index
    %3 = vector.load %arg5[%c17, %c0_3, %c0_4] : memref<18x18x1xbf16, #tpu.memory_space<vmem>>, vector<1x18x1xbf16>
    tpu.vector_store %arg5[%c17, %c0_3, %c0_4], %0 {strides = array<i32>} : memref<18x18x1xbf16, #tpu.memory_space<vmem>>, vector<1x18x1xbf16>,
    %c0_5 = arith.constant 0 : index
    %c0_6 = arith.constant 0 : index
    %c0_7 = arith.constant 0 : index
    %4 = vector.load %arg5[%c0_5, %c0_6, %c0_7] : memref<18x18x1xbf16, #tpu.memory_space<vmem>>, vector<18x1x1xbf16>
    tpu.vector_store %arg5[%c0_5, %c0_6, %c0_7], %1 {strides = array<i32>} : memref<18x18x1xbf16, #tpu.memory_space<vmem>>, vector<18x1x1xbf16>,
    %c0_8 = arith.constant 0 : index
    %c17_9 = arith.constant 17 : index
    %c0_10 = arith.constant 0 : index
    %5 = vector.load %arg5[%c0_8, %c17_9, %c0_10] : memref<18x18x1xbf16, #tpu.memory_space<vmem>>, vector<18x1x1xbf16>
    tpu.vector_store %arg5[%c0_8, %c17_9, %c0_10], %1 {strides = array<i32>} : memref<18x18x1xbf16, #tpu.memory_space<vmem>>, vector<18x1x1xbf16>,
    %c0_11 = arith.constant 0 : index
    %c0_12 = arith.constant 0 : index
    %c0_13 = arith.constant 0 : index
    %c0_14 = arith.constant 0 : index
    %6 = vector.load %arg1[%c0_11, %c0_12, %c0_13, %c0_14] : memref<1x16x16x1xbf16, #tpu.memory_space<vmem>>, vector<1x16x16x1xbf16>
    %7 = vector.shape_cast %6 : vector<1x16x16x1xbf16> to vector<16x16x1xbf16>
    %c1 = arith.constant 1 : index
    %c1_15 = arith.constant 1 : index
    %c0_16 = arith.constant 0 : index
    %8 = vector.load %arg5[%c1, %c1_15, %c0_16] : memref<18x18x1xbf16, #tpu.memory_space<vmem>>, vector<16x16x1xbf16>
    tpu.vector_store %arg5[%c1, %c1_15, %c0_16], %7 {strides = array<i32>} : memref<18x18x1xbf16, #tpu.memory_space<vmem>>, vector<16x16x1xbf16>,
    %cst_17 = arith.constant 0.000000e+00 : f32
    %9 = vector.broadcast %cst_17 : f32 to vector<256x1xf32>
    %c0_18 = arith.constant 0 : index
    %c0_19 = arith.constant 0 : index
    %c0_20 = arith.constant 0 : index
    %10 = vector.load %arg5[%c0_18, %c0_19, %c0_20] : memref<18x18x1xbf16, #tpu.memory_space<vmem>>, vector<16x16x1xbf16>
    %c0_21 = arith.constant 0 : index
    %c1_22 = arith.constant 1 : index
    %c0_23 = arith.constant 0 : index
    %11 = vector.load %arg5[%c0_21, %c1_22, %c0_23] : memref<18x18x1xbf16, #tpu.memory_space<vmem>>, vector<16x16x1xbf16>
    %c0_24 = arith.constant 0 : index
    %c2 = arith.constant 2 : index
    %c0_25 = arith.constant 0 : index
    %12 = vector.load %arg5[%c0_24, %c2, %c0_25] : memref<18x18x1xbf16, #tpu.memory_space<vmem>>, vector<16x16x1xbf16>
    %13 = tpu.concatenate %10, %11, %12 in 2 : vector<16x16x1xbf16>, vector<16x16x1xbf16>, vector<16x16x1xbf16> -> vector<16x16x3xbf16>
    %c0_26 = arith.constant 0 : index
    %c0_27 = arith.constant 0 : index
    %14 = vector.load %arg2[%c0_26, %c0_27] : memref<9x1xbf16, #tpu.memory_space<vmem>>, vector<3x1xbf16>
    %15 = vector.shape_cast %13 : vector<16x16x3xbf16> to vector<256x3xbf16>
    %cst_28 = arith.constant dense<0.000000e+00> : vector<256x1xf32>
    %16 = tpu.matmul %15, %14, %cst_28 {dimension_numbers = #tpu.dot_dimension_numbers<[1], [0], [0], [1], [0, 0, 1, 1], [], []>} : vector<256x3xbf16>, vector<3x1xbf16>, vector<256x1xf32> -> vector<256x1xf32>
    %17 = arith.addf %9, %16 : vector<256x1xf32>
    %c1_29 = arith.constant 1 : index
    %c0_30 = arith.constant 0 : index
    %c0_31 = arith.constant 0 : index
    %18 = vector.load %arg5[%c1_29, %c0_30, %c0_31] : memref<18x18x1xbf16, #tpu.memory_space<vmem>>, vector<16x16x1xbf16>
    %c1_32 = arith.constant 1 : index
    %c1_33 = arith.constant 1 : index
    %c0_34 = arith.constant 0 : index
    %19 = vector.load %arg5[%c1_32, %c1_33, %c0_34] : memref<18x18x1xbf16, #tpu.memory_space<vmem>>, vector<16x16x1xbf16>
    %c1_35 = arith.constant 1 : index
    %c2_36 = arith.constant 2 : index
    %c0_37 = arith.constant 0 : index
    %20 = vector.load %arg5[%c1_35, %c2_36, %c0_37] : memref<18x18x1xbf16, #tpu.memory_space<vmem>>, vector<16x16x1xbf16>
    %21 = tpu.concatenate %18, %19, %20 in 2 : vector<16x16x1xbf16>, vector<16x16x1xbf16>, vector<16x16x1xbf16> -> vector<16x16x3xbf16>
    %c3 = arith.constant 3 : index
    %c0_38 = arith.constant 0 : index
    %22 = vector.load %arg2[%c3, %c0_38] : memref<9x1xbf16, #tpu.memory_space<vmem>>, vector<3x1xbf16>
    %23 = vector.shape_cast %21 : vector<16x16x3xbf16> to vector<256x3xbf16>
    %cst_39 = arith.constant dense<0.000000e+00> : vector<256x1xf32>
    %24 = tpu.matmul %23, %22, %cst_39 {dimension_numbers = #tpu.dot_dimension_numbers<[1], [0], [0], [1], [0, 0, 1, 1], [], []>} : vector<256x3xbf16>, vector<3x1xbf16>, vector<256x1xf32> -> vector<256x1xf32>
    %25 = arith.addf %17, %24 : vector<256x1xf32>
    %c2_40 = arith.constant 2 : index
    %c0_41 = arith.constant 0 : index
    %c0_42 = arith.constant 0 : index
    %26 = vector.load %arg5[%c2_40, %c0_41, %c0_42] : memref<18x18x1xbf16, #tpu.memory_space<vmem>>, vector<16x16x1xbf16>
    %c2_43 = arith.constant 2 : index
    %c1_44 = arith.constant 1 : index
    %c0_45 = arith.constant 0 : index
    %27 = vector.load %arg5[%c2_43, %c1_44, %c0_45] : memref<18x18x1xbf16, #tpu.memory_space<vmem>>, vector<16x16x1xbf16>
    %c2_46 = arith.constant 2 : index
    %c2_47 = arith.constant 2 : index
    %c0_48 = arith.constant 0 : index
    %28 = vector.load %arg5[%c2_46, %c2_47, %c0_48] : memref<18x18x1xbf16, #tpu.memory_space<vmem>>, vector<16x16x1xbf16>
    %29 = tpu.concatenate %26, %27, %28 in 2 : vector<16x16x1xbf16>, vector<16x16x1xbf16>, vector<16x16x1xbf16> -> vector<16x16x3xbf16>
    %c6 = arith.constant 6 : index
    %c0_49 = arith.constant 0 : index
    %30 = vector.load %arg2[%c6, %c0_49] : memref<9x1xbf16, #tpu.memory_space<vmem>>, vector<3x1xbf16>
    %31 = vector.shape_cast %29 : vector<16x16x3xbf16> to vector<256x3xbf16>
    %cst_50 = arith.constant dense<0.000000e+00> : vector<256x1xf32>
    %32 = tpu.matmul %31, %30, %cst_50 {dimension_numbers = #tpu.dot_dimension_numbers<[1], [0], [0], [1], [0, 0, 1, 1], [], []>} : vector<256x3xbf16>, vector<3x1xbf16>, vector<256x1xf32> -> vector<256x1xf32>
    %33 = arith.addf %25, %32 : vector<256x1xf32>
    %c0_51 = arith.constant 0 : index
    %c0_52 = arith.constant 0 : index
    %34 = vector.load %arg3[%c0_51, %c0_52] : memref<1x1xf32, #tpu.memory_space<vmem>>, vector<1x1xf32>
    %35 = vector.broadcast %34 : vector<1x1xf32> to vector<256x1xf32>
    %36 = arith.addf %33, %35 : vector<256x1xf32>
    %37 = vector.shape_cast %36 : vector<256x1xf32> to vector<16x16x1xf32>
    %38 = arith.truncf %37 : vector<16x16x1xf32> to vector<16x16x1xbf16>
    %c0_53 = arith.constant 0 : index
    %c0_54 = arith.constant 0 : index
    %c0_55 = arith.constant 0 : index
    %c0_56 = arith.constant 0 : index
    %39 = vector.load %arg4[%c0_53, %c0_54, %c0_55, %c0_56] : memref<1x16x16x1xbf16, #tpu.memory_space<vmem>>, vector<1x16x16x1xbf16>
    %40 = vector.shape_cast %39 : vector<1x16x16x1xbf16> to vector<16x16x1xbf16>
    %41 = vector.shape_cast %38 : vector<16x16x1xbf16> to vector<1x16x16x1xbf16>
    tpu.vector_store %arg4[%c0_53, %c0_54, %c0_55, %c0_56], %41 {strides = array<i32>} : memref<1x16x16x1xbf16, #tpu.memory_space<vmem>>, vector<1x16x16x1xbf16>,
    return
  }
  func.func @transform_0(%arg0: i32) -> (i32, i32, i32, i32) {
    %c0_i32 = arith.constant 0 : i32
    %c0_i32_0 = arith.constant 0 : i32
    %c0_i32_1 = arith.constant 0 : i32
    %c0_i32_2 = arith.constant 0 : i32
    return %arg0, %c0_i32, %c0_i32_0, %c0_i32_1 : i32, i32, i32, i32
  }
  func.func @transform_1(%arg0: i32) -> (i32, i32) {
    %c0_i32 = arith.constant 0 : i32
    %c0_i32_0 = arith.constant 0 : i32
    %c0_i32_1 = arith.constant 0 : i32
    return %c0_i32, %c0_i32_0 : i32, i32
  }
  func.func @transform_2(%arg0: i32) -> (i32, i32) {
    %c0_i32 = arith.constant 0 : i32
    %c0_i32_0 = arith.constant 0 : i32
    %c0_i32_1 = arith.constant 0 : i32
    return %c0_i32, %c0_i32_0 : i32, i32
  }
  func.func @transform_3(%arg0: i32) -> (i32, i32, i32, i32) {
    %c0_i32 = arith.constant 0 : i32
    %c0_i32_0 = arith.constant 0 : i32
    %c0_i32_1 = arith.constant 0 : i32
    %c0_i32_2 = arith.constant 0 : i32
    return %arg0, %c0_i32, %c0_i32_0, %c0_i32_1 : i32, i32, i32, i32
  }
}

</mosaic_0001>

<llo_original>
// kernel: tpu_custom_call.1
$region0: #{tpu_custom_call.1}
  #allocation0 [shape = 'u32[]', space=smem, size = 0x4, offset = 0x4, fixed_abs, tag = 'smem constant byte address 0x4 - core index']
  #allocation1 [shape = 'u32[144,128]{1,0:T(1,128)}', space=vmem, size = 0x12000, scoped, tag = 'internal scratch']
  #allocation2 [shape = 'bf16[18,18,1]{2,1,0:T(8,128)(2,1)}', space=vmem, size = 0x1b000, scoped, tag = 'scratch operand']
  #allocation3 [shape = 'f32[1,1]{1,0:T(1,128)S(1)}', space=vmem, size = 0x200, scoped, tag = 'scoped memory for tpu_custom_call.1']
  %s0 = inlined_call_operand.vmem [shape: bf16[2,16,16,1], index: 0, kind: input, shape index: {}]
  %s1 = inlined_call_operand.vmem [shape: bf16[9,1], index: 1, kind: input, shape index: {}]
  %s2 = inlined_call_operand.<no memory space> [shape: f32[1,1], index: 2, kind: input, shape index: {}]
  %s3 = inlined_call_operand.vmem [shape: bf16[2,16,16,1], index: 3, kind: output, shape index: {}]
  %s4 = sld [smem:[#allocation0]]
  $region45: #{tpu_custom_call.1} parent=0
    _
  %s6 = ssub.s32 1, %s4
  %s7 = scalar_select 0, %s6, %s4
  %v8 = vstv %s2
  %9 = vst [vmem:[#allocation3] sm:$0x1] %v8
  loop: start=0, step=1, limit=4
  $region2: #{tpu_custom_call.1} parent=0 // loop_pre_header
    _
  $region3: #{tpu_custom_call.1} parent=0 // loop_header
    %s11 = sphi 0, %s15
    %p12 = scmp.ge.s32.totalorder %s11, 4
    %s21 = sphi 0, %s23
    %s24 = sphi 0, %s21
    %s25 = sphi 0, %s24
    %s41 = sphi 0, %s25
    %s45 = sphi 0, %s45
    %s47 = sphi 0, %s45
    %s48 = sphi 0, %s47
    %s62 = sphi 0, %s48
    %s66 = sphi 0, %s66
    %s68 = sphi 0, %s66
    %s69 = sphi 0, %s68
    %s83 = sphi 0, %s69
    %s89 = sphi 0, %s91
    %s92 = sphi 0, %s89
    %s93 = sphi 0, %s92
    %s109 = sphi 0, %s93
  $region4: #{tpu_custom_call.1} parent=0 // loop_header_branch
    %14 = sbr.rel (%p12) target = $region8
  $region5: #{tpu_custom_call.1} parent=0 // loop_body
    %s16 = ssub.s32 %s11, 1
    %s17 = ssub.s32 %s11, 2
    %s18 = sadd.s32 %s11, 1
    %s19 = ssub.s32 %s11, %s18
    %p20 = scmp.eq.s32.totalorder %s19, 0
    %s22 = sadd.s32 %s21, 1
    %s23 = scalar_select %p20, %s21, %s22
    %p26 = pneg %p20
    %p27 = scmp.eq.s32.totalorder %s11, 1
    %p28 = por %p26, %p27
    %p29 = scmp.ne.s32.totalorder %s21, %s24
    %p30 = scmp.eq.s32.totalorder %s11, 0
    %p31 = por %p29, %p30
    %p32 = scmp.ne.s32.totalorder %s21, %s24
    %p33 = scmp.eq.s32.totalorder %s16, 1
    %p34 = por %p32, %p33
    %p35 = scmp.ne.s32.totalorder %s24, %s25
    %p36 = scmp.eq.s32.totalorder %s16, 0
    %p37 = por %p35, %p36
    %p38 = scmp.ne.s32.totalorder %s24, %s25
    %p39 = scmp.eq.s32.totalorder %s17, 1
    %p40 = por %p38, %p39
    %p42 = scmp.ne.s32.totalorder %s25, %s41
    %p43 = scmp.eq.s32.totalorder %s17, 0
    %p44 = por %p42, %p43
    %s46 = sadd.s32 %s45, 1
    %p49 = scmp.eq.s32.totalorder %s11, 1
    %p50 = scmp.ne.s32.totalorder %s45, %s47
    %p51 = scmp.eq.s32.totalorder %s11, 0
    %p52 = por %p50, %p51
    %p53 = scmp.ne.s32.totalorder %s45, %s47
    %p54 = scmp.eq.s32.totalorder %s16, 1
    %p55 = por %p53, %p54
    %p56 = scmp.ne.s32.totalorder %s47, %s48
    %p57 = scmp.eq.s32.totalorder %s16, 0
    %p58 = por %p56, %p57
    %p59 = scmp.ne.s32.totalorder %s47, %s48
    %p60 = scmp.eq.s32.totalorder %s17, 1
    %p61 = por %p59, %p60
    %p63 = scmp.ne.s32.totalorder %s48, %s62
    %p64 = scmp.eq.s32.totalorder %s17, 0
    %p65 = por %p63, %p64
    %s67 = sadd.s32 %s66, 1
    %p70 = scmp.eq.s32.totalorder %s11, 1
    %p71 = scmp.ne.s32.totalorder %s66, %s68
    %p72 = scmp.eq.s32.totalorder %s11, 0
    %p73 = por %p71, %p72
    %p74 = scmp.ne.s32.totalorder %s66, %s68
    %p75 = scmp.eq.s32.totalorder %s16, 1
    %p76 = por %p74, %p75
    %p77 = scmp.ne.s32.totalorder %s68, %s69
    %p78 = scmp.eq.s32.totalorder %s16, 0
    %p79 = por %p77, %p78
    %p80 = scmp.ne.s32.totalorder %s68, %s69
    %p81 = scmp.eq.s32.totalorder %s17, 1
    %p82 = por %p80, %p81
    %p84 = scmp.ne.s32.totalorder %s69, %s83
    %p85 = scmp.eq.s32.totalorder %s17, 0
    %p86 = por %p84, %p85
    %s87 = ssub.s32 %s11, %s18
    %p88 = scmp.eq.s32.totalorder %s87, 0
    %s90 = sadd.s32 %s89, 1
    %s91 = scalar_select %p88, %s89, %s90
    %p94 = pneg %p88
    %p95 = scmp.eq.s32.totalorder %s11, 1
    %p96 = por %p94, %p95
    %p97 = scmp.ne.s32.totalorder %s89, %s92
    %p98 = scmp.eq.s32.totalorder %s11, 0
    %p99 = por %p97, %p98
    %p100 = scmp.ne.s32.totalorder %s89, %s92
    %p101 = scmp.eq.s32.totalorder %s16, 1
    %p102 = por %p100, %p101
    %p103 = scmp.ne.s32.totalorder %s92, %s93
    %p104 = scmp.eq.s32.totalorder %s16, 0
    %p105 = por %p103, %p104
    %p106 = scmp.ne.s32.totalorder %s92, %s93
    %p107 = scmp.eq.s32.totalorder %s17, 1
    %p108 = por %p106, %p107
    %p110 = scmp.ne.s32.totalorder %s93, %s109
    %p111 = scmp.eq.s32.totalorder %s17, 0
    %p112 = por %p110, %p111
    %p113 = scmp.le.s32.totalorder 1, %s11
    %p114 = scmp.lt.s32.totalorder %s11, 3
    %p115 = pnand %p113, %p114
    %p116 = pneg %p115
    // Predicated region
    $region9: #{tpu_custom_call.1} parent=5 // pred_check
      _
    $region10: #{tpu_custom_call.1} parent=5 // pred_check_branch
      %118 = sbr.rel (%p115) target = $region12
    $region11: #{tpu_custom_call.1} parent=5 // pred_region
      %s119 = ssub.s32 %s11, 1
      // Predicated region
      $region13: #{tpu_custom_call.1} parent=11 // pred_check
        %p120 = pneg %p58
      $region14: #{tpu_custom_call.1} parent=11 // pred_check_branch
        %122 = sbr.rel (%p120) target = $region16
      $region15: #{tpu_custom_call.1} parent=11 // pred_region
        _
      $region16: #{tpu_custom_call.1} parent=11 // pred_fallthru
        _
      // Predicated region
      $region17: #{tpu_custom_call.1} parent=11 // pred_check
        %p123 = pneg %p79
      $region18: #{tpu_custom_call.1} parent=11 // pred_check_branch
        %125 = sbr.rel (%p123) target = $region20
      $region19: #{tpu_custom_call.1} parent=11 // pred_region
        _
      $region20: #{tpu_custom_call.1} parent=11 // pred_fallthru
        _
    $region12: #{tpu_custom_call.1} parent=5 // pred_fallthru
      _
    %p126 = scmp.lt.s32.totalorder %s11, 2
    // Predicated region
    $region21: #{tpu_custom_call.1} parent=5 // pred_check
      %p127 = pneg %p126
    $region22: #{tpu_custom_call.1} parent=5 // pred_check_branch
      %129 = sbr.rel (%p127) target = $region24
    $region23: #{tpu_custom_call.1} parent=5 // pred_region
      // Predicated region
      $region25: #{tpu_custom_call.1} parent=23 // pred_check
        %p130 = pneg %p31
      $region26: #{tpu_custom_call.1} parent=23 // pred_check_branch
        %132 = sbr.rel (%p130) target = $region28
      $region27: #{tpu_custom_call.1} parent=23 // pred_region
        %p133 = scmp.lt.s32.totalorder %s11, 1
        %s134 = scalar_select %p133, %s11, 1
        %s135 = smul.addr %s134, 32
        %s136 = smul.addr %s135, 4
        %s137 = scalar_lea.vmem %s0, %s136
      $region28: #{tpu_custom_call.1} parent=23 // pred_fallthru
        _
    $region24: #{tpu_custom_call.1} parent=5 // pred_fallthru
      _
    %p138 = scmp.le.s32.totalorder 1, %s11
    %p139 = scmp.lt.s32.totalorder %s11, 3
    %p140 = pnand %p138, %p139
    %p141 = pneg %p140
    // Predicated region
    $region29: #{tpu_custom_call.1} parent=5 // pred_check
      _
    $region30: #{tpu_custom_call.1} parent=5 // pred_check_branch
      %143 = sbr.rel (%p140) target = $region32
    $region31: #{tpu_custom_call.1} parent=5 // pred_region
      %s144 = ssub.s32 %s11, 1
      %p145 = scmp.lt.s32.totalorder %s16, 1
      %s146 = scalar_select %p145, %s16, 1
      %s147 = smul.addr %s146, 32
      %s148 = smul.addr %s147, 4
      %s149 = scalar_lea.vmem %s0, %s148
      %p150 = pneg %p37
      %p151 = pneg %p34
      %p152 = pneg %p58
      %p153 = pneg %p55
      %p154 = pneg %p79
      %p155 = pneg %p76
      %p156 = pneg %p105
      %p157 = pneg %p102
      %p158 = scmp.lt.s32.totalorder %s16, 1
      %s159 = scalar_select %p158, %s16, 1
      %s160 = smul.addr %s159, 32
      %s161 = smul.addr %s160, 4
      %s162 = scalar_lea.vmem %s3, %s161
      %p163 = scmp.lt.s32.totalorder %s16, 1
      %s164 = scalar_select %p163, %s16, 1
      %s165 = smul.addr %s164, 32
      %s166 = smul.addr %s165, 4
      %s167 = scalar_lea.vmem %s0, %s166
      %p168 = scmp.lt.s32.totalorder %s16, 1
      %s169 = scalar_select %p168, %s16, 1
      %s170 = smul.addr %s169, 32
      %s171 = smul.addr %s170, 4
      %s172 = scalar_lea.vmem %s3, %s171
      %vm174 = vcmask 3072
      %175 = vst.msk [vmem:[#allocation2] sm:$0xf] %vm174, 0
      %176 = vst.msk [vmem:[#allocation2 + $0x4] sm:$0xf] %vm174, 0
      %vm177 = vcmask 0
      %178 = vst.msk [vmem:[#allocation2 + $0x8] sm:$0x1] %vm177, 0
      %s179 = scalar_lea.vmem [#allocation2], 204
      %180 = vst.msk [vmem:[%s179] sm:$0xf] %vm174, 0
      %181 = vst.msk [vmem:[%s179 + $0x4] sm:$0xf] %vm174, 0
      %182 = vst.msk [vmem:[%s179 + $0x8] sm:$0x1] %vm177, 0
      %vm183 = vcmask 0
      %vm184 = vsmask.f32 256
      %vm185 = vmand %vm183, %vm184
      %v186 = vld [vmem:[#allocation2] sm:$0x1]
      %v187 = vsel %vm185, 0, %v186
      %188 = vst [vmem:[#allocation2] sm:$0x1] %v187
      %v189 = vld [vmem:[#allocation2 + $0xc] sm:$0x1]
      %v190 = vsel %vm185, 0, %v189
      %191 = vst [vmem:[#allocation2 + $0xc] sm:$0x1] %v190
      %v192 = vld [vmem:[#allocation2 + $0x18] sm:$0x1]
      %v193 = vsel %vm185, 0, %v192
      %194 = vst [vmem:[#allocation2 + $0x18] sm:$0x1] %v193
      %v195 = vld [vmem:[#allocation2 + $0x24] sm:$0x1]
      %v196 = vsel %vm185, 0, %v195
      %197 = vst [vmem:[#allocation2 + $0x24] sm:$0x1] %v196
      %v198 = vld [vmem:[#allocation2 + $0x30] sm:$0x1]
      %v199 = vsel %vm185, 0, %v198
      %200 = vst [vmem:[#allocation2 + $0x30] sm:$0x1] %v199
      %v201 = vld [vmem:[#allocation2 + $0x3c] sm:$0x1]
      %v202 = vsel %vm185, 0, %v201
      %203 = vst [vmem:[#allocation2 + $0x3c] sm:$0x1] %v202
      %v204 = vld [vmem:[#allocation2 + $0x48] sm:$0x1]
      %v205 = vsel %vm185, 0, %v204
      %206 = vst [vmem:[#allocation2 + $0x48] sm:$0x1] %v205
      %v207 = vld [vmem:[#allocation2 + $0x54] sm:$0x1]
      %v208 = vsel %vm185, 0, %v207
      %209 = vst [vmem:[#allocation2 + $0x54] sm:$0x1] %v208
      %v210 = vld [vmem:[#allocation2 + $0x60] sm:$0x1]
      %v211 = vsel %vm185, 0, %v210
      %212 = vst [vmem:[#allocation2 + $0x60] sm:$0x1] %v211
      %v213 = vld [vmem:[#allocation2 + $0x6c] sm:$0x1]
      %v214 = vsel %vm185, 0, %v213
      %215 = vst [vmem:[#allocation2 + $0x6c] sm:$0x1] %v214
      %v216 = vld [vmem:[#allocation2 + $0x78] sm:$0x1]
      %v217 = vsel %vm185, 0, %v216
      %218 = vst [vmem:[#allocation2 + $0x78] sm:$0x1] %v217
      %v219 = vld [vmem:[#allocation2 + $0x84] sm:$0x1]
      %v220 = vsel %vm185, 0, %v219
      %221 = vst [vmem:[#allocation2 + $0x84] sm:$0x1] %v220
      %v222 = vld [vmem:[#allocation2 + $0x90] sm:$0x1]
      %v223 = vsel %vm185, 0, %v222
      %224 = vst [vmem:[#allocation2 + $0x90] sm:$0x1] %v223
      %v225 = vld [vmem:[#allocation2 + $0x9c] sm:$0x1]
      %v226 = vsel %vm185, 0, %v225
      %227 = vst [vmem:[#allocation2 + $0x9c] sm:$0x1] %v226
      %v228 = vld [vmem:[#allocation2 + $0xa8] sm:$0x1]
      %v229 = vsel %vm185, 0, %v228
      %230 = vst [vmem:[#allocation2 + $0xa8] sm:$0x1] %v229
      %v231 = vld [vmem:[#allocation2 + $0xb4] sm:$0x1]
      %v232 = vsel %vm185, 0, %v231
      %233 = vst [vmem:[#allocation2 + $0xb4] sm:$0x1] %v232
      %v234 = vld [vmem:[#allocation2 + $0xc0] sm:$0x1]
      %v235 = vsel %vm185, 0, %v234
      %236 = vst [vmem:[#allocation2 + $0xc0] sm:$0x1] %v235
      %v237 = vld [vmem:[#allocation2 + $0xcc] sm:$0x1]
      %v238 = vsel %vm185, 0, %v237
      %239 = vst [vmem:[#allocation2 + $0xcc] sm:$0x1] %v238
      %vm240 = vsmask.f32 7938
      %vm241 = vmand %vm183, %vm240
      %v242 = vld [vmem:[#allocation2 + $0x8] sm:$0x1]
      %v243 = vsel %vm241, 0, %v242
      %244 = vst [vmem:[#allocation2 + $0x8] sm:$0x1] %v243
      %v245 = vld [vmem:[#allocation2 + $0x14] sm:$0x1]
      %v246 = vsel %vm241, 0, %v245
      %247 = vst [vmem:[#allocation2 + $0x14] sm:$0x1] %v246
      %v248 = vld [vmem:[#allocation2 + $0x20] sm:$0x1]
      %v249 = vsel %vm241, 0, %v248
      %250 = vst [vmem:[#allocation2 + $0x20] sm:$0x1] %v249
      %v251 = vld [vmem:[#allocation2 + $0x2c] sm:$0x1]
      %v252 = vsel %vm241, 0, %v251
      %253 = vst [vmem:[#allocation2 + $0x2c] sm:$0x1] %v252
      %v254 = vld [vmem:[#allocation2 + $0x38] sm:$0x1]
      %v255 = vsel %vm241, 0, %v254
      %256 = vst [vmem:[#allocation2 + $0x38] sm:$0x1] %v255
      %v257 = vld [vmem:[#allocation2 + $0x44] sm:$0x1]
      %v258 = vsel %vm241, 0, %v257
      %259 = vst [vmem:[#allocation2 + $0x44] sm:$0x1] %v258
      %v260 = vld [vmem:[#allocation2 + $0x50] sm:$0x1]
      %v261 = vsel %vm241, 0, %v260
      %262 = vst [vmem:[#allocation2 + $0x50] sm:$0x1] %v261
      %v263 = vld [vmem:[#allocation2 + $0x5c] sm:$0x1]
      %v264 = vsel %vm241, 0, %v263
      %265 = vst [vmem:[#allocation2 + $0x5c] sm:$0x1] %v264
      %v266 = vld [vmem:[#allocation2 + $0x68] sm:$0x1]
      %v267 = vsel %vm241, 0, %v266
      %268 = vst [vmem:[#allocation2 + $0x68] sm:$0x1] %v267
      %v269 = vld [vmem:[#allocation2 + $0x74] sm:$0x1]
      %v270 = vsel %vm241, 0, %v269
      %271 = vst [vmem:[#allocation2 + $0x74] sm:$0x1] %v270
      %v272 = vld [vmem:[#allocation2 + $0x80] sm:$0x1]
      %v273 = vsel %vm241, 0, %v272
      %274 = vst [vmem:[#allocation2 + $0x80] sm:$0x1] %v273
      %v275 = vld [vmem:[#allocation2 + $0x8c] sm:$0x1]
      %v276 = vsel %vm241, 0, %v275
      %277 = vst [vmem:[#allocation2 + $0x8c] sm:$0x1] %v276
      %v278 = vld [vmem:[#allocation2 + $0x98] sm:$0x1]
      %v279 = vsel %vm241, 0, %v278
      %280 = vst [vmem:[#allocation2 + $0x98] sm:$0x1] %v279
      %v281 = vld [vmem:[#allocation2 + $0xa4] sm:$0x1]
      %v282 = vsel %vm241, 0, %v281
      %283 = vst [vmem:[#allocation2 + $0xa4] sm:$0x1] %v282
      %v284 = vld [vmem:[#allocation2 + $0xb0] sm:$0x1]
      %v285 = vsel %vm241, 0, %v284
      %286 = vst [vmem:[#allocation2 + $0xb0] sm:$0x1] %v285
      %v287 = vld [vmem:[#allocation2 + $0xbc] sm:$0x1]
      %v288 = vsel %vm241, 0, %v287
      %289 = vst [vmem:[#allocation2 + $0xbc] sm:$0x1] %v288
      %v290 = vld [vmem:[#allocation2 + $0xc8] sm:$0x1]
      %v291 = vsel %vm241, 0, %v290
      %292 = vst [vmem:[#allocation2 + $0xc8] sm:$0x1] %v291
      %v293 = vld [vmem:[#allocation2 + $0xd4] sm:$0x1]
      %v294 = vsel %vm241, 0, %v293
      %295 = vst [vmem:[#allocation2 + $0xd4] sm:$0x1] %v294
      %v296 = vld [vmem:[%s167] sm:$0xf]
      %v297 = vld [vmem:[%s167 + $0x4] sm:$0xf]
      %v298 = vld [vmem:[%s167 + $0x8] sm:$0xf]
      %v299 = vld [vmem:[%s167 + $0xc] sm:$0xf]
      %v300 = vld [vmem:[%s167 + $0x10] sm:$0xf]
      %v301 = vld [vmem:[%s167 + $0x14] sm:$0xf]
      %v302 = vld [vmem:[%s167 + $0x18] sm:$0xf]
      %v303 = vld [vmem:[%s167 + $0x1c] sm:$0xf]
      %v304 = vld [vmem:[%s167 + $0x20] sm:$0xf]
      %v305 = vld [vmem:[%s167 + $0x24] sm:$0xf]
      %v306 = vld [vmem:[%s167 + $0x28] sm:$0xf]
      %v307 = vld [vmem:[%s167 + $0x2c] sm:$0xf]
      %v308 = vld [vmem:[%s167 + $0x30] sm:$0xf]
      %v309 = vld [vmem:[%s167 + $0x34] sm:$0xf]
      %v310 = vld [vmem:[%s167 + $0x38] sm:$0xf]
      %v311 = vld [vmem:[%s167 + $0x3c] sm:$0xf]
      %v312 = vld [vmem:[%s167 + $0x40] sm:$0xf]
      %v313 = vld [vmem:[%s167 + $0x44] sm:$0xf]
      %v314 = vld [vmem:[%s167 + $0x48] sm:$0xf]
      %v315 = vld [vmem:[%s167 + $0x4c] sm:$0xf]
      %v316 = vld [vmem:[%s167 + $0x50] sm:$0xf]
      %v317 = vld [vmem:[%s167 + $0x54] sm:$0xf]
      %v318 = vld [vmem:[%s167 + $0x58] sm:$0xf]
      %v319 = vld [vmem:[%s167 + $0x5c] sm:$0xf]
      %v320 = vld [vmem:[%s167 + $0x60] sm:$0xf]
      %v321 = vld [vmem:[%s167 + $0x64] sm:$0xf]
      %v322 = vld [vmem:[%s167 + $0x68] sm:$0xf]
      %v323 = vld [vmem:[%s167 + $0x6c] sm:$0xf]
      %v324 = vld [vmem:[%s167 + $0x70] sm:$0xf]
      %v325 = vld [vmem:[%s167 + $0x74] sm:$0xf]
      %v326 = vld [vmem:[%s167 + $0x78] sm:$0xf]
      %v327 = vld [vmem:[%s167 + $0x7c] sm:$0xf]
      %vm328 = vsmask.f32 4368
      %vm329 = vmor %vm184, %vm328
      %v331 = vshrl.u32 %v296, 16
      %v333 = vrot.slane %v331, 7
      %v334 = vshll.u32 %v296, 16
      %v336 = vor.u32 %v333, %v334
      %v337 = vrot.slane %v333, 4
      %v339 = vshrl.u32 %v297, 16
      %v341 = vrot.slane %v339, 7
      %v342 = vshll.u32 %v297, 16
      %v344 = vor.u32 %v341, %v342
      %v345 = vsel %vm329, %v337, %v344
      %v346 = vrot.slane %v341, 4
      %v348 = vshrl.u32 %v298, 16
      %v350 = vrot.slane %v348, 7
      %v351 = vshll.u32 %v298, 16
      %v353 = vor.u32 %v350, %v351
      %v354 = vrot.slane %v350, 4
      %v356 = vshrl.u32 %v299, 16
      %v358 = vrot.slane %v356, 7
      %v359 = vshll.u32 %v299, 16
      %v361 = vor.u32 %v358, %v359
      %v362 = vsel %vm329, %v354, %v361
      %v363 = vrot.slane %v358, 4
      %v365 = vshrl.u32 %v300, 16
      %v367 = vrot.slane %v365, 7
      %v368 = vshll.u32 %v300, 16
      %v370 = vor.u32 %v367, %v368
      %v371 = vrot.slane %v367, 4
      %v373 = vshrl.u32 %v301, 16
      %v375 = vrot.slane %v373, 7
      %v376 = vshll.u32 %v301, 16
      %v378 = vor.u32 %v375, %v376
      %v379 = vsel %vm329, %v371, %v378
      %v380 = vrot.slane %v375, 4
      %v382 = vshrl.u32 %v302, 16
      %v384 = vrot.slane %v382, 7
      %v385 = vshll.u32 %v302, 16
      %v387 = vor.u32 %v384, %v385
      %v388 = vrot.slane %v384, 4
      %v390 = vshrl.u32 %v303, 16
      %v392 = vrot.slane %v390, 7
      %v393 = vshll.u32 %v303, 16
      %v395 = vor.u32 %v392, %v393
      %v396 = vsel %vm329, %v388, %v395
      %v397 = vrot.slane %v392, 4
      %v399 = vshrl.u32 %v304, 16
      %v401 = vrot.slane %v399, 7
      %v402 = vshll.u32 %v304, 16
      %v404 = vor.u32 %v401, %v402
      %v405 = vrot.slane %v401, 4
      %v407 = vshrl.u32 %v305, 16
      %v409 = vrot.slane %v407, 7
      %v410 = vshll.u32 %v305, 16
      %v412 = vor.u32 %v409, %v410
      %v413 = vsel %vm329, %v405, %v412
      %v414 = vrot.slane %v409, 4
      %v416 = vshrl.u32 %v306, 16
      %v418 = vrot.slane %v416, 7
      %v419 = vshll.u32 %v306, 16
      %v421 = vor.u32 %v418, %v419
      %v422 = vrot.slane %v418, 4
      %v424 = vshrl.u32 %v307, 16
      %v426 = vrot.slane %v424, 7
      %v427 = vshll.u32 %v307, 16
      %v429 = vor.u32 %v426, %v427
      %v430 = vsel %vm329, %v422, %v429
      %v431 = vrot.slane %v426, 4
      %v433 = vshrl.u32 %v308, 16
      %v435 = vrot.slane %v433, 7
      %v436 = vshll.u32 %v308, 16
      %v438 = vor.u32 %v435, %v436
      %v439 = vrot.slane %v435, 4
      %v441 = vshrl.u32 %v309, 16
      %v443 = vrot.slane %v441, 7
      %v444 = vshll.u32 %v309, 16
      %v446 = vor.u32 %v443, %v444
      %v447 = vsel %vm329, %v439, %v446
      %v448 = vrot.slane %v443, 4
      %v450 = vshrl.u32 %v310, 16
      %v452 = vrot.slane %v450, 7
      %v453 = vshll.u32 %v310, 16
      %v455 = vor.u32 %v452, %v453
      %v456 = vrot.slane %v452, 4
      %v458 = vshrl.u32 %v311, 16
      %v460 = vrot.slane %v458, 7
      %v461 = vshll.u32 %v311, 16
      %v463 = vor.u32 %v460, %v461
      %v464 = vsel %vm329, %v456, %v463
      %v465 = vrot.slane %v460, 4
      %v467 = vshrl.u32 %v312, 16
      %v469 = vrot.slane %v467, 7
      %v470 = vshll.u32 %v312, 16
      %v472 = vor.u32 %v469, %v470
      %v473 = vrot.slane %v469, 4
      %v475 = vshrl.u32 %v313, 16
      %v477 = vrot.slane %v475, 7
      %v478 = vshll.u32 %v313, 16
      %v480 = vor.u32 %v477, %v478
      %v481 = vsel %vm329, %v473, %v480
      %v482 = vrot.slane %v477, 4
      %v484 = vshrl.u32 %v314, 16
      %v486 = vrot.slane %v484, 7
      %v487 = vshll.u32 %v314, 16
      %v489 = vor.u32 %v486, %v487
      %v490 = vrot.slane %v486, 4
      %v492 = vshrl.u32 %v315, 16
      %v494 = vrot.slane %v492, 7
      %v495 = vshll.u32 %v315, 16
      %v497 = vor.u32 %v494, %v495
      %v498 = vsel %vm329, %v490, %v497
      %v499 = vrot.slane %v494, 4
      %v501 = vshrl.u32 %v316, 16
      %v503 = vrot.slane %v501, 7
      %v504 = vshll.u32 %v316, 16
      %v506 = vor.u32 %v503, %v504
      %v507 = vrot.slane %v503, 4
      %v509 = vshrl.u32 %v317, 16
      %v511 = vrot.slane %v509, 7
      %v512 = vshll.u32 %v317, 16
      %v514 = vor.u32 %v511, %v512
      %v515 = vsel %vm329, %v507, %v514
      %v516 = vrot.slane %v511, 4
      %v518 = vshrl.u32 %v318, 16
      %v520 = vrot.slane %v518, 7
      %v521 = vshll.u32 %v318, 16
      %v523 = vor.u32 %v520, %v521
      %v524 = vrot.slane %v520, 4
      %v526 = vshrl.u32 %v319, 16
      %v528 = vrot.slane %v526, 7
      %v529 = vshll.u32 %v319, 16
      %v531 = vor.u32 %v528, %v529
      %v532 = vsel %vm329, %v524, %v531
      %v533 = vrot.slane %v528, 4
      %v535 = vshrl.u32 %v320, 16
      %v537 = vrot.slane %v535, 7
      %v538 = vshll.u32 %v320, 16
      %v540 = vor.u32 %v537, %v538
      %v541 = vrot.slane %v537, 4
      %v543 = vshrl.u32 %v321, 16
      %v545 = vrot.slane %v543, 7
      %v546 = vshll.u32 %v321, 16
      %v548 = vor.u32 %v545, %v546
      %v549 = vsel %vm329, %v541, %v548
      %v550 = vrot.slane %v545, 4
      %v552 = vshrl.u32 %v322, 16
      %v554 = vrot.slane %v552, 7
      %v555 = vshll.u32 %v322, 16
      %v557 = vor.u32 %v554, %v555
      %v558 = vrot.slane %v554, 4
      %v560 = vshrl.u32 %v323, 16
      %v562 = vrot.slane %v560, 7
      %v563 = vshll.u32 %v323, 16
      %v565 = vor.u32 %v562, %v563
      %v566 = vsel %vm329, %v558, %v565
      %v567 = vrot.slane %v562, 4
      %v569 = vshrl.u32 %v324, 16
      %v571 = vrot.slane %v569, 7
      %v572 = vshll.u32 %v324, 16
      %v574 = vor.u32 %v571, %v572
      %v575 = vrot.slane %v571, 4
      %v577 = vshrl.u32 %v325, 16
      %v579 = vrot.slane %v577, 7
      %v580 = vshll.u32 %v325, 16
      %v582 = vor.u32 %v579, %v580
      %v583 = vsel %vm329, %v575, %v582
      %v584 = vrot.slane %v579, 4
      %v586 = vshrl.u32 %v326, 16
      %v588 = vrot.slane %v586, 7
      %v589 = vshll.u32 %v326, 16
      %v591 = vor.u32 %v588, %v589
      %v592 = vrot.slane %v588, 4
      %v594 = vshrl.u32 %v327, 16
      %v596 = vrot.slane %v594, 7
      %v597 = vshll.u32 %v327, 16
      %v599 = vor.u32 %v596, %v597
      %v600 = vsel %vm329, %v592, %v599
      %v601 = vrot.slane %v596, 4
      %s650 = scalar_lea.vmem [#allocation2], 12
      %vm651 = vcmask 3072
      %vm652 = vmand %vm651, %vm240
      %v653 = vld [vmem:[%s650] sm:$0xf]
      %v654 = vsel %vm652, %v336, %v653
      %655 = vst [vmem:[%s650] sm:$0xf] %v654
      %656 = vst.msk [vmem:[%s650 + $0x4] sm:$0xf] %vm174, %v345
      %v657 = vld [vmem:[%s650 + $0x8] sm:$0x1]
      %v658 = vsel %vm185, %v346, %v657
      %659 = vst [vmem:[%s650 + $0x8] sm:$0x1] %v658
      %v660 = vld [vmem:[%s650 + $0xc] sm:$0xf]
      %v661 = vsel %vm652, %v353, %v660
      %662 = vst [vmem:[%s650 + $0xc] sm:$0xf] %v661
      %663 = vst.msk [vmem:[%s650 + $0x10] sm:$0xf] %vm174, %v362
      %v664 = vld [vmem:[%s650 + $0x14] sm:$0x1]
      %v665 = vsel %vm185, %v363, %v664
      %666 = vst [vmem:[%s650 + $0x14] sm:$0x1] %v665
      %v667 = vld [vmem:[%s650 + $0x18] sm:$0xf]
      %v668 = vsel %vm652, %v370, %v667
      %669 = vst [vmem:[%s650 + $0x18] sm:$0xf] %v668
      %670 = vst.msk [vmem:[%s650 + $0x1c] sm:$0xf] %vm174, %v379
      %v671 = vld [vmem:[%s650 + $0x20] sm:$0x1]
      %v672 = vsel %vm185, %v380, %v671
      %673 = vst [vmem:[%s650 + $0x20] sm:$0x1] %v672
      %v674 = vld [vmem:[%s650 + $0x24] sm:$0xf]
      %v675 = vsel %vm652, %v387, %v674
      %676 = vst [vmem:[%s650 + $0x24] sm:$0xf] %v675
      %677 = vst.msk [vmem:[%s650 + $0x28] sm:$0xf] %vm174, %v396
      %v678 = vld [vmem:[%s650 + $0x2c] sm:$0x1]
      %v679 = vsel %vm185, %v397, %v678
      %680 = vst [vmem:[%s650 + $0x2c] sm:$0x1] %v679
      %v681 = vld [vmem:[%s650 + $0x30] sm:$0xf]
      %v682 = vsel %vm652, %v404, %v681
      %683 = vst [vmem:[%s650 + $0x30] sm:$0xf] %v682
      %684 = vst.msk [vmem:[%s650 + $0x34] sm:$0xf] %vm174, %v413
      %v685 = vld [vmem:[%s650 + $0x38] sm:$0x1]
      %v686 = vsel %vm185, %v414, %v685
      %687 = vst [vmem:[%s650 + $0x38] sm:$0x1] %v686
      %v688 = vld [vmem:[%s650 + $0x3c] sm:$0xf]
      %v689 = vsel %vm652, %v421, %v688
      %690 = vst [vmem:[%s650 + $0x3c] sm:$0xf] %v689
      %691 = vst.msk [vmem:[%s650 + $0x40] sm:$0xf] %vm174, %v430
      %v692 = vld [vmem:[%s650 + $0x44] sm:$0x1]
      %v693 = vsel %vm185, %v431, %v692
      %694 = vst [vmem:[%s650 + $0x44] sm:$0x1] %v693
      %v695 = vld [vmem:[%s650 + $0x48] sm:$0xf]
      %v696 = vsel %vm652, %v438, %v695
      %697 = vst [vmem:[%s650 + $0x48] sm:$0xf] %v696
      %698 = vst.msk [vmem:[%s650 + $0x4c] sm:$0xf] %vm174, %v447
      %v699 = vld [vmem:[%s650 + $0x50] sm:$0x1]
      %v700 = vsel %vm185, %v448, %v699
      %701 = vst [vmem:[%s650 + $0x50] sm:$0x1] %v700
      %v702 = vld [vmem:[%s650 + $0x54] sm:$0xf]
      %v703 = vsel %vm652, %v455, %v702
      %704 = vst [vmem:[%s650 + $0x54] sm:$0xf] %v703
      %705 = vst.msk [vmem:[%s650 + $0x58] sm:$0xf] %vm174, %v464
      %v706 = vld [vmem:[%s650 + $0x5c] sm:$0x1]
      %v707 = vsel %vm185, %v465, %v706
      %708 = vst [vmem:[%s650 + $0x5c] sm:$0x1] %v707
      %v709 = vld [vmem:[%s650 + $0x60] sm:$0xf]
      %v710 = vsel %vm652, %v472, %v709
      %711 = vst [vmem:[%s650 + $0x60] sm:$0xf] %v710
      %712 = vst.msk [vmem:[%s650 + $0x64] sm:$0xf] %vm174, %v481
      %v713 = vld [vmem:[%s650 + $0x68] sm:$0x1]
      %v714 = vsel %vm185, %v482, %v713
      %715 = vst [vmem:[%s650 + $0x68] sm:$0x1] %v714
      %v716 = vld [vmem:[%s650 + $0x6c] sm:$0xf]
      %v717 = vsel %vm652, %v489, %v716
      %718 = vst [vmem:[%s650 + $0x6c] sm:$0xf] %v717
      %719 = vst.msk [vmem:[%s650 + $0x70] sm:$0xf] %vm174, %v498
      %v720 = vld [vmem:[%s650 + $0x74] sm:$0x1]
      %v721 = vsel %vm185, %v499, %v720
      %722 = vst [vmem:[%s650 + $0x74] sm:$0x1] %v721
      %v723 = vld [vmem:[%s650 + $0x78] sm:$0xf]
      %v724 = vsel %vm652, %v506, %v723
      %725 = vst [vmem:[%s650 + $0x78] sm:$0xf] %v724
      %726 = vst.msk [vmem:[%s650 + $0x7c] sm:$0xf] %vm174, %v515
      %v727 = vld [vmem:[%s650 + $0x80] sm:$0x1]
      %v728 = vsel %vm185, %v516, %v727
      %729 = vst [vmem:[%s650 + $0x80] sm:$0x1] %v728
      %v730 = vld [vmem:[%s650 + $0x84] sm:$0xf]
      %v731 = vsel %vm652, %v523, %v730
      %732 = vst [vmem:[%s650 + $0x84] sm:$0xf] %v731
      %733 = vst.msk [vmem:[%s650 + $0x88] sm:$0xf] %vm174, %v532
      %v734 = vld [vmem:[%s650 + $0x8c] sm:$0x1]
      %v735 = vsel %vm185, %v533, %v734
      %736 = vst [vmem:[%s650 + $0x8c] sm:$0x1] %v735
      %v737 = vld [vmem:[%s650 + $0x90] sm:$0xf]
      %v738 = vsel %vm652, %v540, %v737
      %739 = vst [vmem:[%s650 + $0x90] sm:$0xf] %v738
      %740 = vst.msk [vmem:[%s650 + $0x94] sm:$0xf] %vm174, %v549
      %v741 = vld [vmem:[%s650 + $0x98] sm:$0x1]
      %v742 = vsel %vm185, %v550, %v741
      %743 = vst [vmem:[%s650 + $0x98] sm:$0x1] %v742
      %v744 = vld [vmem:[%s650 + $0x9c] sm:$0xf]
      %v745 = vsel %vm652, %v557, %v744
      %746 = vst [vmem:[%s650 + $0x9c] sm:$0xf] %v745
      %747 = vst.msk [vmem:[%s650 + $0xa0] sm:$0xf] %vm174, %v566
      %v748 = vld [vmem:[%s650 + $0xa4] sm:$0x1]
      %v749 = vsel %vm185, %v567, %v748
      %750 = vst [vmem:[%s650 + $0xa4] sm:$0x1] %v749
      %v751 = vld [vmem:[%s650 + $0xa8] sm:$0xf]
      %v752 = vsel %vm652, %v574, %v751
      %753 = vst [vmem:[%s650 + $0xa8] sm:$0xf] %v752
      %754 = vst.msk [vmem:[%s650 + $0xac] sm:$0xf] %vm174, %v583
      %v755 = vld [vmem:[%s650 + $0xb0] sm:$0x1]
      %v756 = vsel %vm185, %v584, %v755
      %757 = vst [vmem:[%s650 + $0xb0] sm:$0x1] %v756
      %v758 = vld [vmem:[%s650 + $0xb4] sm:$0xf]
      %v759 = vsel %vm652, %v591, %v758
      %760 = vst [vmem:[%s650 + $0xb4] sm:$0xf] %v759
      %761 = vst.msk [vmem:[%s650 + $0xb8] sm:$0xf] %vm174, %v600
      %v762 = vld [vmem:[%s650 + $0xbc] sm:$0x1]
      %v763 = vsel %vm185, %v601, %v762
      %764 = vst [vmem:[%s650 + $0xbc] sm:$0x1] %v763
      %v765 = vld [vmem:[#allocation2] sm:$0xf]
      %v766 = vld [vmem:[#allocation2 + $0x4] sm:$0xf]
      %v767 = vld [vmem:[#allocation2 + $0xc] sm:$0xf]
      %v768 = vld [vmem:[#allocation2 + $0x10] sm:$0xf]
      %v769 = vld [vmem:[#allocation2 + $0x18] sm:$0xf]
      %v770 = vld [vmem:[#allocation2 + $0x1c] sm:$0xf]
      %v771 = vld [vmem:[#allocation2 + $0x24] sm:$0xf]
      %v772 = vld [vmem:[#allocation2 + $0x28] sm:$0xf]
      %v773 = vld [vmem:[#allocation2 + $0x30] sm:$0xf]
      %v774 = vld [vmem:[#allocation2 + $0x34] sm:$0xf]
      %v775 = vld [vmem:[#allocation2 + $0x3c] sm:$0xf]
      %v776 = vld [vmem:[#allocation2 + $0x40] sm:$0xf]
      %v777 = vld [vmem:[#allocation2 + $0x48] sm:$0xf]
      %v778 = vld [vmem:[#allocation2 + $0x4c] sm:$0xf]
      %v779 = vld [vmem:[#allocation2 + $0x54] sm:$0xf]
      %v780 = vld [vmem:[#allocation2 + $0x58] sm:$0xf]
      %v781 = vld [vmem:[#allocation2 + $0x60] sm:$0xf]
      %v782 = vld [vmem:[#allocation2 + $0x64] sm:$0xf]
      %v783 = vld [vmem:[#allocation2 + $0x6c] sm:$0xf]
      %v784 = vld [vmem:[#allocation2 + $0x70] sm:$0xf]
      %v785 = vld [vmem:[#allocation2 + $0x78] sm:$0xf]
      %v786 = vld [vmem:[#allocation2 + $0x7c] sm:$0xf]
      %v787 = vld [vmem:[#allocation2 + $0x84] sm:$0xf]
      %v788 = vld [vmem:[#allocation2 + $0x88] sm:$0xf]
      %v789 = vld [vmem:[#allocation2 + $0x90] sm:$0xf]
      %v790 = vld [vmem:[#allocation2 + $0x94] sm:$0xf]
      %v791 = vld [vmem:[#allocation2 + $0x9c] sm:$0xf]
      %v792 = vld [vmem:[#allocation2 + $0xa0] sm:$0xf]
      %v793 = vld [vmem:[#allocation2 + $0xa8] sm:$0xf]
      %v794 = vld [vmem:[#allocation2 + $0xac] sm:$0xf]
      %v795 = vld [vmem:[#allocation2 + $0xb4] sm:$0xf]
      %v796 = vld [vmem:[#allocation2 + $0xb8] sm:$0xf]
      %v797 = vld [vmem:[#allocation2 + $0x8] sm:$0x1]
      %v798 = vld [vmem:[#allocation2 + $0x14] sm:$0x1]
      %v799 = vld [vmem:[#allocation2 + $0x20] sm:$0x1]
      %v800 = vld [vmem:[#allocation2 + $0x2c] sm:$0x1]
      %v801 = vld [vmem:[#allocation2 + $0x38] sm:$0x1]
      %v802 = vld [vmem:[#allocation2 + $0x44] sm:$0x1]
      %v803 = vld [vmem:[#allocation2 + $0x50] sm:$0x1]
      %v804 = vld [vmem:[#allocation2 + $0x5c] sm:$0x1]
      %v805 = vld [vmem:[#allocation2 + $0x68] sm:$0x1]
      %v806 = vld [vmem:[#allocation2 + $0x74] sm:$0x1]
      %v807 = vld [vmem:[#allocation2 + $0x80] sm:$0x1]
      %v808 = vld [vmem:[#allocation2 + $0x8c] sm:$0x1]
      %v809 = vld [vmem:[#allocation2 + $0x98] sm:$0x1]
      %v810 = vld [vmem:[#allocation2 + $0xa4] sm:$0x1]
      %v811 = vld [vmem:[#allocation2 + $0xb0] sm:$0x1]
      %v812 = vld [vmem:[#allocation2 + $0xbc] sm:$0x1]
      %v813 = vld [vmem:[#allocation2] sm:$0xe]
      %v814 = vld [vmem:[#allocation2 + $0xc] sm:$0xe]
      %v815 = vld [vmem:[#allocation2 + $0x18] sm:$0xe]
      %v816 = vld [vmem:[#allocation2 + $0x24] sm:$0xe]
      %v817 = vld [vmem:[#allocation2 + $0x30] sm:$0xe]
      %v818 = vld [vmem:[#allocation2 + $0x3c] sm:$0xe]
      %v819 = vld [vmem:[#allocation2 + $0x48] sm:$0xe]
      %v820 = vld [vmem:[#allocation2 + $0x54] sm:$0xe]
      %v821 = vld [vmem:[#allocation2 + $0x60] sm:$0xe]
      %v822 = vld [vmem:[#allocation2 + $0x6c] sm:$0xe]
      %v823 = vld [vmem:[#allocation2 + $0x78] sm:$0xe]
      %v824 = vld [vmem:[#allocation2 + $0x84] sm:$0xe]
      %v825 = vld [vmem:[#allocation2 + $0x90] sm:$0xe]
      %v826 = vld [vmem:[#allocation2 + $0x9c] sm:$0xe]
      %v827 = vld [vmem:[#allocation2 + $0xa8] sm:$0xe]
      %v828 = vld [vmem:[#allocation2 + $0xb4] sm:$0xe]
      %v861 = vunpack.c.l.b16 %v765
      %v862 = vunpack.c.l.b16 %v766
      %v863 = vunpack.c.l.b16 %v767
      %v864 = vunpack.c.l.b16 %v768
      %v865 = vunpack.c.l.b16 %v769
      %v866 = vunpack.c.l.b16 %v770
      %v867 = vunpack.c.l.b16 %v771
      %v868 = vunpack.c.l.b16 %v772
      %v869 = vunpack.c.l.b16 %v773
      %v870 = vunpack.c.l.b16 %v774
      %v871 = vunpack.c.l.b16 %v775
      %v872 = vunpack.c.l.b16 %v776
      %v873 = vunpack.c.l.b16 %v777
      %v874 = vunpack.c.l.b16 %v778
      %v875 = vunpack.c.l.b16 %v779
      %v876 = vunpack.c.l.b16 %v780
      %v877 = vunpack.c.l.b16 %v781
      %v878 = vunpack.c.l.b16 %v782
      %v879 = vunpack.c.l.b16 %v783
      %v880 = vunpack.c.l.b16 %v784
      %v881 = vunpack.c.l.b16 %v785
      %v882 = vunpack.c.l.b16 %v786
      %v883 = vunpack.c.l.b16 %v787
      %v884 = vunpack.c.l.b16 %v788
      %v885 = vunpack.c.l.b16 %v789
      %v886 = vunpack.c.l.b16 %v790
      %v887 = vunpack.c.l.b16 %v791
      %v888 = vunpack.c.l.b16 %v792
      %v889 = vunpack.c.l.b16 %v793
      %v890 = vunpack.c.l.b16 %v794
      %v891 = vunpack.c.l.b16 %v795
      %v892 = vunpack.c.l.b16 %v796
      %v893 = vpack.c.b16 %v862, %v861
      %v894 = vpack.c.b16 %v864, %v863
      %v895 = vpack.c.b16 %v866, %v865
      %v896 = vpack.c.b16 %v868, %v867
      %v897 = vpack.c.b16 %v870, %v869
      %v898 = vpack.c.b16 %v872, %v871
      %v899 = vpack.c.b16 %v874, %v873
      %v900 = vpack.c.b16 %v876, %v875
      %v901 = vpack.c.b16 %v878, %v877
      %v902 = vpack.c.b16 %v880, %v879
      %v903 = vpack.c.b16 %v882, %v881
      %v904 = vpack.c.b16 %v884, %v883
      %v905 = vpack.c.b16 %v886, %v885
      %v906 = vpack.c.b16 %v888, %v887
      %v907 = vpack.c.b16 %v890, %v889
      %v908 = vpack.c.b16 %v892, %v891
      %v925 = vunpack.c.l.b16 %v797
      %v926 = vunpack.c.l.b16 %v798
      %v927 = vunpack.c.l.b16 %v799
      %v928 = vunpack.c.l.b16 %v800
      %v929 = vunpack.c.l.b16 %v801
      %v930 = vunpack.c.l.b16 %v802
      %v931 = vunpack.c.l.b16 %v803
      %v932 = vunpack.c.l.b16 %v804
      %v933 = vunpack.c.l.b16 %v805
      %v934 = vunpack.c.l.b16 %v806
      %v935 = vunpack.c.l.b16 %v807
      %v936 = vunpack.c.l.b16 %v808
      %v937 = vunpack.c.l.b16 %v809
      %v938 = vunpack.c.l.b16 %v810
      %v939 = vunpack.c.l.b16 %v811
      %v940 = vunpack.c.l.b16 %v812
      %v941 = vpack.c.b16 %v925, %v925
      %v942 = vpack.c.b16 %v926, %v926
      %v943 = vpack.c.b16 %v927, %v927
      %v944 = vpack.c.b16 %v928, %v928
      %v945 = vpack.c.b16 %v929, %v929
      %v946 = vpack.c.b16 %v930, %v930
      %v947 = vpack.c.b16 %v931, %v931
      %v948 = vpack.c.b16 %v932, %v932
      %v949 = vpack.c.b16 %v933, %v933
      %v950 = vpack.c.b16 %v934, %v934
      %v951 = vpack.c.b16 %v935, %v935
      %v952 = vpack.c.b16 %v936, %v936
      %v953 = vpack.c.b16 %v937, %v937
      %v954 = vpack.c.b16 %v938, %v938
      %v955 = vpack.c.b16 %v939, %v939
      %v956 = vpack.c.b16 %v940, %v940
      %vm957 = vsmask.f32 7424
      %v959 = vshrl.u32 %v893, 16
      %v961 = vshll.u32 %v893, 16
      %v963 = vrot.slane %v961, 1
      %v964 = vor.u32 %v959, %v963
      %v966 = vshll.u32 %v941, 16
      %v968 = vrot.slane %v966, 1
      %v969 = vsel %vm957, %v964, %v968
      %v971 = vshrl.u32 %v894, 16
      %v973 = vshll.u32 %v894, 16
      %v975 = vrot.slane %v973, 1
      %v976 = vor.u32 %v971, %v975
      %v978 = vshll.u32 %v942, 16
      %v980 = vrot.slane %v978, 1
      %v981 = vsel %vm957, %v976, %v980
      %v983 = vshrl.u32 %v895, 16
      %v985 = vshll.u32 %v895, 16
      %v987 = vrot.slane %v985, 1
      %v988 = vor.u32 %v983, %v987
      %v990 = vshll.u32 %v943, 16
      %v992 = vrot.slane %v990, 1
      %v993 = vsel %vm957, %v988, %v992
      %v995 = vshrl.u32 %v896, 16
      %v997 = vshll.u32 %v896, 16
      %v999 = vrot.slane %v997, 1
      %v1000 = vor.u32 %v995, %v999
      %v1002 = vshll.u32 %v944, 16
      %v1004 = vrot.slane %v1002, 1
      %v1005 = vsel %vm957, %v1000, %v1004
      %v1007 = vshrl.u32 %v897, 16
      %v1009 = vshll.u32 %v897, 16
      %v1011 = vrot.slane %v1009, 1
      %v1012 = vor.u32 %v1007, %v1011
      %v1014 = vshll.u32 %v945, 16
      %v1016 = vrot.slane %v1014, 1
      %v1017 = vsel %vm957, %v1012, %v1016
      %v1019 = vshrl.u32 %v898, 16
      %v1021 = vshll.u32 %v898, 16
      %v1023 = vrot.slane %v1021, 1
      %v1024 = vor.u32 %v1019, %v1023
      %v1026 = vshll.u32 %v946, 16
      %v1028 = vrot.slane %v1026, 1
      %v1029 = vsel %vm957, %v1024, %v1028
      %v1031 = vshrl.u32 %v899, 16
      %v1033 = vshll.u32 %v899, 16
      %v1035 = vrot.slane %v1033, 1
      %v1036 = vor.u32 %v1031, %v1035
      %v1038 = vshll.u32 %v947, 16
      %v1040 = vrot.slane %v1038, 1
      %v1041 = vsel %vm957, %v1036, %v1040
      %v1043 = vshrl.u32 %v900, 16
      %v1045 = vshll.u32 %v900, 16
      %v1047 = vrot.slane %v1045, 1
      %v1048 = vor.u32 %v1043, %v1047
      %v1050 = vshll.u32 %v948, 16
      %v1052 = vrot.slane %v1050, 1
      %v1053 = vsel %vm957, %v1048, %v1052
      %v1055 = vshrl.u32 %v901, 16
      %v1057 = vshll.u32 %v901, 16
      %v1059 = vrot.slane %v1057, 1
      %v1060 = vor.u32 %v1055, %v1059
      %v1062 = vshll.u32 %v949, 16
      %v1064 = vrot.slane %v1062, 1
      %v1065 = vsel %vm957, %v1060, %v1064
      %v1067 = vshrl.u32 %v902, 16
      %v1069 = vshll.u32 %v902, 16
      %v1071 = vrot.slane %v1069, 1
      %v1072 = vor.u32 %v1067, %v1071
      %v1074 = vshll.u32 %v950, 16
      %v1076 = vrot.slane %v1074, 1
      %v1077 = vsel %vm957, %v1072, %v1076
      %v1079 = vshrl.u32 %v903, 16
      %v1081 = vshll.u32 %v903, 16
      %v1083 = vrot.slane %v1081, 1
      %v1084 = vor.u32 %v1079, %v1083
      %v1086 = vshll.u32 %v951, 16
      %v1088 = vrot.slane %v1086, 1
      %v1089 = vsel %vm957, %v1084, %v1088
      %v1091 = vshrl.u32 %v904, 16
      %v1093 = vshll.u32 %v904, 16
      %v1095 = vrot.slane %v1093, 1
      %v1096 = vor.u32 %v1091, %v1095
      %v1098 = vshll.u32 %v952, 16
      %v1100 = vrot.slane %v1098, 1
      %v1101 = vsel %vm957, %v1096, %v1100
      %v1103 = vshrl.u32 %v905, 16
      %v1105 = vshll.u32 %v905, 16
      %v1107 = vrot.slane %v1105, 1
      %v1108 = vor.u32 %v1103, %v1107
      %v1110 = vshll.u32 %v953, 16
      %v1112 = vrot.slane %v1110, 1
      %v1113 = vsel %vm957, %v1108, %v1112
      %v1115 = vshrl.u32 %v906, 16
      %v1117 = vshll.u32 %v906, 16
      %v1119 = vrot.slane %v1117, 1
      %v1120 = vor.u32 %v1115, %v1119
      %v1122 = vshll.u32 %v954, 16
      %v1124 = vrot.slane %v1122, 1
      %v1125 = vsel %vm957, %v1120, %v1124
      %v1127 = vshrl.u32 %v907, 16
      %v1129 = vshll.u32 %v907, 16
      %v1131 = vrot.slane %v1129, 1
      %v1132 = vor.u32 %v1127, %v1131
      %v1134 = vshll.u32 %v955, 16
      %v1136 = vrot.slane %v1134, 1
      %v1137 = vsel %vm957, %v1132, %v1136
      %v1139 = vshrl.u32 %v908, 16
      %v1141 = vshll.u32 %v908, 16
      %v1143 = vrot.slane %v1141, 1
      %v1144 = vor.u32 %v1139, %v1143
      %v1146 = vshll.u32 %v956, 16
      %v1148 = vrot.slane %v1146, 1
      %v1149 = vsel %vm957, %v1144, %v1148
      %1150 = vrot.lane.b32.xlu0 %v969, 1
      %v1151 = vpop.permute.xlu0 %1150
      %1152 = vrot.lane.b32.xlu0 %v981, 1
      %v1153 = vpop.permute.xlu0 %1152
      %1154 = vrot.lane.b32.xlu0 %v993, 1
      %v1155 = vpop.permute.xlu0 %1154
      %1156 = vrot.lane.b32.xlu0 %v1005, 1
      %v1157 = vpop.permute.xlu0 %1156
      %1158 = vrot.lane.b32.xlu0 %v1017, 1
      %v1159 = vpop.permute.xlu0 %1158
      %1160 = vrot.lane.b32.xlu0 %v1029, 1
      %v1161 = vpop.permute.xlu0 %1160
      %1162 = vrot.lane.b32.xlu0 %v1041, 1
      %v1163 = vpop.permute.xlu0 %1162
      %1164 = vrot.lane.b32.xlu0 %v1053, 1
      %v1165 = vpop.permute.xlu0 %1164
      %1166 = vrot.lane.b32.xlu0 %v1065, 1
      %v1167 = vpop.permute.xlu0 %1166
      %1168 = vrot.lane.b32.xlu0 %v1077, 1
      %v1169 = vpop.permute.xlu0 %1168
      %1170 = vrot.lane.b32.xlu0 %v1089, 1
      %v1171 = vpop.permute.xlu0 %1170
      %1172 = vrot.lane.b32.xlu0 %v1101, 1
      %v1173 = vpop.permute.xlu0 %1172
      %1174 = vrot.lane.b32.xlu0 %v1113, 1
      %v1175 = vpop.permute.xlu0 %1174
      %1176 = vrot.lane.b32.xlu0 %v1125, 1
      %v1177 = vpop.permute.xlu0 %1176
      %1178 = vrot.lane.b32.xlu0 %v1137, 1
      %v1179 = vpop.permute.xlu0 %1178
      %1180 = vrot.lane.b32.xlu0 %v1149, 1
      %v1181 = vpop.permute.xlu0 %1180
      %v1198 = vunpack.c.l.b16 %v813
      %v1199 = vunpack.c.l.b16 %v814
      %v1200 = vunpack.c.l.b16 %v815
      %v1201 = vunpack.c.l.b16 %v816
      %v1202 = vunpack.c.l.b16 %v817
      %v1203 = vunpack.c.l.b16 %v818
      %v1204 = vunpack.c.l.b16 %v819
      %v1205 = vunpack.c.l.b16 %v820
      %v1206 = vunpack.c.l.b16 %v821
      %v1207 = vunpack.c.l.b16 %v822
      %v1208 = vunpack.c.l.b16 %v823
      %v1209 = vunpack.c.l.b16 %v824
      %v1210 = vunpack.c.l.b16 %v825
      %v1211 = vunpack.c.l.b16 %v826
      %v1212 = vunpack.c.l.b16 %v827
      %v1213 = vunpack.c.l.b16 %v828
      %v1214 = vpack.c.b16 %v862, %v1198
      %v1215 = vpack.c.b16 %v864, %v1199
      %v1216 = vpack.c.b16 %v866, %v1200
      %v1217 = vpack.c.b16 %v868, %v1201
      %v1218 = vpack.c.b16 %v870, %v1202
      %v1219 = vpack.c.b16 %v872, %v1203
      %v1220 = vpack.c.b16 %v874, %v1204
      %v1221 = vpack.c.b16 %v876, %v1205
      %v1222 = vpack.c.b16 %v878, %v1206
      %v1223 = vpack.c.b16 %v880, %v1207
      %v1224 = vpack.c.b16 %v882, %v1208
      %v1225 = vpack.c.b16 %v884, %v1209
      %v1226 = vpack.c.b16 %v886, %v1210
      %v1227 = vpack.c.b16 %v888, %v1211
      %v1228 = vpack.c.b16 %v890, %v1212
      %v1229 = vpack.c.b16 %v892, %v1213
      %vm1230 = vcmask 1046528
      %v1231 = vrot.slane %v1214, 1
      %v1232 = vrot.slane %v941, 1
      %v1233 = vsel %vm1230, %v1231, %v1232
      %v1234 = vrot.slane %v1215, 1
      %v1235 = vrot.slane %v942, 1
      %v1236 = vsel %vm1230, %v1234, %v1235
      %v1237 = vrot.slane %v1216, 1
      %v1238 = vrot.slane %v943, 1
      %v1239 = vsel %vm1230, %v1237, %v1238
      %v1240 = vrot.slane %v1217, 1
      %v1241 = vrot.slane %v944, 1
      %v1242 = vsel %vm1230, %v1240, %v1241
      %v1243 = vrot.slane %v1218, 1
      %v1244 = vrot.slane %v945, 1
      %v1245 = vsel %vm1230, %v1243, %v1244
      %v1246 = vrot.slane %v1219, 1
      %v1247 = vrot.slane %v946, 1
      %v1248 = vsel %vm1230, %v1246, %v1247
      %v1249 = vrot.slane %v1220, 1
      %v1250 = vrot.slane %v947, 1
      %v1251 = vsel %vm1230, %v1249, %v1250
      %v1252 = vrot.slane %v1221, 1
      %v1253 = vrot.slane %v948, 1
      %v1254 = vsel %vm1230, %v1252, %v1253
      %v1255 = vrot.slane %v1222, 1
      %v1256 = vrot.slane %v949, 1
      %v1257 = vsel %vm1230, %v1255, %v1256
      %v1258 = vrot.slane %v1223, 1
      %v1259 = vrot.slane %v950, 1
      %v1260 = vsel %vm1230, %v1258, %v1259
      %v1261 = vrot.slane %v1224, 1
      %v1262 = vrot.slane %v951, 1
      %v1263 = vsel %vm1230, %v1261, %v1262
      %v1264 = vrot.slane %v1225, 1
      %v1265 = vrot.slane %v952, 1
      %v1266 = vsel %vm1230, %v1264, %v1265
      %v1267 = vrot.slane %v1226, 1
      %v1268 = vrot.slane %v953, 1
      %v1269 = vsel %vm1230, %v1267, %v1268
      %v1270 = vrot.slane %v1227, 1
      %v1271 = vrot.slane %v954, 1
      %v1272 = vsel %vm1230, %v1270, %v1271
      %v1273 = vrot.slane %v1228, 1
      %v1274 = vrot.slane %v955, 1
      %v1275 = vsel %vm1230, %v1273, %v1274
      %v1276 = vrot.slane %v1229, 1
      %v1277 = vrot.slane %v956, 1
      %v1278 = vsel %vm1230, %v1276, %v1277
      %1279 = vrot.lane.b32.xlu0 %v1233, 2
      %v1280 = vpop.permute.xlu0 %1279
      %1281 = vrot.lane.b32.xlu0 %v1236, 2
      %v1282 = vpop.permute.xlu0 %1281
      %1283 = vrot.lane.b32.xlu0 %v1239, 2
      %v1284 = vpop.permute.xlu0 %1283
      %1285 = vrot.lane.b32.xlu0 %v1242, 2
      %v1286 = vpop.permute.xlu0 %1285
      %1287 = vrot.lane.b32.xlu0 %v1245, 2
      %v1288 = vpop.permute.xlu0 %1287
      %1289 = vrot.lane.b32.xlu0 %v1248, 2
      %v1290 = vpop.permute.xlu0 %1289
      %1291 = vrot.lane.b32.xlu0 %v1251, 2
      %v1292 = vpop.permute.xlu0 %1291
      %1293 = vrot.lane.b32.xlu0 %v1254, 2
      %v1294 = vpop.permute.xlu0 %1293
      %1295 = vrot.lane.b32.xlu0 %v1257, 2
      %v1296 = vpop.permute.xlu0 %1295
      %1297 = vrot.lane.b32.xlu0 %v1260, 2
      %v1298 = vpop.permute.xlu0 %1297
      %1299 = vrot.lane.b32.xlu0 %v1263, 2
      %v1300 = vpop.permute.xlu0 %1299
      %1301 = vrot.lane.b32.xlu0 %v1266, 2
      %v1302 = vpop.permute.xlu0 %1301
      %1303 = vrot.lane.b32.xlu0 %v1269, 2
      %v1304 = vpop.permute.xlu0 %1303
      %1305 = vrot.lane.b32.xlu0 %v1272, 2
      %v1306 = vpop.permute.xlu0 %1305
      %1307 = vrot.lane.b32.xlu0 %v1275, 2
      %v1308 = vpop.permute.xlu0 %1307
      %1309 = vrot.lane.b32.xlu0 %v1278, 2
      %v1310 = vpop.permute.xlu0 %1309
      %vm1311 = vcmask 7168
      %v1313 = vsel %vm1311, %v893, %v1151
      %v1315 = vsel %vm1311, %v894, %v1153
      %v1317 = vsel %vm1311, %v895, %v1155
      %v1319 = vsel %vm1311, %v896, %v1157
      %v1321 = vsel %vm1311, %v897, %v1159
      %v1323 = vsel %vm1311, %v898, %v1161
      %v1325 = vsel %vm1311, %v899, %v1163
      %v1327 = vsel %vm1311, %v900, %v1165
      %v1329 = vsel %vm1311, %v901, %v1167
      %v1331 = vsel %vm1311, %v902, %v1169
      %v1333 = vsel %vm1311, %v903, %v1171
      %v1335 = vsel %vm1311, %v904, %v1173
      %v1337 = vsel %vm1311, %v905, %v1175
      %v1339 = vsel %vm1311, %v906, %v1177
      %v1341 = vsel %vm1311, %v907, %v1179
      %v1343 = vsel %vm1311, %v908, %v1181
      %vm1344 = vcmask 15360
      %v1346 = vsel %vm1344, %v1313, %v1280
      %v1348 = vsel %vm1344, %v1315, %v1282
      %v1350 = vsel %vm1344, %v1317, %v1284
      %v1352 = vsel %vm1344, %v1319, %v1286
      %v1354 = vsel %vm1344, %v1321, %v1288
      %v1356 = vsel %vm1344, %v1323, %v1290
      %v1358 = vsel %vm1344, %v1325, %v1292
      %v1360 = vsel %vm1344, %v1327, %v1294
      %v1362 = vsel %vm1344, %v1329, %v1296
      %v1364 = vsel %vm1344, %v1331, %v1298
      %v1366 = vsel %vm1344, %v1333, %v1300
      %v1368 = vsel %vm1344, %v1335, %v1302
      %v1370 = vsel %vm1344, %v1337, %v1304
      %v1372 = vsel %vm1344, %v1339, %v1306
      %v1374 = vsel %vm1344, %v1341, %v1308
      %v1376 = vsel %vm1344, %v1343, %v1310
      %v1377 = vld [vmem:[%s1] sm:$0x3]
      %v1378 = vld [vmem:[%s650] sm:$0xf]
      %v1379 = vld [vmem:[%s650 + $0x4] sm:$0xf]
      %v1380 = vld [vmem:[%s650 + $0xc] sm:$0xf]
      %v1381 = vld [vmem:[%s650 + $0x10] sm:$0xf]
      %v1382 = vld [vmem:[%s650 + $0x18] sm:$0xf]
      %v1383 = vld [vmem:[%s650 + $0x1c] sm:$0xf]
      %v1384 = vld [vmem:[%s650 + $0x24] sm:$0xf]
      %v1385 = vld [vmem:[%s650 + $0x28] sm:$0xf]
      %v1386 = vld [vmem:[%s650 + $0x30] sm:$0xf]
      %v1387 = vld [vmem:[%s650 + $0x34] sm:$0xf]
      %v1388 = vld [vmem:[%s650 + $0x3c] sm:$0xf]
      %v1389 = vld [vmem:[%s650 + $0x40] sm:$0xf]
      %v1390 = vld [vmem:[%s650 + $0x48] sm:$0xf]
      %v1391 = vld [vmem:[%s650 + $0x4c] sm:$0xf]
      %v1392 = vld [vmem:[%s650 + $0x54] sm:$0xf]
      %v1393 = vld [vmem:[%s650 + $0x58] sm:$0xf]
      %v1394 = vld [vmem:[%s650 + $0x60] sm:$0xf]
      %v1395 = vld [vmem:[%s650 + $0x64] sm:$0xf]
      %v1396 = vld [vmem:[%s650 + $0x6c] sm:$0xf]
      %v1397 = vld [vmem:[%s650 + $0x70] sm:$0xf]
      %v1398 = vld [vmem:[%s650 + $0x78] sm:$0xf]
      %v1399 = vld [vmem:[%s650 + $0x7c] sm:$0xf]
      %v1400 = vld [vmem:[%s650 + $0x84] sm:$0xf]
      %v1401 = vld [vmem:[%s650 + $0x88] sm:$0xf]
      %v1402 = vld [vmem:[%s650 + $0x90] sm:$0xf]
      %v1403 = vld [vmem:[%s650 + $0x94] sm:$0xf]
      %v1404 = vld [vmem:[%s650 + $0x9c] sm:$0xf]
      %v1405 = vld [vmem:[%s650 + $0xa0] sm:$0xf]
      %v1406 = vld [vmem:[%s650 + $0xa8] sm:$0xf]
      %v1407 = vld [vmem:[%s650 + $0xac] sm:$0xf]
      %v1408 = vld [vmem:[%s650 + $0xb4] sm:$0xf]
      %v1409 = vld [vmem:[%s650 + $0xb8] sm:$0xf]
      %v1410 = vld [vmem:[%s650 + $0x8] sm:$0x1]
      %v1411 = vld [vmem:[%s650 + $0x14] sm:$0x1]
      %v1412 = vld [vmem:[%s650 + $0x20] sm:$0x1]
      %v1413 = vld [vmem:[%s650 + $0x2c] sm:$0x1]
      %v1414 = vld [vmem:[%s650 + $0x38] sm:$0x1]
      %v1415 = vld [vmem:[%s650 + $0x44] sm:$0x1]
      %v1416 = vld [vmem:[%s650 + $0x50] sm:$0x1]
      %v1417 = vld [vmem:[%s650 + $0x5c] sm:$0x1]
      %v1418 = vld [vmem:[%s650 + $0x68] sm:$0x1]
      %v1419 = vld [vmem:[%s650 + $0x74] sm:$0x1]
      %v1420 = vld [vmem:[%s650 + $0x80] sm:$0x1]
      %v1421 = vld [vmem:[%s650 + $0x8c] sm:$0x1]
      %v1422 = vld [vmem:[%s650 + $0x98] sm:$0x1]
      %v1423 = vld [vmem:[%s650 + $0xa4] sm:$0x1]
      %v1424 = vld [vmem:[%s650 + $0xb0] sm:$0x1]
      %v1425 = vld [vmem:[%s650 + $0xbc] sm:$0x1]
      %v1426 = vld [vmem:[%s650] sm:$0xe]
      %v1427 = vld [vmem:[%s650 + $0xc] sm:$0xe]
      %v1428 = vld [vmem:[%s650 + $0x18] sm:$0xe]
      %v1429 = vld [vmem:[%s650 + $0x24] sm:$0xe]
      %v1430 = vld [vmem:[%s650 + $0x30] sm:$0xe]
      %v1431 = vld [vmem:[%s650 + $0x3c] sm:$0xe]
      %v1432 = vld [vmem:[%s650 + $0x48] sm:$0xe]
      %v1433 = vld [vmem:[%s650 + $0x54] sm:$0xe]
      %v1434 = vld [vmem:[%s650 + $0x60] sm:$0xe]
      %v1435 = vld [vmem:[%s650 + $0x6c] sm:$0xe]
      %v1436 = vld [vmem:[%s650 + $0x78] sm:$0xe]
      %v1437 = vld [vmem:[%s650 + $0x84] sm:$0xe]
      %v1438 = vld [vmem:[%s650 + $0x90] sm:$0xe]
      %v1439 = vld [vmem:[%s650 + $0x9c] sm:$0xe]
      %v1440 = vld [vmem:[%s650 + $0xa8] sm:$0xe]
      %v1441 = vld [vmem:[%s650 + $0xb4] sm:$0xe]
      %v1474 = vunpack.c.l.b16 %v1378
      %v1475 = vunpack.c.l.b16 %v1379
      %v1476 = vunpack.c.l.b16 %v1380
      %v1477 = vunpack.c.l.b16 %v1381
      %v1478 = vunpack.c.l.b16 %v1382
      %v1479 = vunpack.c.l.b16 %v1383
      %v1480 = vunpack.c.l.b16 %v1384
      %v1481 = vunpack.c.l.b16 %v1385
      %v1482 = vunpack.c.l.b16 %v1386
      %v1483 = vunpack.c.l.b16 %v1387
      %v1484 = vunpack.c.l.b16 %v1388
      %v1485 = vunpack.c.l.b16 %v1389
      %v1486 = vunpack.c.l.b16 %v1390
      %v1487 = vunpack.c.l.b16 %v1391
      %v1488 = vunpack.c.l.b16 %v1392
      %v1489 = vunpack.c.l.b16 %v1393
      %v1490 = vunpack.c.l.b16 %v1394
      %v1491 = vunpack.c.l.b16 %v1395
      %v1492 = vunpack.c.l.b16 %v1396
      %v1493 = vunpack.c.l.b16 %v1397
      %v1494 = vunpack.c.l.b16 %v1398
      %v1495 = vunpack.c.l.b16 %v1399
      %v1496 = vunpack.c.l.b16 %v1400
      %v1497 = vunpack.c.l.b16 %v1401
      %v1498 = vunpack.c.l.b16 %v1402
      %v1499 = vunpack.c.l.b16 %v1403
      %v1500 = vunpack.c.l.b16 %v1404
      %v1501 = vunpack.c.l.b16 %v1405
      %v1502 = vunpack.c.l.b16 %v1406
      %v1503 = vunpack.c.l.b16 %v1407
      %v1504 = vunpack.c.l.b16 %v1408
      %v1505 = vunpack.c.l.b16 %v1409
      %v1506 = vpack.c.b16 %v1475, %v1474
      %v1507 = vpack.c.b16 %v1477, %v1476
      %v1508 = vpack.c.b16 %v1479, %v1478
      %v1509 = vpack.c.b16 %v1481, %v1480
      %v1510 = vpack.c.b16 %v1483, %v1482
      %v1511 = vpack.c.b16 %v1485, %v1484
      %v1512 = vpack.c.b16 %v1487, %v1486
      %v1513 = vpack.c.b16 %v1489, %v1488
      %v1514 = vpack.c.b16 %v1491, %v1490
      %v1515 = vpack.c.b16 %v1493, %v1492
      %v1516 = vpack.c.b16 %v1495, %v1494
      %v1517 = vpack.c.b16 %v1497, %v1496
      %v1518 = vpack.c.b16 %v1499, %v1498
      %v1519 = vpack.c.b16 %v1501, %v1500
      %v1520 = vpack.c.b16 %v1503, %v1502
      %v1521 = vpack.c.b16 %v1505, %v1504
      %v1538 = vunpack.c.l.b16 %v1410
      %v1539 = vunpack.c.l.b16 %v1411
      %v1540 = vunpack.c.l.b16 %v1412
      %v1541 = vunpack.c.l.b16 %v1413
      %v1542 = vunpack.c.l.b16 %v1414
      %v1543 = vunpack.c.l.b16 %v1415
      %v1544 = vunpack.c.l.b16 %v1416
      %v1545 = vunpack.c.l.b16 %v1417
      %v1546 = vunpack.c.l.b16 %v1418
      %v1547 = vunpack.c.l.b16 %v1419
      %v1548 = vunpack.c.l.b16 %v1420
      %v1549 = vunpack.c.l.b16 %v1421
      %v1550 = vunpack.c.l.b16 %v1422
      %v1551 = vunpack.c.l.b16 %v1423
      %v1552 = vunpack.c.l.b16 %v1424
      %v1553 = vunpack.c.l.b16 %v1425
      %v1554 = vpack.c.b16 %v1538, %v1538
      %v1555 = vpack.c.b16 %v1539, %v1539
      %v1556 = vpack.c.b16 %v1540, %v1540
      %v1557 = vpack.c.b16 %v1541, %v1541
      %v1558 = vpack.c.b16 %v1542, %v1542
      %v1559 = vpack.c.b16 %v1543, %v1543
      %v1560 = vpack.c.b16 %v1544, %v1544
      %v1561 = vpack.c.b16 %v1545, %v1545
      %v1562 = vpack.c.b16 %v1546, %v1546
      %v1563 = vpack.c.b16 %v1547, %v1547
      %v1564 = vpack.c.b16 %v1548, %v1548
      %v1565 = vpack.c.b16 %v1549, %v1549
      %v1566 = vpack.c.b16 %v1550, %v1550
      %v1567 = vpack.c.b16 %v1551, %v1551
      %v1568 = vpack.c.b16 %v1552, %v1552
      %v1569 = vpack.c.b16 %v1553, %v1553
      %v1571 = vshrl.u32 %v1506, 16
      %v1573 = vshll.u32 %v1506, 16
      %v1575 = vrot.slane %v1573, 1
      %v1576 = vor.u32 %v1571, %v1575
      %v1578 = vshll.u32 %v1554, 16
      %v1580 = vrot.slane %v1578, 1
      %v1581 = vsel %vm957, %v1576, %v1580
      %v1583 = vshrl.u32 %v1507, 16
      %v1585 = vshll.u32 %v1507, 16
      %v1587 = vrot.slane %v1585, 1
      %v1588 = vor.u32 %v1583, %v1587
      %v1590 = vshll.u32 %v1555, 16
      %v1592 = vrot.slane %v1590, 1
      %v1593 = vsel %vm957, %v1588, %v1592
      %v1595 = vshrl.u32 %v1508, 16
      %v1597 = vshll.u32 %v1508, 16
      %v1599 = vrot.slane %v1597, 1
      %v1600 = vor.u32 %v1595, %v1599
      %v1602 = vshll.u32 %v1556, 16
      %v1604 = vrot.slane %v1602, 1
      %v1605 = vsel %vm957, %v1600, %v1604
      %v1607 = vshrl.u32 %v1509, 16
      %v1609 = vshll.u32 %v1509, 16
      %v1611 = vrot.slane %v1609, 1
      %v1612 = vor.u32 %v1607, %v1611
      %v1614 = vshll.u32 %v1557, 16
      %v1616 = vrot.slane %v1614, 1
      %v1617 = vsel %vm957, %v1612, %v1616
      %v1619 = vshrl.u32 %v1510, 16
      %v1621 = vshll.u32 %v1510, 16
      %v1623 = vrot.slane %v1621, 1
      %v1624 = vor.u32 %v1619, %v1623
      %v1626 = vshll.u32 %v1558, 16
      %v1628 = vrot.slane %v1626, 1
      %v1629 = vsel %vm957, %v1624, %v1628
      %v1631 = vshrl.u32 %v1511, 16
      %v1633 = vshll.u32 %v1511, 16
      %v1635 = vrot.slane %v1633, 1
      %v1636 = vor.u32 %v1631, %v1635
      %v1638 = vshll.u32 %v1559, 16
      %v1640 = vrot.slane %v1638, 1
      %v1641 = vsel %vm957, %v1636, %v1640
      %v1643 = vshrl.u32 %v1512, 16
      %v1645 = vshll.u32 %v1512, 16
      %v1647 = vrot.slane %v1645, 1
      %v1648 = vor.u32 %v1643, %v1647
      %v1650 = vshll.u32 %v1560, 16
      %v1652 = vrot.slane %v1650, 1
      %v1653 = vsel %vm957, %v1648, %v1652
      %v1655 = vshrl.u32 %v1513, 16
      %v1657 = vshll.u32 %v1513, 16
      %v1659 = vrot.slane %v1657, 1
      %v1660 = vor.u32 %v1655, %v1659
      %v1662 = vshll.u32 %v1561, 16
      %v1664 = vrot.slane %v1662, 1
      %v1665 = vsel %vm957, %v1660, %v1664
      %v1667 = vshrl.u32 %v1514, 16
      %v1669 = vshll.u32 %v1514, 16
      %v1671 = vrot.slane %v1669, 1
      %v1672 = vor.u32 %v1667, %v1671
      %v1674 = vshll.u32 %v1562, 16
      %v1676 = vrot.slane %v1674, 1
      %v1677 = vsel %vm957, %v1672, %v1676
      %v1679 = vshrl.u32 %v1515, 16
      %v1681 = vshll.u32 %v1515, 16
      %v1683 = vrot.slane %v1681, 1
      %v1684 = vor.u32 %v1679, %v1683
      %v1686 = vshll.u32 %v1563, 16
      %v1688 = vrot.slane %v1686, 1
      %v1689 = vsel %vm957, %v1684, %v1688
      %v1691 = vshrl.u32 %v1516, 16
      %v1693 = vshll.u32 %v1516, 16
      %v1695 = vrot.slane %v1693, 1
      %v1696 = vor.u32 %v1691, %v1695
      %v1698 = vshll.u32 %v1564, 16
      %v1700 = vrot.slane %v1698, 1
      %v1701 = vsel %vm957, %v1696, %v1700
      %v1703 = vshrl.u32 %v1517, 16
      %v1705 = vshll.u32 %v1517, 16
      %v1707 = vrot.slane %v1705, 1
      %v1708 = vor.u32 %v1703, %v1707
      %v1710 = vshll.u32 %v1565, 16
      %v1712 = vrot.slane %v1710, 1
      %v1713 = vsel %vm957, %v1708, %v1712
      %v1715 = vshrl.u32 %v1518, 16
      %v1717 = vshll.u32 %v1518, 16
      %v1719 = vrot.slane %v1717, 1
      %v1720 = vor.u32 %v1715, %v1719
      %v1722 = vshll.u32 %v1566, 16
      %v1724 = vrot.slane %v1722, 1
      %v1725 = vsel %vm957, %v1720, %v1724
      %v1727 = vshrl.u32 %v1519, 16
      %v1729 = vshll.u32 %v1519, 16
      %v1731 = vrot.slane %v1729, 1
      %v1732 = vor.u32 %v1727, %v1731
      %v1734 = vshll.u32 %v1567, 16
      %v1736 = vrot.slane %v1734, 1
      %v1737 = vsel %vm957, %v1732, %v1736
      %v1739 = vshrl.u32 %v1520, 16
      %v1741 = vshll.u32 %v1520, 16
      %v1743 = vrot.slane %v1741, 1
      %v1744 = vor.u32 %v1739, %v1743
      %v1746 = vshll.u32 %v1568, 16
      %v1748 = vrot.slane %v1746, 1
      %v1749 = vsel %vm957, %v1744, %v1748
      %v1751 = vshrl.u32 %v1521, 16
      %v1753 = vshll.u32 %v1521, 16
      %v1755 = vrot.slane %v1753, 1
      %v1756 = vor.u32 %v1751, %v1755
      %v1758 = vshll.u32 %v1569, 16
      %v1760 = vrot.slane %v1758, 1
      %v1761 = vsel %vm957, %v1756, %v1760
      %1762 = vrot.lane.b32.xlu0 %v1581, 1
      %v1763 = vpop.permute.xlu0 %1762
      %1764 = vrot.lane.b32.xlu0 %v1593, 1
      %v1765 = vpop.permute.xlu0 %1764
      %1766 = vrot.lane.b32.xlu0 %v1605, 1
      %v1767 = vpop.permute.xlu0 %1766
      %1768 = vrot.lane.b32.xlu0 %v1617, 1
      %v1769 = vpop.permute.xlu0 %1768
      %1770 = vrot.lane.b32.xlu0 %v1629, 1
      %v1771 = vpop.permute.xlu0 %1770
      %1772 = vrot.lane.b32.xlu0 %v1641, 1
      %v1773 = vpop.permute.xlu0 %1772
      %1774 = vrot.lane.b32.xlu0 %v1653, 1
      %v1775 = vpop.permute.xlu0 %1774
      %1776 = vrot.lane.b32.xlu0 %v1665, 1
      %v1777 = vpop.permute.xlu0 %1776
      %1778 = vrot.lane.b32.xlu0 %v1677, 1
      %v1779 = vpop.permute.xlu0 %1778
      %1780 = vrot.lane.b32.xlu0 %v1689, 1
      %v1781 = vpop.permute.xlu0 %1780
      %1782 = vrot.lane.b32.xlu0 %v1701, 1
      %v1783 = vpop.permute.xlu0 %1782
      %1784 = vrot.lane.b32.xlu0 %v1713, 1
      %v1785 = vpop.permute.xlu0 %1784
      %1786 = vrot.lane.b32.xlu0 %v1725, 1
      %v1787 = vpop.permute.xlu0 %1786
      %1788 = vrot.lane.b32.xlu0 %v1737, 1
      %v1789 = vpop.permute.xlu0 %1788
      %1790 = vrot.lane.b32.xlu0 %v1749, 1
      %v1791 = vpop.permute.xlu0 %1790
      %1792 = vrot.lane.b32.xlu0 %v1761, 1
      %v1793 = vpop.permute.xlu0 %1792
      %v1810 = vunpack.c.l.b16 %v1426
      %v1811 = vunpack.c.l.b16 %v1427
      %v1812 = vunpack.c.l.b16 %v1428
      %v1813 = vunpack.c.l.b16 %v1429
      %v1814 = vunpack.c.l.b16 %v1430
      %v1815 = vunpack.c.l.b16 %v1431
      %v1816 = vunpack.c.l.b16 %v1432
      %v1817 = vunpack.c.l.b16 %v1433
      %v1818 = vunpack.c.l.b16 %v1434
      %v1819 = vunpack.c.l.b16 %v1435
      %v1820 = vunpack.c.l.b16 %v1436
      %v1821 = vunpack.c.l.b16 %v1437
      %v1822 = vunpack.c.l.b16 %v1438
      %v1823 = vunpack.c.l.b16 %v1439
      %v1824 = vunpack.c.l.b16 %v1440
      %v1825 = vunpack.c.l.b16 %v1441
      %v1826 = vpack.c.b16 %v1475, %v1810
      %v1827 = vpack.c.b16 %v1477, %v1811
      %v1828 = vpack.c.b16 %v1479, %v1812
      %v1829 = vpack.c.b16 %v1481, %v1813
      %v1830 = vpack.c.b16 %v1483, %v1814
      %v1831 = vpack.c.b16 %v1485, %v1815
      %v1832 = vpack.c.b16 %v1487, %v1816
      %v1833 = vpack.c.b16 %v1489, %v1817
      %v1834 = vpack.c.b16 %v1491, %v1818
      %v1835 = vpack.c.b16 %v1493, %v1819
      %v1836 = vpack.c.b16 %v1495, %v1820
      %v1837 = vpack.c.b16 %v1497, %v1821
      %v1838 = vpack.c.b16 %v1499, %v1822
      %v1839 = vpack.c.b16 %v1501, %v1823
      %v1840 = vpack.c.b16 %v1503, %v1824
      %v1841 = vpack.c.b16 %v1505, %v1825
      %v1842 = vrot.slane %v1826, 1
      %v1843 = vrot.slane %v1554, 1
      %v1844 = vsel %vm1230, %v1842, %v1843
      %v1845 = vrot.slane %v1827, 1
      %v1846 = vrot.slane %v1555, 1
      %v1847 = vsel %vm1230, %v1845, %v1846
      %v1848 = vrot.slane %v1828, 1
      %v1849 = vrot.slane %v1556, 1
      %v1850 = vsel %vm1230, %v1848, %v1849
      %v1851 = vrot.slane %v1829, 1
      %v1852 = vrot.slane %v1557, 1
      %v1853 = vsel %vm1230, %v1851, %v1852
      %v1854 = vrot.slane %v1830, 1
      %v1855 = vrot.slane %v1558, 1
      %v1856 = vsel %vm1230, %v1854, %v1855
      %v1857 = vrot.slane %v1831, 1
      %v1858 = vrot.slane %v1559, 1
      %v1859 = vsel %vm1230, %v1857, %v1858
      %v1860 = vrot.slane %v1832, 1
      %v1861 = vrot.slane %v1560, 1
      %v1862 = vsel %vm1230, %v1860, %v1861
      %v1863 = vrot.slane %v1833, 1
      %v1864 = vrot.slane %v1561, 1
      %v1865 = vsel %vm1230, %v1863, %v1864
      %v1866 = vrot.slane %v1834, 1
      %v1867 = vrot.slane %v1562, 1
      %v1868 = vsel %vm1230, %v1866, %v1867
      %v1869 = vrot.slane %v1835, 1
      %v1870 = vrot.slane %v1563, 1
      %v1871 = vsel %vm1230, %v1869, %v1870
      %v1872 = vrot.slane %v1836, 1
      %v1873 = vrot.slane %v1564, 1
      %v1874 = vsel %vm1230, %v1872, %v1873
      %v1875 = vrot.slane %v1837, 1
      %v1876 = vrot.slane %v1565, 1
      %v1877 = vsel %vm1230, %v1875, %v1876
      %v1878 = vrot.slane %v1838, 1
      %v1879 = vrot.slane %v1566, 1
      %v1880 = vsel %vm1230, %v1878, %v1879
      %v1881 = vrot.slane %v1839, 1
      %v1882 = vrot.slane %v1567, 1
      %v1883 = vsel %vm1230, %v1881, %v1882
      %v1884 = vrot.slane %v1840, 1
      %v1885 = vrot.slane %v1568, 1
      %v1886 = vsel %vm1230, %v1884, %v1885
      %v1887 = vrot.slane %v1841, 1
      %v1888 = vrot.slane %v1569, 1
      %v1889 = vsel %vm1230, %v1887, %v1888
      %1890 = vrot.lane.b32.xlu0 %v1844, 2
      %v1891 = vpop.permute.xlu0 %1890
      %1892 = vrot.lane.b32.xlu0 %v1847, 2
      %v1893 = vpop.permute.xlu0 %1892
      %1894 = vrot.lane.b32.xlu0 %v1850, 2
      %v1895 = vpop.permute.xlu0 %1894
      %1896 = vrot.lane.b32.xlu0 %v1853, 2
      %v1897 = vpop.permute.xlu0 %1896
      %1898 = vrot.lane.b32.xlu0 %v1856, 2
      %v1899 = vpop.permute.xlu0 %1898
      %1900 = vrot.lane.b32.xlu0 %v1859, 2
      %v1901 = vpop.permute.xlu0 %1900
      %1902 = vrot.lane.b32.xlu0 %v1862, 2
      %v1903 = vpop.permute.xlu0 %1902
      %1904 = vrot.lane.b32.xlu0 %v1865, 2
      %v1905 = vpop.permute.xlu0 %1904
      %1906 = vrot.lane.b32.xlu0 %v1868, 2
      %v1907 = vpop.permute.xlu0 %1906
      %1908 = vrot.lane.b32.xlu0 %v1871, 2
      %v1909 = vpop.permute.xlu0 %1908
      %1910 = vrot.lane.b32.xlu0 %v1874, 2
      %v1911 = vpop.permute.xlu0 %1910
      %1912 = vrot.lane.b32.xlu0 %v1877, 2
      %v1913 = vpop.permute.xlu0 %1912
      %1914 = vrot.lane.b32.xlu0 %v1880, 2
      %v1915 = vpop.permute.xlu0 %1914
      %1916 = vrot.lane.b32.xlu0 %v1883, 2
      %v1917 = vpop.permute.xlu0 %1916
      %1918 = vrot.lane.b32.xlu0 %v1886, 2
      %v1919 = vpop.permute.xlu0 %1918
      %1920 = vrot.lane.b32.xlu0 %v1889, 2
      %v1921 = vpop.permute.xlu0 %1920
      %v1923 = vsel %vm1311, %v1506, %v1763
      %v1925 = vsel %vm1311, %v1507, %v1765
      %v1927 = vsel %vm1311, %v1508, %v1767
      %v1929 = vsel %vm1311, %v1509, %v1769
      %v1931 = vsel %vm1311, %v1510, %v1771
      %v1933 = vsel %vm1311, %v1511, %v1773
      %v1935 = vsel %vm1311, %v1512, %v1775
      %v1937 = vsel %vm1311, %v1513, %v1777
      %v1939 = vsel %vm1311, %v1514, %v1779
      %v1941 = vsel %vm1311, %v1515, %v1781
      %v1943 = vsel %vm1311, %v1516, %v1783
      %v1945 = vsel %vm1311, %v1517, %v1785
      %v1947 = vsel %vm1311, %v1518, %v1787
      %v1949 = vsel %vm1311, %v1519, %v1789
      %v1951 = vsel %vm1311, %v1520, %v1791
      %v1953 = vsel %vm1311, %v1521, %v1793
      %v1955 = vsel %vm1344, %v1923, %v1891
      %v1957 = vsel %vm1344, %v1925, %v1893
      %v1959 = vsel %vm1344, %v1927, %v1895
      %v1961 = vsel %vm1344, %v1929, %v1897
      %v1963 = vsel %vm1344, %v1931, %v1899
      %v1965 = vsel %vm1344, %v1933, %v1901
      %v1967 = vsel %vm1344, %v1935, %v1903
      %v1969 = vsel %vm1344, %v1937, %v1905
      %v1971 = vsel %vm1344, %v1939, %v1907
      %v1973 = vsel %vm1344, %v1941, %v1909
      %v1975 = vsel %vm1344, %v1943, %v1911
      %v1977 = vsel %vm1344, %v1945, %v1913
      %v1979 = vsel %vm1344, %v1947, %v1915
      %v1981 = vsel %vm1344, %v1949, %v1917
      %v1983 = vsel %vm1344, %v1951, %v1919
      %v1985 = vsel %vm1344, %v1953, %v1921
      %v1986 = vld [vmem:[%s1] sm:$0x6]
      %v1988 = vunpack.c.l.b16 %v1986
      %v1989 = vpack.c.b16 %v1988, %v1988
      %v1991 = vshrl.u32 %v1989, 16
      %v1993 = vrot.slane %v1991, 1
      %v1994 = vshll.u32 %v1989, 16
      %v1996 = vrot.slane %v1994, 2
      %v1997 = vor.u32 %v1993, %v1996
      %vm1998 = vcmask 23552
      %v1999 = vsel %vm1998, %v1955, 0
      %v2001 = vsel %vm1998, %v1957, 0
      %v2003 = vsel %vm1998, %v1959, 0
      %v2005 = vsel %vm1998, %v1961, 0
      %v2007 = vsel %vm1998, %v1963, 0
      %v2009 = vsel %vm1998, %v1965, 0
      %v2011 = vsel %vm1998, %v1967, 0
      %v2013 = vsel %vm1998, %v1969, 0
      %v2015 = vsel %vm1998, %v1971, 0
      %v2017 = vsel %vm1998, %v1973, 0
      %v2019 = vsel %vm1998, %v1975, 0
      %v2021 = vsel %vm1998, %v1977, 0
      %v2023 = vsel %vm1998, %v1979, 0
      %v2025 = vsel %vm1998, %v1981, 0
      %v2027 = vsel %vm1998, %v1983, 0
      %v2029 = vsel %vm1998, %v1985, 0
      %vm2031 = vcmask 1040384
      %vm2032 = vcmask 1041408
      %v2033 = vsel %vm2031, 4294967295, 65535
      %v2034 = vsel %vm2032, %v2033, 0
      %v2036 = vand.u32 %v1997, %v2034
      %2038 = vmatprep.subr.bf16.mxu0 0
      %2039 = vmatpush1.bf16.msra.mxu0 0
      %2040 = vmatprep.subr.bf16.mxu0 0
      %2041 = vmatpush1.bf16.msra.mxu0 0
      %2042 = vmatprep.subr.bf16.mxu0 0
      %2043 = vmatpush1.bf16.msra.mxu0 0
      %2044 = vmatprep.subr.bf16.mxu0 0
      %2045 = vmatpush1.bf16.msra.mxu0 0
      %2046 = vmatprep.subr.bf16.mxu0 0
      %2047 = vmatpush1.bf16.msra.mxu0 0
      %2048 = vmatprep.subr.bf16.mxu0 0
      %2049 = vmatpush1.bf16.msra.mxu0 0
      %2050 = vmatprep.subr.bf16.mxu0 0
      %2051 = vmatpush1.bf16.msra.mxu0 0
      %2052 = vmatprep.subr.bf16.mxu0 0
      %2053 = vmatpush1.bf16.msra.mxu0 %v2036
      %2054 = vmatprep.subr.bf16.mxu0 0
      %2055 = vmatpush2.bf16.msra.mxu0 0
      %2056 = vmatprep.subr.bf16.mxu0 0
      %2057 = vmatpush2.bf16.msra.mxu0 0
      %2058 = vmatprep.subr.bf16.mxu0 0
      %2059 = vmatpush2.bf16.msra.mxu0 0
      %2060 = vmatprep.subr.bf16.mxu0 0
      %2061 = vmatpush2.bf16.msra.mxu0 0
      %2062 = vmatprep.subr.bf16.mxu0 0
      %2063 = vmatpush2.bf16.msra.mxu0 0
      %2064 = vmatprep.subr.bf16.mxu0 0
      %2065 = vmatpush2.bf16.msra.mxu0 0
      %2066 = vmatprep.subr.bf16.mxu0 0
      %2067 = vmatpush2.bf16.msra.mxu0 0
      %2068 = vmatprep.subr.bf16.mxu0 0
      %2069 = vmatpush2.bf16.msra.mxu0 0
      %2070 = vmatprep.mubr.bf16.mxu0 0
      %2071 = vmatmul.mubr.bf16.gmra.mxu0 %v1999
      %v2072 = vpop.f32.mrf.mxu0
      %v2073 = vadd.f32 0.0, %v2072
      %v2074 = vpop.f32.mrf.mxu0
      %v2075 = vpop.f32.mrf.mxu0
      %v2076 = vadd.f32 0.0, %v2075
      %v2077 = vpop.f32.mrf.mxu0
      %2078 = vmatprep.mubr.bf16.mxu0 0
      %2079 = vmatmul.mubr.bf16.gmra.mxu0 %v2001
      %v2080 = vpop.f32.mrf.mxu0
      %v2081 = vadd.f32 0.0, %v2080
      %v2082 = vpop.f32.mrf.mxu0
      %v2083 = vpop.f32.mrf.mxu0
      %v2084 = vadd.f32 0.0, %v2083
      %v2085 = vpop.f32.mrf.mxu0
      %2086 = vmatprep.mubr.bf16.mxu0 0
      %2087 = vmatmul.mubr.bf16.gmra.mxu0 %v2003
      %v2088 = vpop.f32.mrf.mxu0
      %v2089 = vadd.f32 0.0, %v2088
      %v2090 = vpop.f32.mrf.mxu0
      %v2091 = vpop.f32.mrf.mxu0
      %v2092 = vadd.f32 0.0, %v2091
      %v2093 = vpop.f32.mrf.mxu0
      %2094 = vmatprep.mubr.bf16.mxu0 0
      %2095 = vmatmul.mubr.bf16.gmra.mxu0 %v2005
      %v2096 = vpop.f32.mrf.mxu0
      %v2097 = vadd.f32 0.0, %v2096
      %v2098 = vpop.f32.mrf.mxu0
      %v2099 = vpop.f32.mrf.mxu0
      %v2100 = vadd.f32 0.0, %v2099
      %v2101 = vpop.f32.mrf.mxu0
      %2102 = vmatprep.mubr.bf16.mxu0 0
      %2103 = vmatmul.mubr.bf16.gmra.mxu0 %v2007
      %v2104 = vpop.f32.mrf.mxu0
      %v2105 = vadd.f32 0.0, %v2104
      %v2106 = vpop.f32.mrf.mxu0
      %v2107 = vpop.f32.mrf.mxu0
      %v2108 = vadd.f32 0.0, %v2107
      %v2109 = vpop.f32.mrf.mxu0
      %2110 = vmatprep.mubr.bf16.mxu0 0
      %2111 = vmatmul.mubr.bf16.gmra.mxu0 %v2009
      %v2112 = vpop.f32.mrf.mxu0
      %v2113 = vadd.f32 0.0, %v2112
      %v2114 = vpop.f32.mrf.mxu0
      %v2115 = vpop.f32.mrf.mxu0
      %v2116 = vadd.f32 0.0, %v2115
      %v2117 = vpop.f32.mrf.mxu0
      %2118 = vmatprep.mubr.bf16.mxu0 0
      %2119 = vmatmul.mubr.bf16.gmra.mxu0 %v2011
      %v2120 = vpop.f32.mrf.mxu0
      %v2121 = vadd.f32 0.0, %v2120
      %v2122 = vpop.f32.mrf.mxu0
      %v2123 = vpop.f32.mrf.mxu0
      %v2124 = vadd.f32 0.0, %v2123
      %v2125 = vpop.f32.mrf.mxu0
      %2126 = vmatprep.mubr.bf16.mxu0 0
      %2127 = vmatmul.mubr.bf16.gmra.mxu0 %v2013
      %v2128 = vpop.f32.mrf.mxu0
      %v2129 = vadd.f32 0.0, %v2128
      %v2130 = vpop.f32.mrf.mxu0
      %v2131 = vpop.f32.mrf.mxu0
      %v2132 = vadd.f32 0.0, %v2131
      %v2133 = vpop.f32.mrf.mxu0
      %2134 = vmatprep.mubr.bf16.mxu0 0
      %2135 = vmatmul.mubr.bf16.gmra.mxu0 %v2015
      %v2136 = vpop.f32.mrf.mxu0
      %v2137 = vadd.f32 0.0, %v2136
      %v2138 = vpop.f32.mrf.mxu0
      %v2139 = vpop.f32.mrf.mxu0
      %v2140 = vadd.f32 0.0, %v2139
      %v2141 = vpop.f32.mrf.mxu0
      %2142 = vmatprep.mubr.bf16.mxu0 0
      %2143 = vmatmul.mubr.bf16.gmra.mxu0 %v2017
      %v2144 = vpop.f32.mrf.mxu0
      %v2145 = vadd.f32 0.0, %v2144
      %v2146 = vpop.f32.mrf.mxu0
      %v2147 = vpop.f32.mrf.mxu0
      %v2148 = vadd.f32 0.0, %v2147
      %v2149 = vpop.f32.mrf.mxu0
      %2150 = vmatprep.mubr.bf16.mxu0 0
      %2151 = vmatmul.mubr.bf16.gmra.mxu0 %v2019
      %v2152 = vpop.f32.mrf.mxu0
      %v2153 = vadd.f32 0.0, %v2152
      %v2154 = vpop.f32.mrf.mxu0
      %v2155 = vpop.f32.mrf.mxu0
      %v2156 = vadd.f32 0.0, %v2155
      %v2157 = vpop.f32.mrf.mxu0
      %2158 = vmatprep.mubr.bf16.mxu0 0
      %2159 = vmatmul.mubr.bf16.gmra.mxu0 %v2021
      %v2160 = vpop.f32.mrf.mxu0
      %v2161 = vadd.f32 0.0, %v2160
      %v2162 = vpop.f32.mrf.mxu0
      %v2163 = vpop.f32.mrf.mxu0
      %v2164 = vadd.f32 0.0, %v2163
      %v2165 = vpop.f32.mrf.mxu0
      %2166 = vmatprep.mubr.bf16.mxu0 0
      %2167 = vmatmul.mubr.bf16.gmra.mxu0 %v2023
      %v2168 = vpop.f32.mrf.mxu0
      %v2169 = vadd.f32 0.0, %v2168
      %v2170 = vpop.f32.mrf.mxu0
      %v2171 = vpop.f32.mrf.mxu0
      %v2172 = vadd.f32 0.0, %v2171
      %v2173 = vpop.f32.mrf.mxu0
      %2174 = vmatprep.mubr.bf16.mxu0 0
      %2175 = vmatmul.mubr.bf16.gmra.mxu0 %v2025
      %v2176 = vpop.f32.mrf.mxu0
      %v2177 = vadd.f32 0.0, %v2176
      %v2178 = vpop.f32.mrf.mxu0
      %v2179 = vpop.f32.mrf.mxu0
      %v2180 = vadd.f32 0.0, %v2179
      %v2181 = vpop.f32.mrf.mxu0
      %2182 = vmatprep.mubr.bf16.mxu0 0
      %2183 = vmatmul.mubr.bf16.gmra.mxu0 %v2027
      %v2184 = vpop.f32.mrf.mxu0
      %v2185 = vadd.f32 0.0, %v2184
      %v2186 = vpop.f32.mrf.mxu0
      %v2187 = vpop.f32.mrf.mxu0
      %v2188 = vadd.f32 0.0, %v2187
      %v2189 = vpop.f32.mrf.mxu0
      %2190 = vmatprep.mubr.bf16.mxu0 0
      %2191 = vmatmul.mubr.bf16.gmra.mxu0 %v2029
      %v2192 = vpop.f32.mrf.mxu0
      %v2193 = vadd.f32 0.0, %v2192
      %v2194 = vpop.f32.mrf.mxu0
      %v2195 = vpop.f32.mrf.mxu0
      %v2196 = vadd.f32 0.0, %v2195
      %v2197 = vpop.f32.mrf.mxu0
      %2198 = vdwg.mxu0
      %v2199 = vsel %vm1998, %v1346, 0
      %v2201 = vsel %vm1998, %v1348, 0
      %v2203 = vsel %vm1998, %v1350, 0
      %v2205 = vsel %vm1998, %v1352, 0
      %v2207 = vsel %vm1998, %v1354, 0
      %v2209 = vsel %vm1998, %v1356, 0
      %v2211 = vsel %vm1998, %v1358, 0
      %v2213 = vsel %vm1998, %v1360, 0
      %v2215 = vsel %vm1998, %v1362, 0
      %v2217 = vsel %vm1998, %v1364, 0
      %v2219 = vsel %vm1998, %v1366, 0
      %v2221 = vsel %vm1998, %v1368, 0
      %v2223 = vsel %vm1998, %v1370, 0
      %v2225 = vsel %vm1998, %v1372, 0
      %v2227 = vsel %vm1998, %v1374, 0
      %v2229 = vsel %vm1998, %v1376, 0
      %v2232 = vand.u32 %v1377, %v2034
      %2234 = vmatprep.subr.bf16.mxu0 0
      %2235 = vmatpush1.bf16.msra.mxu0 0
      %2236 = vmatprep.subr.bf16.mxu0 0
      %2237 = vmatpush1.bf16.msra.mxu0 0
      %2238 = vmatprep.subr.bf16.mxu0 0
      %2239 = vmatpush1.bf16.msra.mxu0 0
      %2240 = vmatprep.subr.bf16.mxu0 0
      %2241 = vmatpush1.bf16.msra.mxu0 0
      %2242 = vmatprep.subr.bf16.mxu0 0
      %2243 = vmatpush1.bf16.msra.mxu0 0
      %2244 = vmatprep.subr.bf16.mxu0 0
      %2245 = vmatpush1.bf16.msra.mxu0 0
      %2246 = vmatprep.subr.bf16.mxu0 0
      %2247 = vmatpush1.bf16.msra.mxu0 0
      %2248 = vmatprep.subr.bf16.mxu0 0
      %2249 = vmatpush1.bf16.msra.mxu0 %v2232
      %2250 = vmatprep.subr.bf16.mxu0 0
      %2251 = vmatpush2.bf16.msra.mxu0 0
      %2252 = vmatprep.subr.bf16.mxu0 0
      %2253 = vmatpush2.bf16.msra.mxu0 0
      %2254 = vmatprep.subr.bf16.mxu0 0
      %2255 = vmatpush2.bf16.msra.mxu0 0
      %2256 = vmatprep.subr.bf16.mxu0 0
      %2257 = vmatpush2.bf16.msra.mxu0 0
      %2258 = vmatprep.subr.bf16.mxu0 0
      %2259 = vmatpush2.bf16.msra.mxu0 0
      %2260 = vmatprep.subr.bf16.mxu0 0
      %2261 = vmatpush2.bf16.msra.mxu0 0
      %2262 = vmatprep.subr.bf16.mxu0 0
      %2263 = vmatpush2.bf16.msra.mxu0 0
      %2264 = vmatprep.subr.bf16.mxu0 0
      %2265 = vmatpush2.bf16.msra.mxu0 0
      %2266 = vmatprep.mubr.bf16.mxu0 0
      %2267 = vmatmul.mubr.bf16.gmra.mxu0 %v2199
      %v2268 = vpop.f32.mrf.mxu0
      %v2269 = vadd.f32 %v2073, %v2268
      %v2270 = vpop.f32.mrf.mxu0
      %v2271 = vpop.f32.mrf.mxu0
      %v2272 = vadd.f32 %v2076, %v2271
      %v2273 = vpop.f32.mrf.mxu0
      %2274 = vmatprep.mubr.bf16.mxu0 0
      %2275 = vmatmul.mubr.bf16.gmra.mxu0 %v2201
      %v2276 = vpop.f32.mrf.mxu0
      %v2277 = vadd.f32 %v2081, %v2276
      %v2278 = vpop.f32.mrf.mxu0
      %v2279 = vpop.f32.mrf.mxu0
      %v2280 = vadd.f32 %v2084, %v2279
      %v2281 = vpop.f32.mrf.mxu0
      %2282 = vmatprep.mubr.bf16.mxu0 0
      %2283 = vmatmul.mubr.bf16.gmra.mxu0 %v2203
      %v2284 = vpop.f32.mrf.mxu0
      %v2285 = vadd.f32 %v2089, %v2284
      %v2286 = vpop.f32.mrf.mxu0
      %v2287 = vpop.f32.mrf.mxu0
      %v2288 = vadd.f32 %v2092, %v2287
      %v2289 = vpop.f32.mrf.mxu0
      %2290 = vmatprep.mubr.bf16.mxu0 0
      %2291 = vmatmul.mubr.bf16.gmra.mxu0 %v2205
      %v2292 = vpop.f32.mrf.mxu0
      %v2293 = vadd.f32 %v2097, %v2292
      %v2294 = vpop.f32.mrf.mxu0
      %v2295 = vpop.f32.mrf.mxu0
      %v2296 = vadd.f32 %v2100, %v2295
      %v2297 = vpop.f32.mrf.mxu0
      %2298 = vmatprep.mubr.bf16.mxu0 0
      %2299 = vmatmul.mubr.bf16.gmra.mxu0 %v2207
      %v2300 = vpop.f32.mrf.mxu0
      %v2301 = vadd.f32 %v2105, %v2300
      %v2302 = vpop.f32.mrf.mxu0
      %v2303 = vpop.f32.mrf.mxu0
      %v2304 = vadd.f32 %v2108, %v2303
      %v2305 = vpop.f32.mrf.mxu0
      %2306 = vmatprep.mubr.bf16.mxu0 0
      %2307 = vmatmul.mubr.bf16.gmra.mxu0 %v2209
      %v2308 = vpop.f32.mrf.mxu0
      %v2309 = vadd.f32 %v2113, %v2308
      %v2310 = vpop.f32.mrf.mxu0
      %v2311 = vpop.f32.mrf.mxu0
      %v2312 = vadd.f32 %v2116, %v2311
      %v2313 = vpop.f32.mrf.mxu0
      %2314 = vmatprep.mubr.bf16.mxu0 0
      %2315 = vmatmul.mubr.bf16.gmra.mxu0 %v2211
      %v2316 = vpop.f32.mrf.mxu0
      %v2317 = vadd.f32 %v2121, %v2316
      %v2318 = vpop.f32.mrf.mxu0
      %v2319 = vpop.f32.mrf.mxu0
      %v2320 = vadd.f32 %v2124, %v2319
      %v2321 = vpop.f32.mrf.mxu0
      %2322 = vmatprep.mubr.bf16.mxu0 0
      %2323 = vmatmul.mubr.bf16.gmra.mxu0 %v2213
      %v2324 = vpop.f32.mrf.mxu0
      %v2325 = vadd.f32 %v2129, %v2324
      %v2326 = vpop.f32.mrf.mxu0
      %v2327 = vpop.f32.mrf.mxu0
      %v2328 = vadd.f32 %v2132, %v2327
      %v2329 = vpop.f32.mrf.mxu0
      %2330 = vmatprep.mubr.bf16.mxu0 0
      %2331 = vmatmul.mubr.bf16.gmra.mxu0 %v2215
      %v2332 = vpop.f32.mrf.mxu0
      %v2333 = vadd.f32 %v2137, %v2332
      %v2334 = vpop.f32.mrf.mxu0
      %v2335 = vpop.f32.mrf.mxu0
      %v2336 = vadd.f32 %v2140, %v2335
      %v2337 = vpop.f32.mrf.mxu0
      %2338 = vmatprep.mubr.bf16.mxu0 0
      %2339 = vmatmul.mubr.bf16.gmra.mxu0 %v2217
      %v2340 = vpop.f32.mrf.mxu0
      %v2341 = vadd.f32 %v2145, %v2340
      %v2342 = vpop.f32.mrf.mxu0
      %v2343 = vpop.f32.mrf.mxu0
      %v2344 = vadd.f32 %v2148, %v2343
      %v2345 = vpop.f32.mrf.mxu0
      %2346 = vmatprep.mubr.bf16.mxu0 0
      %2347 = vmatmul.mubr.bf16.gmra.mxu0 %v2219
      %v2348 = vpop.f32.mrf.mxu0
      %v2349 = vadd.f32 %v2153, %v2348
      %v2350 = vpop.f32.mrf.mxu0
      %v2351 = vpop.f32.mrf.mxu0
      %v2352 = vadd.f32 %v2156, %v2351
      %v2353 = vpop.f32.mrf.mxu0
      %2354 = vmatprep.mubr.bf16.mxu0 0
      %2355 = vmatmul.mubr.bf16.gmra.mxu0 %v2221
      %v2356 = vpop.f32.mrf.mxu0
      %v2357 = vadd.f32 %v2161, %v2356
      %v2358 = vpop.f32.mrf.mxu0
      %v2359 = vpop.f32.mrf.mxu0
      %v2360 = vadd.f32 %v2164, %v2359
      %v2361 = vpop.f32.mrf.mxu0
      %2362 = vmatprep.mubr.bf16.mxu0 0
      %2363 = vmatmul.mubr.bf16.gmra.mxu0 %v2223
      %v2364 = vpop.f32.mrf.mxu0
      %v2365 = vadd.f32 %v2169, %v2364
      %v2366 = vpop.f32.mrf.mxu0
      %v2367 = vpop.f32.mrf.mxu0
      %v2368 = vadd.f32 %v2172, %v2367
      %v2369 = vpop.f32.mrf.mxu0
      %2370 = vmatprep.mubr.bf16.mxu0 0
      %2371 = vmatmul.mubr.bf16.gmra.mxu0 %v2225
      %v2372 = vpop.f32.mrf.mxu0
      %v2373 = vadd.f32 %v2177, %v2372
      %v2374 = vpop.f32.mrf.mxu0
      %v2375 = vpop.f32.mrf.mxu0
      %v2376 = vadd.f32 %v2180, %v2375
      %v2377 = vpop.f32.mrf.mxu0
      %2378 = vmatprep.mubr.bf16.mxu0 0
      %2379 = vmatmul.mubr.bf16.gmra.mxu0 %v2227
      %v2380 = vpop.f32.mrf.mxu0
      %v2381 = vadd.f32 %v2185, %v2380
      %v2382 = vpop.f32.mrf.mxu0
      %v2383 = vpop.f32.mrf.mxu0
      %v2384 = vadd.f32 %v2188, %v2383
      %v2385 = vpop.f32.mrf.mxu0
      %2386 = vmatprep.mubr.bf16.mxu0 0
      %2387 = vmatmul.mubr.bf16.gmra.mxu0 %v2229
      %v2388 = vpop.f32.mrf.mxu0
      %v2389 = vadd.f32 %v2193, %v2388
      %v2390 = vpop.f32.mrf.mxu0
      %v2391 = vpop.f32.mrf.mxu0
      %v2392 = vadd.f32 %v2196, %v2391
      %v2393 = vpop.f32.mrf.mxu0
      %2394 = vdwg.mxu0
      %s2395 = scalar_lea.vmem [#allocation2], 24
      %v2396 = vld [vmem:[%s2395] sm:$0xf]
      %v2397 = vld [vmem:[%s2395 + $0x4] sm:$0xf]
      %v2398 = vld [vmem:[%s2395 + $0xc] sm:$0xf]
      %v2399 = vld [vmem:[%s2395 + $0x10] sm:$0xf]
      %v2400 = vld [vmem:[%s2395 + $0x18] sm:$0xf]
      %v2401 = vld [vmem:[%s2395 + $0x1c] sm:$0xf]
      %v2402 = vld [vmem:[%s2395 + $0x24] sm:$0xf]
      %v2403 = vld [vmem:[%s2395 + $0x28] sm:$0xf]
      %v2404 = vld [vmem:[%s2395 + $0x30] sm:$0xf]
      %v2405 = vld [vmem:[%s2395 + $0x34] sm:$0xf]
      %v2406 = vld [vmem:[%s2395 + $0x3c] sm:$0xf]
      %v2407 = vld [vmem:[%s2395 + $0x40] sm:$0xf]
      %v2408 = vld [vmem:[%s2395 + $0x48] sm:$0xf]
      %v2409 = vld [vmem:[%s2395 + $0x4c] sm:$0xf]
      %v2410 = vld [vmem:[%s2395 + $0x54] sm:$0xf]
      %v2411 = vld [vmem:[%s2395 + $0x58] sm:$0xf]
      %v2412 = vld [vmem:[%s2395 + $0x60] sm:$0xf]
      %v2413 = vld [vmem:[%s2395 + $0x64] sm:$0xf]
      %v2414 = vld [vmem:[%s2395 + $0x6c] sm:$0xf]
      %v2415 = vld [vmem:[%s2395 + $0x70] sm:$0xf]
      %v2416 = vld [vmem:[%s2395 + $0x78] sm:$0xf]
      %v2417 = vld [vmem:[%s2395 + $0x7c] sm:$0xf]
      %v2418 = vld [vmem:[%s2395 + $0x84] sm:$0xf]
      %v2419 = vld [vmem:[%s2395 + $0x88] sm:$0xf]
      %v2420 = vld [vmem:[%s2395 + $0x90] sm:$0xf]
      %v2421 = vld [vmem:[%s2395 + $0x94] sm:$0xf]
      %v2422 = vld [vmem:[%s2395 + $0x9c] sm:$0xf]
      %v2423 = vld [vmem:[%s2395 + $0xa0] sm:$0xf]
      %v2424 = vld [vmem:[%s2395 + $0xa8] sm:$0xf]
      %v2425 = vld [vmem:[%s2395 + $0xac] sm:$0xf]
      %v2426 = vld [vmem:[%s2395 + $0xb4] sm:$0xf]
      %v2427 = vld [vmem:[%s2395 + $0xb8] sm:$0xf]
      %v2428 = vld [vmem:[%s2395 + $0x8] sm:$0x1]
      %v2429 = vld [vmem:[%s2395 + $0x14] sm:$0x1]
      %v2430 = vld [vmem:[%s2395 + $0x20] sm:$0x1]
      %v2431 = vld [vmem:[%s2395 + $0x2c] sm:$0x1]
      %v2432 = vld [vmem:[%s2395 + $0x38] sm:$0x1]
      %v2433 = vld [vmem:[%s2395 + $0x44] sm:$0x1]
      %v2434 = vld [vmem:[%s2395 + $0x50] sm:$0x1]
      %v2435 = vld [vmem:[%s2395 + $0x5c] sm:$0x1]
      %v2436 = vld [vmem:[%s2395 + $0x68] sm:$0x1]
      %v2437 = vld [vmem:[%s2395 + $0x74] sm:$0x1]
      %v2438 = vld [vmem:[%s2395 + $0x80] sm:$0x1]
      %v2439 = vld [vmem:[%s2395 + $0x8c] sm:$0x1]
      %v2440 = vld [vmem:[%s2395 + $0x98] sm:$0x1]
      %v2441 = vld [vmem:[%s2395 + $0xa4] sm:$0x1]
      %v2442 = vld [vmem:[%s2395 + $0xb0] sm:$0x1]
      %v2443 = vld [vmem:[%s2395 + $0xbc] sm:$0x1]
      %v2444 = vld [vmem:[%s2395] sm:$0xe]
      %v2445 = vld [vmem:[%s2395 + $0xc] sm:$0xe]
      %v2446 = vld [vmem:[%s2395 + $0x18] sm:$0xe]
      %v2447 = vld [vmem:[%s2395 + $0x24] sm:$0xe]
      %v2448 = vld [vmem:[%s2395 + $0x30] sm:$0xe]
      %v2449 = vld [vmem:[%s2395 + $0x3c] sm:$0xe]
      %v2450 = vld [vmem:[%s2395 + $0x48] sm:$0xe]
      %v2451 = vld [vmem:[%s2395 + $0x54] sm:$0xe]
      %v2452 = vld [vmem:[%s2395 + $0x60] sm:$0xe]
      %v2453 = vld [vmem:[%s2395 + $0x6c] sm:$0xe]
      %v2454 = vld [vmem:[%s2395 + $0x78] sm:$0xe]
      %v2455 = vld [vmem:[%s2395 + $0x84] sm:$0xe]
      %v2456 = vld [vmem:[%s2395 + $0x90] sm:$0xe]
      %v2457 = vld [vmem:[%s2395 + $0x9c] sm:$0xe]
      %v2458 = vld [vmem:[%s2395 + $0xa8] sm:$0xe]
      %v2459 = vld [vmem:[%s2395 + $0xb4] sm:$0xe]
      %v2492 = vunpack.c.l.b16 %v2396
      %v2493 = vunpack.c.l.b16 %v2397
      %v2494 = vunpack.c.l.b16 %v2398
      %v2495 = vunpack.c.l.b16 %v2399
      %v2496 = vunpack.c.l.b16 %v2400
      %v2497 = vunpack.c.l.b16 %v2401
      %v2498 = vunpack.c.l.b16 %v2402
      %v2499 = vunpack.c.l.b16 %v2403
      %v2500 = vunpack.c.l.b16 %v2404
      %v2501 = vunpack.c.l.b16 %v2405
      %v2502 = vunpack.c.l.b16 %v2406
      %v2503 = vunpack.c.l.b16 %v2407
      %v2504 = vunpack.c.l.b16 %v2408
      %v2505 = vunpack.c.l.b16 %v2409
      %v2506 = vunpack.c.l.b16 %v2410
      %v2507 = vunpack.c.l.b16 %v2411
      %v2508 = vunpack.c.l.b16 %v2412
      %v2509 = vunpack.c.l.b16 %v2413
      %v2510 = vunpack.c.l.b16 %v2414
      %v2511 = vunpack.c.l.b16 %v2415
      %v2512 = vunpack.c.l.b16 %v2416
      %v2513 = vunpack.c.l.b16 %v2417
      %v2514 = vunpack.c.l.b16 %v2418
      %v2515 = vunpack.c.l.b16 %v2419
      %v2516 = vunpack.c.l.b16 %v2420
      %v2517 = vunpack.c.l.b16 %v2421
      %v2518 = vunpack.c.l.b16 %v2422
      %v2519 = vunpack.c.l.b16 %v2423
      %v2520 = vunpack.c.l.b16 %v2424
      %v2521 = vunpack.c.l.b16 %v2425
      %v2522 = vunpack.c.l.b16 %v2426
      %v2523 = vunpack.c.l.b16 %v2427
      %v2524 = vpack.c.b16 %v2493, %v2492
      %v2525 = vpack.c.b16 %v2495, %v2494
      %v2526 = vpack.c.b16 %v2497, %v2496
      %v2527 = vpack.c.b16 %v2499, %v2498
      %v2528 = vpack.c.b16 %v2501, %v2500
      %v2529 = vpack.c.b16 %v2503, %v2502
      %v2530 = vpack.c.b16 %v2505, %v2504
      %v2531 = vpack.c.b16 %v2507, %v2506
      %v2532 = vpack.c.b16 %v2509, %v2508
      %v2533 = vpack.c.b16 %v2511, %v2510
      %v2534 = vpack.c.b16 %v2513, %v2512
      %v2535 = vpack.c.b16 %v2515, %v2514
      %v2536 = vpack.c.b16 %v2517, %v2516
      %v2537 = vpack.c.b16 %v2519, %v2518
      %v2538 = vpack.c.b16 %v2521, %v2520
      %v2539 = vpack.c.b16 %v2523, %v2522
      %v2556 = vunpack.c.l.b16 %v2428
      %v2557 = vunpack.c.l.b16 %v2429
      %v2558 = vunpack.c.l.b16 %v2430
      %v2559 = vunpack.c.l.b16 %v2431
      %v2560 = vunpack.c.l.b16 %v2432
      %v2561 = vunpack.c.l.b16 %v2433
      %v2562 = vunpack.c.l.b16 %v2434
      %v2563 = vunpack.c.l.b16 %v2435
      %v2564 = vunpack.c.l.b16 %v2436
      %v2565 = vunpack.c.l.b16 %v2437
      %v2566 = vunpack.c.l.b16 %v2438
      %v2567 = vunpack.c.l.b16 %v2439
      %v2568 = vunpack.c.l.b16 %v2440
      %v2569 = vunpack.c.l.b16 %v2441
      %v2570 = vunpack.c.l.b16 %v2442
      %v2571 = vunpack.c.l.b16 %v2443
      %v2572 = vpack.c.b16 %v2556, %v2556
      %v2573 = vpack.c.b16 %v2557, %v2557
      %v2574 = vpack.c.b16 %v2558, %v2558
      %v2575 = vpack.c.b16 %v2559, %v2559
      %v2576 = vpack.c.b16 %v2560, %v2560
      %v2577 = vpack.c.b16 %v2561, %v2561
      %v2578 = vpack.c.b16 %v2562, %v2562
      %v2579 = vpack.c.b16 %v2563, %v2563
      %v2580 = vpack.c.b16 %v2564, %v2564
      %v2581 = vpack.c.b16 %v2565, %v2565
      %v2582 = vpack.c.b16 %v2566, %v2566
      %v2583 = vpack.c.b16 %v2567, %v2567
      %v2584 = vpack.c.b16 %v2568, %v2568
      %v2585 = vpack.c.b16 %v2569, %v2569
      %v2586 = vpack.c.b16 %v2570, %v2570
      %v2587 = vpack.c.b16 %v2571, %v2571
      %v2589 = vshrl.u32 %v2524, 16
      %v2591 = vshll.u32 %v2524, 16
      %v2593 = vrot.slane %v2591, 1
      %v2594 = vor.u32 %v2589, %v2593
      %v2596 = vshll.u32 %v2572, 16
      %v2598 = vrot.slane %v2596, 1
      %v2599 = vsel %vm957, %v2594, %v2598
      %v2601 = vshrl.u32 %v2525, 16
      %v2603 = vshll.u32 %v2525, 16
      %v2605 = vrot.slane %v2603, 1
      %v2606 = vor.u32 %v2601, %v2605
      %v2608 = vshll.u32 %v2573, 16
      %v2610 = vrot.slane %v2608, 1
      %v2611 = vsel %vm957, %v2606, %v2610
      %v2613 = vshrl.u32 %v2526, 16
      %v2615 = vshll.u32 %v2526, 16
      %v2617 = vrot.slane %v2615, 1
      %v2618 = vor.u32 %v2613, %v2617
      %v2620 = vshll.u32 %v2574, 16
      %v2622 = vrot.slane %v2620, 1
      %v2623 = vsel %vm957, %v2618, %v2622
      %v2625 = vshrl.u32 %v2527, 16
      %v2627 = vshll.u32 %v2527, 16
      %v2629 = vrot.slane %v2627, 1
      %v2630 = vor.u32 %v2625, %v2629
      %v2632 = vshll.u32 %v2575, 16
      %v2634 = vrot.slane %v2632, 1
      %v2635 = vsel %vm957, %v2630, %v2634
      %v2637 = vshrl.u32 %v2528, 16
      %v2639 = vshll.u32 %v2528, 16
      %v2641 = vrot.slane %v2639, 1
      %v2642 = vor.u32 %v2637, %v2641
      %v2644 = vshll.u32 %v2576, 16
      %v2646 = vrot.slane %v2644, 1
      %v2647 = vsel %vm957, %v2642, %v2646
      %v2649 = vshrl.u32 %v2529, 16
      %v2651 = vshll.u32 %v2529, 16
      %v2653 = vrot.slane %v2651, 1
      %v2654 = vor.u32 %v2649, %v2653
      %v2656 = vshll.u32 %v2577, 16
      %v2658 = vrot.slane %v2656, 1
      %v2659 = vsel %vm957, %v2654, %v2658
      %v2661 = vshrl.u32 %v2530, 16
      %v2663 = vshll.u32 %v2530, 16
      %v2665 = vrot.slane %v2663, 1
      %v2666 = vor.u32 %v2661, %v2665
      %v2668 = vshll.u32 %v2578, 16
      %v2670 = vrot.slane %v2668, 1
      %v2671 = vsel %vm957, %v2666, %v2670
      %v2673 = vshrl.u32 %v2531, 16
      %v2675 = vshll.u32 %v2531, 16
      %v2677 = vrot.slane %v2675, 1
      %v2678 = vor.u32 %v2673, %v2677
      %v2680 = vshll.u32 %v2579, 16
      %v2682 = vrot.slane %v2680, 1
      %v2683 = vsel %vm957, %v2678, %v2682
      %v2685 = vshrl.u32 %v2532, 16
      %v2687 = vshll.u32 %v2532, 16
      %v2689 = vrot.slane %v2687, 1
      %v2690 = vor.u32 %v2685, %v2689
      %v2692 = vshll.u32 %v2580, 16
      %v2694 = vrot.slane %v2692, 1
      %v2695 = vsel %vm957, %v2690, %v2694
      %v2697 = vshrl.u32 %v2533, 16
      %v2699 = vshll.u32 %v2533, 16
      %v2701 = vrot.slane %v2699, 1
      %v2702 = vor.u32 %v2697, %v2701
      %v2704 = vshll.u32 %v2581, 16
      %v2706 = vrot.slane %v2704, 1
      %v2707 = vsel %vm957, %v2702, %v2706
      %v2709 = vshrl.u32 %v2534, 16
      %v2711 = vshll.u32 %v2534, 16
      %v2713 = vrot.slane %v2711, 1
      %v2714 = vor.u32 %v2709, %v2713
      %v2716 = vshll.u32 %v2582, 16
      %v2718 = vrot.slane %v2716, 1
      %v2719 = vsel %vm957, %v2714, %v2718
      %v2721 = vshrl.u32 %v2535, 16
      %v2723 = vshll.u32 %v2535, 16
      %v2725 = vrot.slane %v2723, 1
      %v2726 = vor.u32 %v2721, %v2725
      %v2728 = vshll.u32 %v2583, 16
      %v2730 = vrot.slane %v2728, 1
      %v2731 = vsel %vm957, %v2726, %v2730
      %v2733 = vshrl.u32 %v2536, 16
      %v2735 = vshll.u32 %v2536, 16
      %v2737 = vrot.slane %v2735, 1
      %v2738 = vor.u32 %v2733, %v2737
      %v2740 = vshll.u32 %v2584, 16
      %v2742 = vrot.slane %v2740, 1
      %v2743 = vsel %vm957, %v2738, %v2742
      %v2745 = vshrl.u32 %v2537, 16
      %v2747 = vshll.u32 %v2537, 16
      %v2749 = vrot.slane %v2747, 1
      %v2750 = vor.u32 %v2745, %v2749
      %v2752 = vshll.u32 %v2585, 16
      %v2754 = vrot.slane %v2752, 1
      %v2755 = vsel %vm957, %v2750, %v2754
      %v2757 = vshrl.u32 %v2538, 16
      %v2759 = vshll.u32 %v2538, 16
      %v2761 = vrot.slane %v2759, 1
      %v2762 = vor.u32 %v2757, %v2761
      %v2764 = vshll.u32 %v2586, 16
      %v2766 = vrot.slane %v2764, 1
      %v2767 = vsel %vm957, %v2762, %v2766
      %v2769 = vshrl.u32 %v2539, 16
      %v2771 = vshll.u32 %v2539, 16
      %v2773 = vrot.slane %v2771, 1
      %v2774 = vor.u32 %v2769, %v2773
      %v2776 = vshll.u32 %v2587, 16
      %v2778 = vrot.slane %v2776, 1
      %v2779 = vsel %vm957, %v2774, %v2778
      %2780 = vrot.lane.b32.xlu0 %v2599, 1
      %v2781 = vpop.permute.xlu0 %2780
      %2782 = vrot.lane.b32.xlu0 %v2611, 1
      %v2783 = vpop.permute.xlu0 %2782
      %2784 = vrot.lane.b32.xlu0 %v2623, 1
      %v2785 = vpop.permute.xlu0 %2784
      %2786 = vrot.lane.b32.xlu0 %v2635, 1
      %v2787 = vpop.permute.xlu0 %2786
      %2788 = vrot.lane.b32.xlu0 %v2647, 1
      %v2789 = vpop.permute.xlu0 %2788
      %2790 = vrot.lane.b32.xlu0 %v2659, 1
      %v2791 = vpop.permute.xlu0 %2790
      %2792 = vrot.lane.b32.xlu0 %v2671, 1
      %v2793 = vpop.permute.xlu0 %2792
      %2794 = vrot.lane.b32.xlu0 %v2683, 1
      %v2795 = vpop.permute.xlu0 %2794
      %2796 = vrot.lane.b32.xlu0 %v2695, 1
      %v2797 = vpop.permute.xlu0 %2796
      %2798 = vrot.lane.b32.xlu0 %v2707, 1
      %v2799 = vpop.permute.xlu0 %2798
      %2800 = vrot.lane.b32.xlu0 %v2719, 1
      %v2801 = vpop.permute.xlu0 %2800
      %2802 = vrot.lane.b32.xlu0 %v2731, 1
      %v2803 = vpop.permute.xlu0 %2802
      %2804 = vrot.lane.b32.xlu0 %v2743, 1
      %v2805 = vpop.permute.xlu0 %2804
      %2806 = vrot.lane.b32.xlu0 %v2755, 1
      %v2807 = vpop.permute.xlu0 %2806
      %2808 = vrot.lane.b32.xlu0 %v2767, 1
      %v2809 = vpop.permute.xlu0 %2808
      %2810 = vrot.lane.b32.xlu0 %v2779, 1
      %v2811 = vpop.permute.xlu0 %2810
      %v2828 = vunpack.c.l.b16 %v2444
      %v2829 = vunpack.c.l.b16 %v2445
      %v2830 = vunpack.c.l.b16 %v2446
      %v2831 = vunpack.c.l.b16 %v2447
      %v2832 = vunpack.c.l.b16 %v2448
      %v2833 = vunpack.c.l.b16 %v2449
      %v2834 = vunpack.c.l.b16 %v2450
      %v2835 = vunpack.c.l.b16 %v2451
      %v2836 = vunpack.c.l.b16 %v2452
      %v2837 = vunpack.c.l.b16 %v2453
      %v2838 = vunpack.c.l.b16 %v2454
      %v2839 = vunpack.c.l.b16 %v2455
      %v2840 = vunpack.c.l.b16 %v2456
      %v2841 = vunpack.c.l.b16 %v2457
      %v2842 = vunpack.c.l.b16 %v2458
      %v2843 = vunpack.c.l.b16 %v2459
      %v2844 = vpack.c.b16 %v2493, %v2828
      %v2845 = vpack.c.b16 %v2495, %v2829
      %v2846 = vpack.c.b16 %v2497, %v2830
      %v2847 = vpack.c.b16 %v2499, %v2831
      %v2848 = vpack.c.b16 %v2501, %v2832
      %v2849 = vpack.c.b16 %v2503, %v2833
      %v2850 = vpack.c.b16 %v2505, %v2834
      %v2851 = vpack.c.b16 %v2507, %v2835
      %v2852 = vpack.c.b16 %v2509, %v2836
      %v2853 = vpack.c.b16 %v2511, %v2837
      %v2854 = vpack.c.b16 %v2513, %v2838
      %v2855 = vpack.c.b16 %v2515, %v2839
      %v2856 = vpack.c.b16 %v2517, %v2840
      %v2857 = vpack.c.b16 %v2519, %v2841
      %v2858 = vpack.c.b16 %v2521, %v2842
      %v2859 = vpack.c.b16 %v2523, %v2843
      %v2860 = vrot.slane %v2844, 1
      %v2861 = vrot.slane %v2572, 1
      %v2862 = vsel %vm1230, %v2860, %v2861
      %v2863 = vrot.slane %v2845, 1
      %v2864 = vrot.slane %v2573, 1
      %v2865 = vsel %vm1230, %v2863, %v2864
      %v2866 = vrot.slane %v2846, 1
      %v2867 = vrot.slane %v2574, 1
      %v2868 = vsel %vm1230, %v2866, %v2867
      %v2869 = vrot.slane %v2847, 1
      %v2870 = vrot.slane %v2575, 1
      %v2871 = vsel %vm1230, %v2869, %v2870
      %v2872 = vrot.slane %v2848, 1
      %v2873 = vrot.slane %v2576, 1
      %v2874 = vsel %vm1230, %v2872, %v2873
      %v2875 = vrot.slane %v2849, 1
      %v2876 = vrot.slane %v2577, 1
      %v2877 = vsel %vm1230, %v2875, %v2876
      %v2878 = vrot.slane %v2850, 1
      %v2879 = vrot.slane %v2578, 1
      %v2880 = vsel %vm1230, %v2878, %v2879
      %v2881 = vrot.slane %v2851, 1
      %v2882 = vrot.slane %v2579, 1
      %v2883 = vsel %vm1230, %v2881, %v2882
      %v2884 = vrot.slane %v2852, 1
      %v2885 = vrot.slane %v2580, 1
      %v2886 = vsel %vm1230, %v2884, %v2885
      %v2887 = vrot.slane %v2853, 1
      %v2888 = vrot.slane %v2581, 1
      %v2889 = vsel %vm1230, %v2887, %v2888
      %v2890 = vrot.slane %v2854, 1
      %v2891 = vrot.slane %v2582, 1
      %v2892 = vsel %vm1230, %v2890, %v2891
      %v2893 = vrot.slane %v2855, 1
      %v2894 = vrot.slane %v2583, 1
      %v2895 = vsel %vm1230, %v2893, %v2894
      %v2896 = vrot.slane %v2856, 1
      %v2897 = vrot.slane %v2584, 1
      %v2898 = vsel %vm1230, %v2896, %v2897
      %v2899 = vrot.slane %v2857, 1
      %v2900 = vrot.slane %v2585, 1
      %v2901 = vsel %vm1230, %v2899, %v2900
      %v2902 = vrot.slane %v2858, 1
      %v2903 = vrot.slane %v2586, 1
      %v2904 = vsel %vm1230, %v2902, %v2903
      %v2905 = vrot.slane %v2859, 1
      %v2906 = vrot.slane %v2587, 1
      %v2907 = vsel %vm1230, %v2905, %v2906
      %2908 = vrot.lane.b32.xlu0 %v2862, 2
      %v2909 = vpop.permute.xlu0 %2908
      %2910 = vrot.lane.b32.xlu0 %v2865, 2
      %v2911 = vpop.permute.xlu0 %2910
      %2912 = vrot.lane.b32.xlu0 %v2868, 2
      %v2913 = vpop.permute.xlu0 %2912
      %2914 = vrot.lane.b32.xlu0 %v2871, 2
      %v2915 = vpop.permute.xlu0 %2914
      %2916 = vrot.lane.b32.xlu0 %v2874, 2
      %v2917 = vpop.permute.xlu0 %2916
      %2918 = vrot.lane.b32.xlu0 %v2877, 2
      %v2919 = vpop.permute.xlu0 %2918
      %2920 = vrot.lane.b32.xlu0 %v2880, 2
      %v2921 = vpop.permute.xlu0 %2920
      %2922 = vrot.lane.b32.xlu0 %v2883, 2
      %v2923 = vpop.permute.xlu0 %2922
      %2924 = vrot.lane.b32.xlu0 %v2886, 2
      %v2925 = vpop.permute.xlu0 %2924
      %2926 = vrot.lane.b32.xlu0 %v2889, 2
      %v2927 = vpop.permute.xlu0 %2926
      %2928 = vrot.lane.b32.xlu0 %v2892, 2
      %v2929 = vpop.permute.xlu0 %2928
      %2930 = vrot.lane.b32.xlu0 %v2895, 2
      %v2931 = vpop.permute.xlu0 %2930
      %2932 = vrot.lane.b32.xlu0 %v2898, 2
      %v2933 = vpop.permute.xlu0 %2932
      %2934 = vrot.lane.b32.xlu0 %v2901, 2
      %v2935 = vpop.permute.xlu0 %2934
      %2936 = vrot.lane.b32.xlu0 %v2904, 2
      %v2937 = vpop.permute.xlu0 %2936
      %2938 = vrot.lane.b32.xlu0 %v2907, 2
      %v2939 = vpop.permute.xlu0 %2938
      %v2941 = vsel %vm1311, %v2524, %v2781
      %v2943 = vsel %vm1311, %v2525, %v2783
      %v2945 = vsel %vm1311, %v2526, %v2785
      %v2947 = vsel %vm1311, %v2527, %v2787
      %v2949 = vsel %vm1311, %v2528, %v2789
      %v2951 = vsel %vm1311, %v2529, %v2791
      %v2953 = vsel %vm1311, %v2530, %v2793
      %v2955 = vsel %vm1311, %v2531, %v2795
      %v2957 = vsel %vm1311, %v2532, %v2797
      %v2959 = vsel %vm1311, %v2533, %v2799
      %v2961 = vsel %vm1311, %v2534, %v2801
      %v2963 = vsel %vm1311, %v2535, %v2803
      %v2965 = vsel %vm1311, %v2536, %v2805
      %v2967 = vsel %vm1311, %v2537, %v2807
      %v2969 = vsel %vm1311, %v2538, %v2809
      %v2971 = vsel %vm1311, %v2539, %v2811
      %v2973 = vsel %vm1344, %v2941, %v2909
      %v2975 = vsel %vm1344, %v2943, %v2911
      %v2977 = vsel %vm1344, %v2945, %v2913
      %v2979 = vsel %vm1344, %v2947, %v2915
      %v2981 = vsel %vm1344, %v2949, %v2917
      %v2983 = vsel %vm1344, %v2951, %v2919
      %v2985 = vsel %vm1344, %v2953, %v2921
      %v2987 = vsel %vm1344, %v2955, %v2923
      %v2989 = vsel %vm1344, %v2957, %v2925
      %v2991 = vsel %vm1344, %v2959, %v2927
      %v2993 = vsel %vm1344, %v2961, %v2929
      %v2995 = vsel %vm1344, %v2963, %v2931
      %v2997 = vsel %vm1344, %v2965, %v2933
      %v2999 = vsel %vm1344, %v2967, %v2935
      %v3001 = vsel %vm1344, %v2969, %v2937
      %v3003 = vsel %vm1344, %v2971, %v2939
      %v3004 = vld [vmem:[%s1] sm:$0x8]
      %v3005 = vld [vmem:[%s1 + $0x4] sm:$0x1]
      %v3008 = vunpack.c.l.b16 %v3004
      %v3009 = vunpack.c.l.b16 %v3005
      %v3010 = vpack.c.b16 %v3009, %v3008
      %v3011 = vrot.slane %v3010, 3
      %v3012 = vsel %vm1998, %v2973, 0
      %v3014 = vsel %vm1998, %v2975, 0
      %v3016 = vsel %vm1998, %v2977, 0
      %v3018 = vsel %vm1998, %v2979, 0
      %v3020 = vsel %vm1998, %v2981, 0
      %v3022 = vsel %vm1998, %v2983, 0
      %v3024 = vsel %vm1998, %v2985, 0
      %v3026 = vsel %vm1998, %v2987, 0
      %v3028 = vsel %vm1998, %v2989, 0
      %v3030 = vsel %vm1998, %v2991, 0
      %v3032 = vsel %vm1998, %v2993, 0
      %v3034 = vsel %vm1998, %v2995, 0
      %v3036 = vsel %vm1998, %v2997, 0
      %v3038 = vsel %vm1998, %v2999, 0
      %v3040 = vsel %vm1998, %v3001, 0
      %v3042 = vsel %vm1998, %v3003, 0
      %v3045 = vand.u32 %v3011, %v2034
      %3047 = vmatprep.subr.bf16.mxu0 0
      %3048 = vmatpush1.bf16.msra.mxu0 0
      %3049 = vmatprep.subr.bf16.mxu0 0
      %3050 = vmatpush1.bf16.msra.mxu0 0
      %3051 = vmatprep.subr.bf16.mxu0 0
      %3052 = vmatpush1.bf16.msra.mxu0 0
      %3053 = vmatprep.subr.bf16.mxu0 0
      %3054 = vmatpush1.bf16.msra.mxu0 0
      %3055 = vmatprep.subr.bf16.mxu0 0
      %3056 = vmatpush1.bf16.msra.mxu0 0
      %3057 = vmatprep.subr.bf16.mxu0 0
      %3058 = vmatpush1.bf16.msra.mxu0 0
      %3059 = vmatprep.subr.bf16.mxu0 0
      %3060 = vmatpush1.bf16.msra.mxu0 0
      %3061 = vmatprep.subr.bf16.mxu0 0
      %3062 = vmatpush1.bf16.msra.mxu0 %v3045
      %3063 = vmatprep.subr.bf16.mxu0 0
      %3064 = vmatpush2.bf16.msra.mxu0 0
      %3065 = vmatprep.subr.bf16.mxu0 0
      %3066 = vmatpush2.bf16.msra.mxu0 0
      %3067 = vmatprep.subr.bf16.mxu0 0
      %3068 = vmatpush2.bf16.msra.mxu0 0
      %3069 = vmatprep.subr.bf16.mxu0 0
      %3070 = vmatpush2.bf16.msra.mxu0 0
      %3071 = vmatprep.subr.bf16.mxu0 0
      %3072 = vmatpush2.bf16.msra.mxu0 0
      %3073 = vmatprep.subr.bf16.mxu0 0
      %3074 = vmatpush2.bf16.msra.mxu0 0
      %3075 = vmatprep.subr.bf16.mxu0 0
      %3076 = vmatpush2.bf16.msra.mxu0 0
      %3077 = vmatprep.subr.bf16.mxu0 0
      %3078 = vmatpush2.bf16.msra.mxu0 0
      %3079 = vmatprep.mubr.bf16.mxu0 0
      %3080 = vmatmul.mubr.bf16.gmra.mxu0 %v3012
      %v3081 = vpop.f32.mrf.mxu0
      %v3082 = vadd.f32 0.0, %v3081
      %v3083 = vpop.f32.mrf.mxu0
      %v3084 = vpop.f32.mrf.mxu0
      %v3085 = vadd.f32 0.0, %v3084
      %v3086 = vpop.f32.mrf.mxu0
      %3087 = vmatprep.mubr.bf16.mxu0 0
      %3088 = vmatmul.mubr.bf16.gmra.mxu0 %v3014
      %v3089 = vpop.f32.mrf.mxu0
      %v3090 = vadd.f32 0.0, %v3089
      %v3091 = vpop.f32.mrf.mxu0
      %v3092 = vpop.f32.mrf.mxu0
      %v3093 = vadd.f32 0.0, %v3092
      %v3094 = vpop.f32.mrf.mxu0
      %3095 = vmatprep.mubr.bf16.mxu0 0
      %3096 = vmatmul.mubr.bf16.gmra.mxu0 %v3016
      %v3097 = vpop.f32.mrf.mxu0
      %v3098 = vadd.f32 0.0, %v3097
      %v3099 = vpop.f32.mrf.mxu0
      %v3100 = vpop.f32.mrf.mxu0
      %v3101 = vadd.f32 0.0, %v3100
      %v3102 = vpop.f32.mrf.mxu0
      %3103 = vmatprep.mubr.bf16.mxu0 0
      %3104 = vmatmul.mubr.bf16.gmra.mxu0 %v3018
      %v3105 = vpop.f32.mrf.mxu0
      %v3106 = vadd.f32 0.0, %v3105
      %v3107 = vpop.f32.mrf.mxu0
      %v3108 = vpop.f32.mrf.mxu0
      %v3109 = vadd.f32 0.0, %v3108
      %v3110 = vpop.f32.mrf.mxu0
      %3111 = vmatprep.mubr.bf16.mxu0 0
      %3112 = vmatmul.mubr.bf16.gmra.mxu0 %v3020
      %v3113 = vpop.f32.mrf.mxu0
      %v3114 = vadd.f32 0.0, %v3113
      %v3115 = vpop.f32.mrf.mxu0
      %v3116 = vpop.f32.mrf.mxu0
      %v3117 = vadd.f32 0.0, %v3116
      %v3118 = vpop.f32.mrf.mxu0
      %3119 = vmatprep.mubr.bf16.mxu0 0
      %3120 = vmatmul.mubr.bf16.gmra.mxu0 %v3022
      %v3121 = vpop.f32.mrf.mxu0
      %v3122 = vadd.f32 0.0, %v3121
      %v3123 = vpop.f32.mrf.mxu0
      %v3124 = vpop.f32.mrf.mxu0
      %v3125 = vadd.f32 0.0, %v3124
      %v3126 = vpop.f32.mrf.mxu0
      %3127 = vmatprep.mubr.bf16.mxu0 0
      %3128 = vmatmul.mubr.bf16.gmra.mxu0 %v3024
      %v3129 = vpop.f32.mrf.mxu0
      %v3130 = vadd.f32 0.0, %v3129
      %v3131 = vpop.f32.mrf.mxu0
      %v3132 = vpop.f32.mrf.mxu0
      %v3133 = vadd.f32 0.0, %v3132
      %v3134 = vpop.f32.mrf.mxu0
      %3135 = vmatprep.mubr.bf16.mxu0 0
      %3136 = vmatmul.mubr.bf16.gmra.mxu0 %v3026
      %v3137 = vpop.f32.mrf.mxu0
      %v3138 = vadd.f32 0.0, %v3137
      %v3139 = vpop.f32.mrf.mxu0
      %v3140 = vpop.f32.mrf.mxu0
      %v3141 = vadd.f32 0.0, %v3140
      %v3142 = vpop.f32.mrf.mxu0
      %3143 = vmatprep.mubr.bf16.mxu0 0
      %3144 = vmatmul.mubr.bf16.gmra.mxu0 %v3028
      %v3145 = vpop.f32.mrf.mxu0
      %v3146 = vadd.f32 0.0, %v3145
      %v3147 = vpop.f32.mrf.mxu0
      %v3148 = vpop.f32.mrf.mxu0
      %v3149 = vadd.f32 0.0, %v3148
      %v3150 = vpop.f32.mrf.mxu0
      %3151 = vmatprep.mubr.bf16.mxu0 0
      %3152 = vmatmul.mubr.bf16.gmra.mxu0 %v3030
      %v3153 = vpop.f32.mrf.mxu0
      %v3154 = vadd.f32 0.0, %v3153
      %v3155 = vpop.f32.mrf.mxu0
      %v3156 = vpop.f32.mrf.mxu0
      %v3157 = vadd.f32 0.0, %v3156
      %v3158 = vpop.f32.mrf.mxu0
      %3159 = vmatprep.mubr.bf16.mxu0 0
      %3160 = vmatmul.mubr.bf16.gmra.mxu0 %v3032
      %v3161 = vpop.f32.mrf.mxu0
      %v3162 = vadd.f32 0.0, %v3161
      %v3163 = vpop.f32.mrf.mxu0
      %v3164 = vpop.f32.mrf.mxu0
      %v3165 = vadd.f32 0.0, %v3164
      %v3166 = vpop.f32.mrf.mxu0
      %3167 = vmatprep.mubr.bf16.mxu0 0
      %3168 = vmatmul.mubr.bf16.gmra.mxu0 %v3034
      %v3169 = vpop.f32.mrf.mxu0
      %v3170 = vadd.f32 0.0, %v3169
      %v3171 = vpop.f32.mrf.mxu0
      %v3172 = vpop.f32.mrf.mxu0
      %v3173 = vadd.f32 0.0, %v3172
      %v3174 = vpop.f32.mrf.mxu0
      %3175 = vmatprep.mubr.bf16.mxu0 0
      %3176 = vmatmul.mubr.bf16.gmra.mxu0 %v3036
      %v3177 = vpop.f32.mrf.mxu0
      %v3178 = vadd.f32 0.0, %v3177
      %v3179 = vpop.f32.mrf.mxu0
      %v3180 = vpop.f32.mrf.mxu0
      %v3181 = vadd.f32 0.0, %v3180
      %v3182 = vpop.f32.mrf.mxu0
      %3183 = vmatprep.mubr.bf16.mxu0 0
      %3184 = vmatmul.mubr.bf16.gmra.mxu0 %v3038
      %v3185 = vpop.f32.mrf.mxu0
      %v3186 = vadd.f32 0.0, %v3185
      %v3187 = vpop.f32.mrf.mxu0
      %v3188 = vpop.f32.mrf.mxu0
      %v3189 = vadd.f32 0.0, %v3188
      %v3190 = vpop.f32.mrf.mxu0
      %3191 = vmatprep.mubr.bf16.mxu0 0
      %3192 = vmatmul.mubr.bf16.gmra.mxu0 %v3040
      %v3193 = vpop.f32.mrf.mxu0
      %v3194 = vadd.f32 0.0, %v3193
      %v3195 = vpop.f32.mrf.mxu0
      %v3196 = vpop.f32.mrf.mxu0
      %v3197 = vadd.f32 0.0, %v3196
      %v3198 = vpop.f32.mrf.mxu0
      %3199 = vmatprep.mubr.bf16.mxu0 0
      %3200 = vmatmul.mubr.bf16.gmra.mxu0 %v3042
      %v3201 = vpop.f32.mrf.mxu0
      %v3202 = vadd.f32 0.0, %v3201
      %v3203 = vpop.f32.mrf.mxu0
      %v3204 = vpop.f32.mrf.mxu0
      %v3205 = vadd.f32 0.0, %v3204
      %v3206 = vpop.f32.mrf.mxu0
      %3207 = vdwg.mxu0
      %v3208 = vadd.f32 %v2269, %v3082
      %v3209 = vadd.f32 %v2272, %v3085
      %v3210 = vadd.f32 %v2277, %v3090
      %v3211 = vadd.f32 %v2280, %v3093
      %v3212 = vadd.f32 %v2285, %v3098
      %v3213 = vadd.f32 %v2288, %v3101
      %v3214 = vadd.f32 %v2293, %v3106
      %v3215 = vadd.f32 %v2296, %v3109
      %v3216 = vadd.f32 %v2301, %v3114
      %v3217 = vadd.f32 %v2304, %v3117
      %v3218 = vadd.f32 %v2309, %v3122
      %v3219 = vadd.f32 %v2312, %v3125
      %v3220 = vadd.f32 %v2317, %v3130
      %v3221 = vadd.f32 %v2320, %v3133
      %v3222 = vadd.f32 %v2325, %v3138
      %v3223 = vadd.f32 %v2328, %v3141
      %v3224 = vadd.f32 %v2333, %v3146
      %v3225 = vadd.f32 %v2336, %v3149
      %v3226 = vadd.f32 %v2341, %v3154
      %v3227 = vadd.f32 %v2344, %v3157
      %v3228 = vadd.f32 %v2349, %v3162
      %v3229 = vadd.f32 %v2352, %v3165
      %v3230 = vadd.f32 %v2357, %v3170
      %v3231 = vadd.f32 %v2360, %v3173
      %v3232 = vadd.f32 %v2365, %v3178
      %v3233 = vadd.f32 %v2368, %v3181
      %v3234 = vadd.f32 %v2373, %v3186
      %v3235 = vadd.f32 %v2376, %v3189
      %v3236 = vadd.f32 %v2381, %v3194
      %v3237 = vadd.f32 %v2384, %v3197
      %v3238 = vadd.f32 %v2389, %v3202
      %v3239 = vadd.f32 %v2392, %v3205
      %v3240 = vld [vmem:[#allocation3] sm:$0x1]
      %v3242 = vlaneseq
      %v3243 = vshrl.u32 %v3242, 7
      %v3244 = vsub.s32 0, %v3243
      %v3245 = vrot.slane %v3240, %v3244
      %v3247 = vadd.f32 %v3208, %v3245
      %v3248 = vadd.f32 %v3209, %v3245
      %v3249 = vadd.f32 %v3210, %v3245
      %v3250 = vadd.f32 %v3211, %v3245
      %v3251 = vadd.f32 %v3212, %v3245
      %v3252 = vadd.f32 %v3213, %v3245
      %v3253 = vadd.f32 %v3214, %v3245
      %v3254 = vadd.f32 %v3215, %v3245
      %v3255 = vadd.f32 %v3216, %v3245
      %v3256 = vadd.f32 %v3217, %v3245
      %v3257 = vadd.f32 %v3218, %v3245
      %v3258 = vadd.f32 %v3219, %v3245
      %v3259 = vadd.f32 %v3220, %v3245
      %v3260 = vadd.f32 %v3221, %v3245
      %v3261 = vadd.f32 %v3222, %v3245
      %v3262 = vadd.f32 %v3223, %v3245
      %v3263 = vadd.f32 %v3224, %v3245
      %v3264 = vadd.f32 %v3225, %v3245
      %v3265 = vadd.f32 %v3226, %v3245
      %v3266 = vadd.f32 %v3227, %v3245
      %v3267 = vadd.f32 %v3228, %v3245
      %v3268 = vadd.f32 %v3229, %v3245
      %v3269 = vadd.f32 %v3230, %v3245
      %v3270 = vadd.f32 %v3231, %v3245
      %v3271 = vadd.f32 %v3232, %v3245
      %v3272 = vadd.f32 %v3233, %v3245
      %v3273 = vadd.f32 %v3234, %v3245
      %v3274 = vadd.f32 %v3235, %v3245
      %v3275 = vadd.f32 %v3236, %v3245
      %v3276 = vadd.f32 %v3237, %v3245
      %v3277 = vadd.f32 %v3238, %v3245
      %v3278 = vadd.f32 %v3239, %v3245
      %v3279 = vpack.c.bf16 %v3248, %v3247
      %v3280 = vpack.c.bf16 %v3250, %v3249
      %v3281 = vpack.c.bf16 %v3252, %v3251
      %v3282 = vpack.c.bf16 %v3254, %v3253
      %v3283 = vpack.c.bf16 %v3256, %v3255
      %v3284 = vpack.c.bf16 %v3258, %v3257
      %v3285 = vpack.c.bf16 %v3260, %v3259
      %v3286 = vpack.c.bf16 %v3262, %v3261
      %v3287 = vpack.c.bf16 %v3264, %v3263
      %v3288 = vpack.c.bf16 %v3266, %v3265
      %v3289 = vpack.c.bf16 %v3268, %v3267
      %v3290 = vpack.c.bf16 %v3270, %v3269
      %v3291 = vpack.c.bf16 %v3272, %v3271
      %v3292 = vpack.c.bf16 %v3274, %v3273
      %v3293 = vpack.c.bf16 %v3276, %v3275
      %v3294 = vpack.c.bf16 %v3278, %v3277
      %v3311 = vunpack.c.l.b16 %v3279
      %v3312 = vunpack.c.h.b16 %v3279
      %v3313 = vunpack.c.l.b16 %v3280
      %v3314 = vunpack.c.h.b16 %v3280
      %v3315 = vunpack.c.l.b16 %v3281
      %v3316 = vunpack.c.h.b16 %v3281
      %v3317 = vunpack.c.l.b16 %v3282
      %v3318 = vunpack.c.h.b16 %v3282
      %v3319 = vunpack.c.l.b16 %v3283
      %v3320 = vunpack.c.h.b16 %v3283
      %v3321 = vunpack.c.l.b16 %v3284
      %v3322 = vunpack.c.h.b16 %v3284
      %v3323 = vunpack.c.l.b16 %v3285
      %v3324 = vunpack.c.h.b16 %v3285
      %v3325 = vunpack.c.l.b16 %v3286
      %v3326 = vunpack.c.h.b16 %v3286
      %v3327 = vunpack.c.l.b16 %v3287
      %v3328 = vunpack.c.h.b16 %v3287
      %v3329 = vunpack.c.l.b16 %v3288
      %v3330 = vunpack.c.h.b16 %v3288
      %v3331 = vunpack.c.l.b16 %v3289
      %v3332 = vunpack.c.h.b16 %v3289
      %v3333 = vunpack.c.l.b16 %v3290
      %v3334 = vunpack.c.h.b16 %v3290
      %v3335 = vunpack.c.l.b16 %v3291
      %v3336 = vunpack.c.h.b16 %v3291
      %v3337 = vunpack.c.l.b16 %v3292
      %v3338 = vunpack.c.h.b16 %v3292
      %v3339 = vunpack.c.l.b16 %v3293
      %v3340 = vunpack.c.h.b16 %v3293
      %v3341 = vunpack.c.l.b16 %v3294
      %v3342 = vunpack.c.h.b16 %v3294
      %v3343 = vpack.c.b16 %v3311, %v3311
      %v3344 = vpack.c.b16 %v3312, %v3312
      %v3345 = vpack.c.b16 %v3313, %v3313
      %v3346 = vpack.c.b16 %v3314, %v3314
      %v3347 = vpack.c.b16 %v3315, %v3315
      %v3348 = vpack.c.b16 %v3316, %v3316
      %v3349 = vpack.c.b16 %v3317, %v3317
      %v3350 = vpack.c.b16 %v3318, %v3318
      %v3351 = vpack.c.b16 %v3319, %v3319
      %v3352 = vpack.c.b16 %v3320, %v3320
      %v3353 = vpack.c.b16 %v3321, %v3321
      %v3354 = vpack.c.b16 %v3322, %v3322
      %v3355 = vpack.c.b16 %v3323, %v3323
      %v3356 = vpack.c.b16 %v3324, %v3324
      %v3357 = vpack.c.b16 %v3325, %v3325
      %v3358 = vpack.c.b16 %v3326, %v3326
      %v3359 = vpack.c.b16 %v3327, %v3327
      %v3360 = vpack.c.b16 %v3328, %v3328
      %v3361 = vpack.c.b16 %v3329, %v3329
      %v3362 = vpack.c.b16 %v3330, %v3330
      %v3363 = vpack.c.b16 %v3331, %v3331
      %v3364 = vpack.c.b16 %v3332, %v3332
      %v3365 = vpack.c.b16 %v3333, %v3333
      %v3366 = vpack.c.b16 %v3334, %v3334
      %v3367 = vpack.c.b16 %v3335, %v3335
      %v3368 = vpack.c.b16 %v3336, %v3336
      %v3369 = vpack.c.b16 %v3337, %v3337
      %v3370 = vpack.c.b16 %v3338, %v3338
      %v3371 = vpack.c.b16 %v3339, %v3339
      %v3372 = vpack.c.b16 %v3340, %v3340
      %v3373 = vpack.c.b16 %v3341, %v3341
      %v3374 = vpack.c.b16 %v3342, %v3342
      %3407 = vst.msk [vmem:[%s172] sm:$0xf] %vm174, %v3343
      %3408 = vst.msk [vmem:[%s172 + $0x4] sm:$0xf] %vm174, %v3344
      %3409 = vst.msk [vmem:[%s172 + $0x8] sm:$0xf] %vm174, %v3345
      %3410 = vst.msk [vmem:[%s172 + $0xc] sm:$0xf] %vm174, %v3346
      %3411 = vst.msk [vmem:[%s172 + $0x10] sm:$0xf] %vm174, %v3347
      %3412 = vst.msk [vmem:[%s172 + $0x14] sm:$0xf] %vm174, %v3348
      %3413 = vst.msk [vmem:[%s172 + $0x18] sm:$0xf] %vm174, %v3349
      %3414 = vst.msk [vmem:[%s172 + $0x1c] sm:$0xf] %vm174, %v3350
      %3415 = vst.msk [vmem:[%s172 + $0x20] sm:$0xf] %vm174, %v3351
      %3416 = vst.msk [vmem:[%s172 + $0x24] sm:$0xf] %vm174, %v3352
      %3417 = vst.msk [vmem:[%s172 + $0x28] sm:$0xf] %vm174, %v3353
      %3418 = vst.msk [vmem:[%s172 + $0x2c] sm:$0xf] %vm174, %v3354
      %3419 = vst.msk [vmem:[%s172 + $0x30] sm:$0xf] %vm174, %v3355
      %3420 = vst.msk [vmem:[%s172 + $0x34] sm:$0xf] %vm174, %v3356
      %3421 = vst.msk [vmem:[%s172 + $0x38] sm:$0xf] %vm174, %v3357
      %3422 = vst.msk [vmem:[%s172 + $0x3c] sm:$0xf] %vm174, %v3358
      %3423 = vst.msk [vmem:[%s172 + $0x40] sm:$0xf] %vm174, %v3359
      %3424 = vst.msk [vmem:[%s172 + $0x44] sm:$0xf] %vm174, %v3360
      %3425 = vst.msk [vmem:[%s172 + $0x48] sm:$0xf] %vm174, %v3361
      %3426 = vst.msk [vmem:[%s172 + $0x4c] sm:$0xf] %vm174, %v3362
      %3427 = vst.msk [vmem:[%s172 + $0x50] sm:$0xf] %vm174, %v3363
      %3428 = vst.msk [vmem:[%s172 + $0x54] sm:$0xf] %vm174, %v3364
      %3429 = vst.msk [vmem:[%s172 + $0x58] sm:$0xf] %vm174, %v3365
      %3430 = vst.msk [vmem:[%s172 + $0x5c] sm:$0xf] %vm174, %v3366
      %3431 = vst.msk [vmem:[%s172 + $0x60] sm:$0xf] %vm174, %v3367
      %3432 = vst.msk [vmem:[%s172 + $0x64] sm:$0xf] %vm174, %v3368
      %3433 = vst.msk [vmem:[%s172 + $0x68] sm:$0xf] %vm174, %v3369
      %3434 = vst.msk [vmem:[%s172 + $0x6c] sm:$0xf] %vm174, %v3370
      %3435 = vst.msk [vmem:[%s172 + $0x70] sm:$0xf] %vm174, %v3371
      %3436 = vst.msk [vmem:[%s172 + $0x74] sm:$0xf] %vm174, %v3372
      %3437 = vst.msk [vmem:[%s172 + $0x78] sm:$0xf] %vm174, %v3373
      %3438 = vst.msk [vmem:[%s172 + $0x7c] sm:$0xf] %vm174, %v3374
      %p3439 = scmp.lt.s32.totalorder %s16, 1
      %s3440 = scalar_select %p3439, %s16, 1
      %s3441 = smul.addr %s3440, 32
      %s3442 = smul.addr %s3441, 4
      %s3443 = scalar_lea.vmem %s3, %s3442
      // Predicated region
      $region33: #{tpu_custom_call.1} parent=31 // pred_check
        %p3444 = pneg %p102
      $region34: #{tpu_custom_call.1} parent=31 // pred_check_branch
        %3446 = sbr.rel (%p3444) target = $region36
      $region35: #{tpu_custom_call.1} parent=31 // pred_region
        _
      $region36: #{tpu_custom_call.1} parent=31 // pred_fallthru
        _
    $region32: #{tpu_custom_call.1} parent=5 // pred_fallthru
      _
    %p3447 = scmp.le.s32.totalorder 2, %s11
    // Predicated region
    $region37: #{tpu_custom_call.1} parent=5 // pred_check
      %p3448 = pneg %p3447
    $region38: #{tpu_custom_call.1} parent=5 // pred_check_branch
      %3450 = sbr.rel (%p3448) target = $region40
    $region39: #{tpu_custom_call.1} parent=5 // pred_region
      %s3451 = ssub.s32 %s11, 2
      // Predicated region
      $region41: #{tpu_custom_call.1} parent=39 // pred_check
        %p3452 = pneg %p108
      $region42: #{tpu_custom_call.1} parent=39 // pred_check_branch
        %3454 = sbr.rel (%p3452) target = $region44
      $region43: #{tpu_custom_call.1} parent=39 // pred_region
        %p3455 = scmp.lt.s32.totalorder %s17, 1
        %s3456 = scalar_select %p3455, %s17, 1
        %s3457 = smul.addr %s3456, 32
        %s3458 = smul.addr %s3457, 4
        %s3459 = scalar_lea.vmem %s3, %s3458
      $region44: #{tpu_custom_call.1} parent=39 // pred_fallthru
        _
    $region40: #{tpu_custom_call.1} parent=5 // pred_fallthru
      _
  $region6: #{tpu_custom_call.1} parent=0 // loop_footer
    %s15 = sadd.s32 1, %s11
  $region7: #{tpu_custom_call.1} parent=0 // loop_footer_branch
    %10 = sbr.rel target = $region3
  $region8: #{tpu_custom_call.1} parent=0 // loop_exit
    _

</llo_original>
